<compile_context>
chip_gen: v7x
topology: tpu7x:2x2x1
jax: 0.10.0
libtpu: 0.0.40
codegen_flags: <defaults>
</compile_context>

<pallas_src>
import functools

import jax
import jax.numpy as jnp
import numpy as np
from jax import lax
from jax.experimental import pallas as pl
from jax.experimental.pallas import tpu as pltpu

BN_EPS = 1e-5


# ----------------------------------------------------------------------------
# Fused kernel: main_conv1 + ext_conv1 + ext_conv2 (transposed conv) + ext_conv3
#               + MaxUnpool2d + add + final ReLU
# ----------------------------------------------------------------------------
def _fused_upsample_kernel(x_ref, xh_ref, idx_ref, off_ref,
                           wm_ref, bm_ref, we_ref, be_ref,
                           wp_ref, b2_ref, w3_ref, b3_ref,
                           o_ref, *, tile_h, w, cout):
    th = tile_h
    x = x_ref[0]                                   # (th, w, cin) f32
    cin = x.shape[-1]
    xb = x.reshape(th * w, cin).astype(jnp.bfloat16)

    # main_conv1: 1x1 conv + BN (scale folded into weight), no activation.
    main = (jnp.dot(xb, wm_ref[...], preferred_element_type=jnp.float32)
            + bm_ref[...]).reshape(th, w, cout)

    # ext_conv1: 1x1 conv + BN + ReLU for the block rows ...
    e1 = jnp.maximum(
        jnp.dot(xb, we_ref[...], preferred_element_type=jnp.float32) + be_ref[...],
        0.0)
    cint = e1.shape[-1]
    e1 = e1.reshape(th, w, cint)

    # ... and for the one-row halo below the block (x row r0 + th).
    xh = xh_ref[0].reshape(w, cin).astype(jnp.bfloat16)
    e1h = jnp.maximum(
        jnp.dot(xh, we_ref[...], preferred_element_type=jnp.float32) + be_ref[...],
        0.0)
    is_last = pl.program_id(1) == pl.num_programs(1) - 1
    e1h = (e1h * jnp.where(is_last, 0.0, 1.0)).reshape(1, w, cint)  # zero past image

    # Neighbour panels for the phase-decomposed transposed conv.
    e1dn = jnp.concatenate([e1[1:], e1h], axis=0) if th > 1 else e1h
    zcol = jnp.zeros((th, 1, cint), jnp.float32)
    e1r = jnp.concatenate([e1[:, 1:, :], zcol], axis=1)
    e1dnr = jnp.concatenate([e1dn[:, 1:, :], zcol], axis=1)
    x4 = jnp.concatenate([e1, e1r, e1dn, e1dnr], axis=-1)
    x4 = x4.reshape(th * w, 4 * cint).astype(jnp.bfloat16)

    # ext_conv2: transposed conv (all 4 output phases at once) + BN bias + ReLU.
    e2 = jnp.maximum(
        jnp.dot(x4, wp_ref[...], preferred_element_type=jnp.float32) + b2_ref[...],
        0.0)
    # ext_conv3: 1x1 conv (block-diagonal over phases) + BN bias + ReLU.
    e3 = jnp.maximum(
        jnp.dot(e2.astype(jnp.bfloat16), w3_ref[...],
                preferred_element_type=jnp.float32) + b3_ref[...],
        0.0)
    e3 = e3.reshape(th, w, 4 * cout)               # channel layout (py, px, ch)

    # MaxUnpool2d(kernel=2) as a gather: keep main[r, c, ch] at output (2r+py, 2c+px)
    # iff max_indices[r, c, ch] equals that flat output position (pure VPU, int32).
    r0 = pl.program_id(1) * th
    shape3 = (th, w, 4 * cout)
    rr = lax.broadcasted_iota(jnp.int32, shape3, 0)
    cc = lax.broadcasted_iota(jnp.int32, shape3, 1)
    pos = (rr + r0) * (4 * w) + 2 * cc + off_ref[...].reshape(1, 1, 4 * cout)

    main4 = jnp.concatenate([main] * 4, axis=-1)   # (th, w, 4*cout)
    idx4 = jnp.concatenate([idx_ref[0]] * 4, axis=-1)
    unpooled = jnp.where(idx4 == pos, main4, 0.0)

    o_ref[0] = jnp.maximum(e3 + unpooled, 0.0).astype(o_ref.dtype)


def _fused_call(x, idx, off, wm, bm, we, be, wp, b2, w3, b3, *, tile_h):
    n, h, w, cin = x.shape
    cout = wm.shape[1]
    cint = we.shape[1]
    c4i, c4o = 4 * cint, 4 * cout
    grid = (n, h // tile_h)                        # tile_h always divides h

    kernel = functools.partial(_fused_upsample_kernel,
                               tile_h=tile_h, w=w, cout=cout)
    halo_map = lambda b, i: (b, jnp.minimum((i + 1) * tile_h, h - 1), 0, 0)

    return pl.pallas_call(
        kernel,
        out_shape=jax.ShapeDtypeStruct((n, h, w, c4o), x.dtype),
        grid=grid,
        in_specs=[
            pl.BlockSpec((1, tile_h, w, cin), lambda b, i: (b, i, 0, 0)),   # x tile
            pl.BlockSpec((1, 1, w, cin), halo_map),                         # x halo row
            pl.BlockSpec((1, tile_h, w, cout), lambda b, i: (b, i, 0, 0)),  # max idx
            pl.BlockSpec((1, c4o), lambda b, i: (0, 0)),                    # phase off
            pl.BlockSpec((cin, cout), lambda b, i: (0, 0)),                 # Wm (bf16)
            pl.BlockSpec((1, cout), lambda b, i: (0, 0)),                   # bm
            pl.BlockSpec((cin, cint), lambda b, i: (0, 0)),                 # We (bf16)
            pl.BlockSpec((1, cint), lambda b, i: (0, 0)),                   # be
            pl.BlockSpec((c4i, c4i), lambda b, i: (0, 0)),                  # Wp (bf16)
            pl.BlockSpec((1, c4i), lambda b, i: (0, 0)),                    # b2
            pl.BlockSpec((c4i, c4o), lambda b, i: (0, 0)),                  # W3 (bf16)
            pl.BlockSpec((1, c4o), lambda b, i: (0, 0)),                    # b3
        ],
        out_specs=pl.BlockSpec((1, tile_h, w, c4o), lambda b, i: (b, i, 0, 0)),
        compiler_params=pltpu.CompilerParams(
            dimension_semantics=("parallel", "parallel")),
    )(x, x, idx, off, wm, bm, we, be, wp, b2, w3, b3)


# ----------------------------------------------------------------------------
# Full module forward (wrapper glue + the fused kernel)
# ----------------------------------------------------------------------------
def upsampling_bottleneck(x_nchw, max_indices_nchw, params, *, tile_h=32):
    x = jnp.transpose(x_nchw, (0, 2, 3, 1))                       # NHWC
    idx = jnp.transpose(max_indices_nchw, (0, 2, 3, 1)).astype(jnp.int32)
    n, h, w, cin = x.shape
    cout = params["w_main"].shape[1]
    cint = params["w_e1"].shape[1]

    # Fold BN scale into the conv weights; cast MXU operands to bf16 (f32 accumulate
    # happens in-kernel via preferred_element_type).
    wm = (params["w_main"] * params["s_main"]).astype(jnp.bfloat16)
    we = (params["w_e1"] * params["s_e1"]).astype(jnp.bfloat16)

    # Phase-decomposed ConvTranspose2d weights (taps -> K, phases -> N).
    wt = params["w_e2"]                                           # (cint, cint, kh, kw)
    W = lambda a, b: wt[:, :, a, b]
    Z = jnp.zeros((cint, cint), wt.dtype)
    wp = jnp.concatenate([
        jnp.concatenate([W(1, 1), W(1, 2), W(2, 1), W(2, 2)], axis=1),   # from e1
        jnp.concatenate([Z,       W(1, 0), Z,       W(2, 0)], axis=1),   # from e1_r
        jnp.concatenate([Z,       Z,       W(0, 1), W(0, 2)], axis=1),   # from e1_dn
        jnp.concatenate([Z,       Z,       Z,       W(0, 0)], axis=1),   # from e1_dnr
    ], axis=0)                                                    # (4*cint, 4*cint)
    wp = (wp * jnp.tile(params["s_e2"], (1, 4))).astype(jnp.bfloat16)
    b2t = jnp.tile(params["b_e2"], (1, 4))
    w3 = params["w_e3"] * params["s_e3"]
    w3bd = jnp.kron(jnp.eye(4, dtype=w3.dtype), w3).astype(jnp.bfloat16)
    b3t = jnp.tile(params["b_e3"], (1, 4))

    # Precomputed per-phase unpool offset: off[p*cout + ch] = py*2W + px, p = 2*py+px.
    p = np.arange(4)
    off = np.repeat((p >> 1) * (2 * w) + (p & 1), cout).astype(np.int32)
    off = jnp.asarray(off).reshape(1, 4 * cout)

    # tile_h: largest divisor of h not exceeding the request (no ragged blocks).
    th = max(d for d in range(1, min(tile_h, h) + 1) if h % d == 0)

    out4 = _fused_call(x, idx, off, wm, params["b_main"], we, params["b_e1"],
                       wp, b2t, w3bd, b3t, tile_h=th)
    # Dropout2d is the identity at inference.

    # (n, h, w, py, px, c) -> NCHW (n, c, 2h, 2w): one XLA transpose that also covers
    # the NHWC -> NCHW module-boundary conversion.
    out = out4.reshape(n, h, w, 2, 2, cout)
    return jnp.transpose(out, (0, 5, 1, 3, 2, 4)).reshape(n, cout, 2 * h, 2 * w)


# ----------------------------------------------------------------------------
# Deterministic parameter init (inference-mode BN folded into scale/shift)
# ----------------------------------------------------------------------------
def _bn_affine(gamma, beta, mean, var):
    scale = gamma / jnp.sqrt(var + BN_EPS)
    shift = beta - mean * scale
    return scale[None, :], shift[None, :]


def init_params(key, cin, cout, cint):
    keys = jax.random.split(key, 12)

    def nrm(k, shape, s=0.1):
        return s * jax.random.normal(k, shape, jnp.float32)

    def bn(kg, kb, c):
        gamma = 1.0 + 0.1 * jax.random.normal(kg, (c,), jnp.float32)
        beta = 0.1 * jax.random.normal(kb, (c,), jnp.float32)
        return _bn_affine(gamma, beta, jnp.zeros((c,)), jnp.ones((c,)))

    s_main, b_main = bn(keys[4], keys[5], cout)
    s_e1, b_e1 = bn(keys[6], keys[7], cint)
    s_e2, b_e2 = bn(keys[8], keys[9], cint)
    s_e3, b_e3 = bn(keys[10], keys[11], cout)
    return dict(
        w_main=nrm(keys[0], (cin, cout)),          # Conv2d 1x1 (in->out), bias=False
        w_e1=nrm(keys[1], (cin, cint)),            # Conv2d 1x1 (in->internal)
        w_e2=nrm(keys[2], (cint, cint, 3, 3)),     # ConvTranspose2d weight (in, out, kh, kw)
        w_e3=nrm(keys[3], (cint, cout)),           # Conv2d 1x1 (internal->out)
        s_main=s_main, b_main=b_main,
        s_e1=s_e1, b_e1=b_e1,
        s_e2=s_e2, b_e2=b_e2,
        s_e3=s_e3, b_e3=b_e3,
    )


# ----------------------------------------------------------------------------
# Pure-JAX reference (scatter-based MaxUnpool, dilated conv) for verification
# ----------------------------------------------------------------------------
def reference_forward(x_nchw, idx_nchw, params):
    x = jnp.transpose(x_nchw, (0, 2, 3, 1))
    idx = jnp.transpose(idx_nchw, (0, 2, 3, 1))
    n, h, w, _ = x.shape
    cout = params["w_main"].shape[1]

    def c1(inp, wgt, s, b, relu):
        y = (jnp.einsum("nhwc,cd->nhwd", inp, wgt) * s.reshape(1, 1, 1, -1)
             + b.reshape(1, 1, 1, -1))
        return jnp.maximum(y, 0.0) if relu else y

    main = c1(x, params["w_main"], params["s_main"], params["b_main"], False)
    ho, wo = 2 * h, 2 * w
    nn_, _, _, cc = jnp.meshgrid(jnp.arange(n), jnp.arange(h), jnp.arange(w),
                                 jnp.arange(cout), indexing="ij")
    main_up = jnp.zeros((n, ho * wo, cout), x.dtype).at[nn_, idx, cc].set(main)
    main_up = main_up.reshape(n, ho, wo, cout)

    e1 = c1(x, params["w_e1"], params["s_e1"], params["b_e1"], True)
    w_eq = jnp.transpose(jnp.flip(params["w_e2"], axis=(2, 3)), (2, 3, 0, 1))
    e2 = lax.conv_general_dilated(e1, w_eq, window_strides=(1, 1),
                                  padding=((1, 2), (1, 2)), lhs_dilation=(2, 2),
                                  dimension_numbers=("NHWC", "HWIO", "NHWC"))
    e2 = jnp.maximum(e2 * params["s_e2"].reshape(1, 1, 1, -1)
                     + params["b_e2"].reshape(1, 1, 1, -1), 0.0)
    e3 = c1(e2, params["w_e3"], params["s_e3"], params["b_e3"], True)
    out = jnp.maximum(main_up + e3, 0.0)
    return jnp.transpose(out, (0, 3, 1, 2))


if __name__ == "__main__":
    N, CIN, COUT, H, W = 2, 16, 8, 16, 16
    CINT = CIN // 4

    key = jax.random.PRNGKey(0)
    k_x, k_dh, k_dw, k_p = jax.random.split(key, 4)

    x_nchw = jax.random.normal(k_x, (N, CIN, H, W), jnp.float32)

    # MaxUnpool indices: one position per 2x2 window (MaxPool2d(2)-style layout).
    dh = jax.random.randint(k_dh, (N, COUT, H, W), 0, 2)
    dw = jax.random.randint(k_dw, (N, COUT, H, W), 0, 2)
    hh = jnp.arange(H).reshape(1, 1, H, 1)
    ww = jnp.arange(W).reshape(1, 1, 1, W)
    max_indices = ((2 * hh + dh) * (2 * W) + (2 * ww + dw)).astype(jnp.int32)

    params = init_params(k_p, CIN, COUT, CINT)

    out = jax.jit(upsampling_bottleneck)(x_nchw, max_indices, params)
    out = jax.block_until_ready(out)

    ref = reference_forward(x_nchw, max_indices, params)
    assert out.shape == (N, COUT, 2 * H, 2 * W), out.shape
    # bf16 MXU operands (f32 accumulation) vs. an f32 reference -> loosened tolerance.
    np.testing.assert_allclose(np.asarray(out), np.asarray(ref), rtol=2e-2, atol=2e-2)
    print("KERNEL_OK")
</pallas_src>

<mosaic_0001>
module attributes {stable_mosaic.version = 11 : i64} {
  func.func @_fused_upsample_kernel(%arg0: i32, %arg1: i32, %arg2: memref<1x16x16x16xf32, #tpu.memory_space<vmem>>, %arg3: memref<1x1x16x16xf32, #tpu.memory_space<vmem>>, %arg4: memref<1x16x16x8xi32, #tpu.memory_space<vmem>>, %arg5: memref<1x32xi32, #tpu.memory_space<vmem>>, %arg6: memref<16x8xbf16, #tpu.memory_space<vmem>>, %arg7: memref<1x8xf32, #tpu.memory_space<vmem>>, %arg8: memref<16x4xbf16, #tpu.memory_space<vmem>>, %arg9: memref<1x4xf32, #tpu.memory_space<vmem>>, %arg10: memref<16x16xbf16, #tpu.memory_space<vmem>>, %arg11: memref<1x16xf32, #tpu.memory_space<vmem>>, %arg12: memref<16x32xbf16, #tpu.memory_space<vmem>>, %arg13: memref<1x32xf32, #tpu.memory_space<vmem>>, %arg14: memref<1x16x16x32xf32, #tpu.memory_space<vmem>>) attributes {dimension_semantics = [#tpu.dimension_semantics<parallel>, #tpu.dimension_semantics<parallel>], iteration_bounds = array<i64: 2, 1>, scalar_prefetch = 0 : i64, scratch_operands = 0 : i64, tpu.core_type = #tpu.core_type<tc>, window_params = [{transform_indices = @transform_0, window_bounds = array<i64: 1, 16, 16, 16>}, {transform_indices = @transform_1, window_bounds = array<i64: 1, 1, 16, 16>}, {transform_indices = @transform_2, window_bounds = array<i64: 1, 16, 16, 8>}, {pipeline_mode = #tpu.pipeline_mode<synchronous>, transform_indices = @transform_3, window_bounds = array<i64: 1, 32>}, {pipeline_mode = #tpu.pipeline_mode<synchronous>, transform_indices = @transform_4, window_bounds = array<i64: 16, 8>}, {pipeline_mode = #tpu.pipeline_mode<synchronous>, transform_indices = @transform_5, window_bounds = array<i64: 1, 8>}, {pipeline_mode = #tpu.pipeline_mode<synchronous>, transform_indices = @transform_6, window_bounds = array<i64: 16, 4>}, {pipeline_mode = #tpu.pipeline_mode<synchronous>, transform_indices = @transform_7, window_bounds = array<i64: 1, 4>}, {pipeline_mode = #tpu.pipeline_mode<synchronous>, transform_indices = @transform_8, window_bounds = array<i64: 16, 16>}, {pipeline_mode = #tpu.pipeline_mode<synchronous>, transform_indices = @transform_9, window_bounds = array<i64: 1, 16>}, {pipeline_mode = #tpu.pipeline_mode<synchronous>, transform_indices = @transform_10, window_bounds = array<i64: 16, 32>}, {pipeline_mode = #tpu.pipeline_mode<synchronous>, transform_indices = @transform_11, window_bounds = array<i64: 1, 32>}, {transform_indices = @transform_12, window_bounds = array<i64: 1, 16, 16, 32>}]} {
    %c0 = arith.constant 0 : index
    %c0_0 = arith.constant 0 : index
    %c0_1 = arith.constant 0 : index
    %c0_2 = arith.constant 0 : index
    %0 = vector.load %arg2[%c0, %c0_0, %c0_1, %c0_2] : memref<1x16x16x16xf32, #tpu.memory_space<vmem>>, vector<1x16x16x16xf32>
    %1 = vector.shape_cast %0 : vector<1x16x16x16xf32> to vector<16x16x16xf32>
    %2 = vector.shape_cast %1 : vector<16x16x16xf32> to vector<256x16xf32>
    %3 = arith.truncf %2 : vector<256x16xf32> to vector<256x16xbf16>
    %c0_3 = arith.constant 0 : index
    %c0_4 = arith.constant 0 : index
    %4 = vector.load %arg6[%c0_3, %c0_4] : memref<16x8xbf16, #tpu.memory_space<vmem>>, vector<16x8xbf16>
    %cst = arith.constant dense<0.000000e+00> : vector<256x8xf32>
    %5 = tpu.matmul %3, %4, %cst {dimension_numbers = #tpu.dot_dimension_numbers<[1], [0], [0], [1], [0, 0, 1, 1], [], []>} : vector<256x16xbf16>, vector<16x8xbf16>, vector<256x8xf32> -> vector<256x8xf32>
    %c0_5 = arith.constant 0 : index
    %c0_6 = arith.constant 0 : index
    %6 = vector.load %arg7[%c0_5, %c0_6] : memref<1x8xf32, #tpu.memory_space<vmem>>, vector<1x8xf32>
    %7 = vector.broadcast %6 : vector<1x8xf32> to vector<256x8xf32>
    %8 = arith.addf %5, %7 : vector<256x8xf32>
    %9 = vector.shape_cast %8 : vector<256x8xf32> to vector<16x16x8xf32>
    %c0_7 = arith.constant 0 : index
    %c0_8 = arith.constant 0 : index
    %10 = vector.load %arg8[%c0_7, %c0_8] : memref<16x4xbf16, #tpu.memory_space<vmem>>, vector<16x4xbf16>
    %cst_9 = arith.constant dense<0.000000e+00> : vector<256x4xf32>
    %11 = tpu.matmul %3, %10, %cst_9 {dimension_numbers = #tpu.dot_dimension_numbers<[1], [0], [0], [1], [0, 0, 1, 1], [], []>} : vector<256x16xbf16>, vector<16x4xbf16>, vector<256x4xf32> -> vector<256x4xf32>
    %c0_10 = arith.constant 0 : index
    %c0_11 = arith.constant 0 : index
    %12 = vector.load %arg9[%c0_10, %c0_11] : memref<1x4xf32, #tpu.memory_space<vmem>>, vector<1x4xf32>
    %13 = vector.broadcast %12 : vector<1x4xf32> to vector<256x4xf32>
    %14 = arith.addf %11, %13 : vector<256x4xf32>
    %cst_12 = arith.constant 0.000000e+00 : f32
    %15 = vector.broadcast %cst_12 : f32 to vector<256x4xf32>
    %16 = arith.maximumf %14, %15 : vector<256x4xf32>
    %17 = vector.shape_cast %16 : vector<256x4xf32> to vector<16x16x4xf32>
    %c0_13 = arith.constant 0 : index
    %c0_14 = arith.constant 0 : index
    %c0_15 = arith.constant 0 : index
    %c0_16 = arith.constant 0 : index
    %18 = vector.load %arg3[%c0_13, %c0_14, %c0_15, %c0_16] : memref<1x1x16x16xf32, #tpu.memory_space<vmem>>, vector<1x1x16x16xf32>
    %19 = vector.shape_cast %18 : vector<1x1x16x16xf32> to vector<1x16x16xf32>
    %20 = vector.shape_cast %19 : vector<1x16x16xf32> to vector<16x16xf32>
    %21 = arith.truncf %20 : vector<16x16xf32> to vector<16x16xbf16>
    %c0_17 = arith.constant 0 : index
    %c0_18 = arith.constant 0 : index
    %22 = vector.load %arg8[%c0_17, %c0_18] : memref<16x4xbf16, #tpu.memory_space<vmem>>, vector<16x4xbf16>
    %cst_19 = arith.constant dense<0.000000e+00> : vector<16x4xf32>
    %23 = tpu.matmul %21, %22, %cst_19 {dimension_numbers = #tpu.dot_dimension_numbers<[1], [0], [0], [1], [0, 0, 1, 1], [], []>} : vector<16x16xbf16>, vector<16x4xbf16>, vector<16x4xf32> -> vector<16x4xf32>
    %c0_20 = arith.constant 0 : index
    %c0_21 = arith.constant 0 : index
    %24 = vector.load %arg9[%c0_20, %c0_21] : memref<1x4xf32, #tpu.memory_space<vmem>>, vector<1x4xf32>
    %25 = vector.broadcast %24 : vector<1x4xf32> to vector<16x4xf32>
    %26 = arith.addf %23, %25 : vector<16x4xf32>
    %cst_22 = arith.constant 0.000000e+00 : f32
    %27 = vector.broadcast %cst_22 : f32 to vector<16x4xf32>
    %28 = arith.maximumf %26, %27 : vector<16x4xf32>
    %c0_i32 = arith.constant 0 : i32
    %29 = arith.cmpi eq, %arg1, %c0_i32 : i32
    %cst_23 = arith.constant 0.000000e+00 : f32
    %cst_24 = arith.constant 1.000000e+00 : f32
    %30 = arith.select %29, %cst_23, %cst_24 : f32
    %31 = vector.broadcast %30 : f32 to vector<16x4xf32>
    %32 = arith.mulf %28, %31 : vector<16x4xf32>
    %33 = vector.shape_cast %32 : vector<16x4xf32> to vector<1x16x4xf32>
    %34 = vector.extract_strided_slice %17 {offsets = [1, 0, 0], sizes = [15, 16, 4], strides = [1, 1, 1]} : vector<16x16x4xf32> to vector<15x16x4xf32>
    %35 = tpu.concatenate %34, %33 in 0 : vector<15x16x4xf32>, vector<1x16x4xf32> -> vector<16x16x4xf32>
    %cst_25 = arith.constant 0.000000e+00 : f32
    %36 = vector.broadcast %cst_25 : f32 to vector<16x1x4xf32>
    %37 = vector.extract_strided_slice %17 {offsets = [0, 1, 0], sizes = [16, 15, 4], strides = [1, 1, 1]} : vector<16x16x4xf32> to vector<16x15x4xf32>
    %38 = tpu.concatenate %37, %36 in 1 : vector<16x15x4xf32>, vector<16x1x4xf32> -> vector<16x16x4xf32>
    %39 = vector.extract_strided_slice %35 {offsets = [0, 1, 0], sizes = [16, 15, 4], strides = [1, 1, 1]} : vector<16x16x4xf32> to vector<16x15x4xf32>
    %40 = tpu.concatenate %39, %36 in 1 : vector<16x15x4xf32>, vector<16x1x4xf32> -> vector<16x16x4xf32>
    %41 = tpu.concatenate %17, %38, %35, %40 in 2 : vector<16x16x4xf32>, vector<16x16x4xf32>, vector<16x16x4xf32>, vector<16x16x4xf32> -> vector<16x16x16xf32>
    %42 = vector.shape_cast %41 : vector<16x16x16xf32> to vector<256x16xf32>
    %43 = arith.truncf %42 : vector<256x16xf32> to vector<256x16xbf16>
    %c0_26 = arith.constant 0 : index
    %c0_27 = arith.constant 0 : index
    %44 = vector.load %arg10[%c0_26, %c0_27] : memref<16x16xbf16, #tpu.memory_space<vmem>>, vector<16x16xbf16>
    %cst_28 = arith.constant dense<0.000000e+00> : vector<256x16xf32>
    %45 = tpu.matmul %43, %44, %cst_28 {dimension_numbers = #tpu.dot_dimension_numbers<[1], [0], [0], [1], [0, 0, 1, 1], [], []>} : vector<256x16xbf16>, vector<16x16xbf16>, vector<256x16xf32> -> vector<256x16xf32>
    %c0_29 = arith.constant 0 : index
    %c0_30 = arith.constant 0 : index
    %46 = vector.load %arg11[%c0_29, %c0_30] : memref<1x16xf32, #tpu.memory_space<vmem>>, vector<1x16xf32>
    %47 = vector.broadcast %46 : vector<1x16xf32> to vector<256x16xf32>
    %48 = arith.addf %45, %47 : vector<256x16xf32>
    %cst_31 = arith.constant 0.000000e+00 : f32
    %49 = vector.broadcast %cst_31 : f32 to vector<256x16xf32>
    %50 = arith.maximumf %48, %49 : vector<256x16xf32>
    %51 = arith.truncf %50 : vector<256x16xf32> to vector<256x16xbf16>
    %c0_32 = arith.constant 0 : index
    %c0_33 = arith.constant 0 : index
    %52 = vector.load %arg12[%c0_32, %c0_33] : memref<16x32xbf16, #tpu.memory_space<vmem>>, vector<16x32xbf16>
    %cst_34 = arith.constant dense<0.000000e+00> : vector<256x32xf32>
    %53 = tpu.matmul %51, %52, %cst_34 {dimension_numbers = #tpu.dot_dimension_numbers<[1], [0], [0], [1], [0, 0, 1, 1], [], []>} : vector<256x16xbf16>, vector<16x32xbf16>, vector<256x32xf32> -> vector<256x32xf32>
    %c0_35 = arith.constant 0 : index
    %c0_36 = arith.constant 0 : index
    %54 = vector.load %arg13[%c0_35, %c0_36] : memref<1x32xf32, #tpu.memory_space<vmem>>, vector<1x32xf32>
    %55 = vector.broadcast %54 : vector<1x32xf32> to vector<256x32xf32>
    %56 = arith.addf %53, %55 : vector<256x32xf32>
    %cst_37 = arith.constant 0.000000e+00 : f32
    %57 = vector.broadcast %cst_37 : f32 to vector<256x32xf32>
    %58 = arith.maximumf %56, %57 : vector<256x32xf32>
    %59 = vector.shape_cast %58 : vector<256x32xf32> to vector<16x16x32xf32>
    %c16_i32 = arith.constant 16 : i32
    %60 = arith.muli %arg1, %c16_i32 : i32
    %61 = tpu.iota {dimensions = array<i32: 0>} : vector<16x16x32xi32>
    %62 = tpu.iota {dimensions = array<i32: 1>} : vector<16x16x32xi32>
    %63 = vector.broadcast %60 : i32 to vector<16x16x32xi32>
    %64 = arith.addi %61, %63 : vector<16x16x32xi32>
    %c64_i32 = arith.constant 64 : i32
    %65 = vector.broadcast %c64_i32 : i32 to vector<16x16x32xi32>
    %66 = arith.muli %64, %65 : vector<16x16x32xi32>
    %c2_i32 = arith.constant 2 : i32
    %67 = vector.broadcast %c2_i32 : i32 to vector<16x16x32xi32>
    %68 = arith.muli %67, %62 : vector<16x16x32xi32>
    %69 = arith.addi %66, %68 : vector<16x16x32xi32>
    %c0_38 = arith.constant 0 : index
    %c0_39 = arith.constant 0 : index
    %70 = vector.load %arg5[%c0_38, %c0_39] : memref<1x32xi32, #tpu.memory_space<vmem>>, vector<1x32xi32>
    %71 = vector.shape_cast %70 : vector<1x32xi32> to vector<1x1x32xi32>
    %72 = vector.broadcast %71 : vector<1x1x32xi32> to vector<16x16x32xi32>
    %73 = arith.addi %69, %72 : vector<16x16x32xi32>
    %74 = tpu.concatenate %9, %9, %9, %9 in 2 : vector<16x16x8xf32>, vector<16x16x8xf32>, vector<16x16x8xf32>, vector<16x16x8xf32> -> vector<16x16x32xf32>
    %c0_40 = arith.constant 0 : index
    %c0_41 = arith.constant 0 : index
    %c0_42 = arith.constant 0 : index
    %c0_43 = arith.constant 0 : index
    %75 = vector.load %arg4[%c0_40, %c0_41, %c0_42, %c0_43] : memref<1x16x16x8xi32, #tpu.memory_space<vmem>>, vector<1x16x16x8xi32>
    %76 = vector.shape_cast %75 : vector<1x16x16x8xi32> to vector<16x16x8xi32>
    %77 = tpu.concatenate %76, %76, %76, %76 in 2 : vector<16x16x8xi32>, vector<16x16x8xi32>, vector<16x16x8xi32>, vector<16x16x8xi32> -> vector<16x16x32xi32>
    %78 = arith.cmpi eq, %77, %73 : vector<16x16x32xi32>
    %cst_44 = arith.constant 0.000000e+00 : f32
    %79 = vector.broadcast %cst_44 : f32 to vector<16x16x32xf32>
    %80 = arith.select %78, %74, %79 : vector<16x16x32xi1>, vector<16x16x32xf32>
    %81 = arith.addf %59, %80 : vector<16x16x32xf32>
    %cst_45 = arith.constant 0.000000e+00 : f32
    %82 = vector.broadcast %cst_45 : f32 to vector<16x16x32xf32>
    %83 = arith.maximumf %81, %82 : vector<16x16x32xf32>
    %c0_46 = arith.constant 0 : index
    %c0_47 = arith.constant 0 : index
    %c0_48 = arith.constant 0 : index
    %c0_49 = arith.constant 0 : index
    %84 = vector.load %arg14[%c0_46, %c0_47, %c0_48, %c0_49] : memref<1x16x16x32xf32, #tpu.memory_space<vmem>>, vector<1x16x16x32xf32>
    %85 = vector.shape_cast %84 : vector<1x16x16x32xf32> to vector<16x16x32xf32>
    %86 = vector.shape_cast %83 : vector<16x16x32xf32> to vector<1x16x16x32xf32>
    tpu.vector_store %arg14[%c0_46, %c0_47, %c0_48, %c0_49], %86 {strides = array<i32>} : memref<1x16x16x32xf32, #tpu.memory_space<vmem>>, vector<1x16x16x32xf32>,
    return
  }
  func.func @transform_0(%arg0: i32, %arg1: i32) -> (i32, i32, i32, i32) {
    %c0_i32 = arith.constant 0 : i32
    %c0_i32_0 = arith.constant 0 : i32
    %c0_i32_1 = arith.constant 0 : i32
    return %arg0, %arg1, %c0_i32, %c0_i32_0 : i32, i32, i32, i32
  }
  func.func @transform_1(%arg0: i32, %arg1: i32) -> (i32, i32, i32, i32) {
    %c1_i32 = arith.constant 1 : i32
    %0 = arith.addi %arg1, %c1_i32 : i32
    %c16_i32 = arith.constant 16 : i32
    %1 = arith.muli %0, %c16_i32 : i32
    %c15_i32 = arith.constant 15 : i32
    %2 = arith.minsi %1, %c15_i32 : i32
    %c0_i32 = arith.constant 0 : i32
    %c0_i32_0 = arith.constant 0 : i32
    %c0_i32_1 = arith.constant 0 : i32
    return %arg0, %2, %c0_i32, %c0_i32_0 : i32, i32, i32, i32
  }
  func.func @transform_2(%arg0: i32, %arg1: i32) -> (i32, i32, i32, i32) {
    %c0_i32 = arith.constant 0 : i32
    %c0_i32_0 = arith.constant 0 : i32
    %c0_i32_1 = arith.constant 0 : i32
    return %arg0, %arg1, %c0_i32, %c0_i32_0 : i32, i32, i32, i32
  }
  func.func @transform_3(%arg0: i32, %arg1: i32) -> (i32, i32) {
    %c0_i32 = arith.constant 0 : i32
    %c0_i32_0 = arith.constant 0 : i32
    %c0_i32_1 = arith.constant 0 : i32
    return %c0_i32, %c0_i32_0 : i32, i32
  }
  func.func @transform_4(%arg0: i32, %arg1: i32) -> (i32, i32) {
    %c0_i32 = arith.constant 0 : i32
    %c0_i32_0 = arith.constant 0 : i32
    %c0_i32_1 = arith.constant 0 : i32
    return %c0_i32, %c0_i32_0 : i32, i32
  }
  func.func @transform_5(%arg0: i32, %arg1: i32) -> (i32, i32) {
    %c0_i32 = arith.constant 0 : i32
    %c0_i32_0 = arith.constant 0 : i32
    %c0_i32_1 = arith.constant 0 : i32
    return %c0_i32, %c0_i32_0 : i32, i32
  }
  func.func @transform_6(%arg0: i32, %arg1: i32) -> (i32, i32) {
    %c0_i32 = arith.constant 0 : i32
    %c0_i32_0 = arith.constant 0 : i32
    %c0_i32_1 = arith.constant 0 : i32
    return %c0_i32, %c0_i32_0 : i32, i32
  }
  func.func @transform_7(%arg0: i32, %arg1: i32) -> (i32, i32) {
    %c0_i32 = arith.constant 0 : i32
    %c0_i32_0 = arith.constant 0 : i32
    %c0_i32_1 = arith.constant 0 : i32
    return %c0_i32, %c0_i32_0 : i32, i32
  }
  func.func @transform_8(%arg0: i32, %arg1: i32) -> (i32, i32) {
    %c0_i32 = arith.constant 0 : i32
    %c0_i32_0 = arith.constant 0 : i32
    %c0_i32_1 = arith.constant 0 : i32
    return %c0_i32, %c0_i32_0 : i32, i32
  }
  func.func @transform_9(%arg0: i32, %arg1: i32) -> (i32, i32) {
    %c0_i32 = arith.constant 0 : i32
    %c0_i32_0 = arith.constant 0 : i32
    %c0_i32_1 = arith.constant 0 : i32
    return %c0_i32, %c0_i32_0 : i32, i32
  }
  func.func @transform_10(%arg0: i32, %arg1: i32) -> (i32, i32) {
    %c0_i32 = arith.constant 0 : i32
    %c0_i32_0 = arith.constant 0 : i32
    %c0_i32_1 = arith.constant 0 : i32
    return %c0_i32, %c0_i32_0 : i32, i32
  }
  func.func @transform_11(%arg0: i32, %arg1: i32) -> (i32, i32) {
    %c0_i32 = arith.constant 0 : i32
    %c0_i32_0 = arith.constant 0 : i32
    %c0_i32_1 = arith.constant 0 : i32
    return %c0_i32, %c0_i32_0 : i32, i32
  }
  func.func @transform_12(%arg0: i32, %arg1: i32) -> (i32, i32, i32, i32) {
    %c0_i32 = arith.constant 0 : i32
    %c0_i32_0 = arith.constant 0 : i32
    %c0_i32_1 = arith.constant 0 : i32
    return %arg0, %arg1, %c0_i32, %c0_i32_0 : i32, i32, i32, i32
  }
}

</mosaic_0001>

<llo_original>
// kernel: upsampling_bottleneck.1
$region0: #{upsampling_bottleneck.1}
  #allocation0 [shape = 'u32[]', space=smem, size = 0x4, offset = 0x4, fixed_abs, tag = 'smem constant byte address 0x4 - core index']
  #allocation1 [shape = 'u32[144,128]{1,0:T(1,128)}', space=vmem, size = 0x12000, scoped, tag = 'internal scratch']
  %s0 = inlined_call_operand.vmem [shape: f32[2,16,16,16], index: 0, kind: input, shape index: {}, may-alias: {0,1}]
  %s1 = inlined_call_operand.vmem [shape: f32[2,16,16,16], index: 1, kind: input, shape index: {}, may-alias: {0,1}]
  %s2 = inlined_call_operand.vmem [shape: s32[2,16,16,8], index: 2, kind: input, shape index: {}]
  %s3 = inlined_call_operand.vmem [shape: s32[1,32], index: 3, kind: input, shape index: {}]
  %s4 = inlined_call_operand.vmem [shape: bf16[16,8], index: 4, kind: input, shape index: {}]
  %s5 = inlined_call_operand.vmem [shape: f32[1,8], index: 5, kind: input, shape index: {}]
  %s6 = inlined_call_operand.vmem [shape: bf16[16,4], index: 6, kind: input, shape index: {}]
  %s7 = inlined_call_operand.vmem [shape: f32[1,4], index: 7, kind: input, shape index: {}]
  %s8 = inlined_call_operand.vmem [shape: bf16[16,16], index: 8, kind: input, shape index: {}]
  %s9 = inlined_call_operand.vmem [shape: f32[1,16], index: 9, kind: input, shape index: {}]
  %s10 = inlined_call_operand.vmem [shape: bf16[16,32], index: 10, kind: input, shape index: {}]
  %s11 = inlined_call_operand.vmem [shape: f32[1,32], index: 11, kind: input, shape index: {}]
  %s12 = inlined_call_operand.vmem [shape: f32[2,16,16,32], index: 12, kind: output, shape index: {}]
  %s13 = sld [smem:[#allocation0]]
  $region81: #{upsampling_bottleneck.1} parent=0
    _
  %s15 = ssub.s32 1, %s13
  %s16 = scalar_select 0, %s15, %s13
  loop: start=0, step=1, limit=4
  $region2: #{upsampling_bottleneck.1} parent=0 // loop_pre_header
    _
  $region3: #{upsampling_bottleneck.1} parent=0 // loop_header
    %s18 = sphi 0, %s22
    %p19 = scmp.ge.s32.totalorder %s18, 4
    %s25 = sphi 0, %s37
    %s26 = sphi 0, %s33
    %s27 = sphi 0, %s25
    %s28 = sphi 0, %s26
    %s29 = sphi 0, %s27
    %s30 = sphi 0, %s28
    %s42 = sphi 0, %s44
    %s45 = sphi 0, %s42
    %s46 = sphi 0, %s45
    %s62 = sphi 0, %s46
    %s78 = sphi 0, %s80
    %s81 = sphi 0, %s78
    %s82 = sphi 0, %s81
    %s98 = sphi 0, %s82
    %s106 = sphi 0, %s108
    %s109 = sphi 0, %s106
    %s110 = sphi 0, %s109
    %s126 = sphi 0, %s110
    %s130 = sphi 0, %s130
    %s132 = sphi 0, %s130
    %s133 = sphi 0, %s132
    %s147 = sphi 0, %s133
    %s151 = sphi 0, %s151
    %s153 = sphi 0, %s151
    %s154 = sphi 0, %s153
    %s168 = sphi 0, %s154
    %s172 = sphi 0, %s172
    %s174 = sphi 0, %s172
    %s175 = sphi 0, %s174
    %s189 = sphi 0, %s175
    %s193 = sphi 0, %s193
    %s195 = sphi 0, %s193
    %s196 = sphi 0, %s195
    %s210 = sphi 0, %s196
    %s214 = sphi 0, %s214
    %s216 = sphi 0, %s214
    %s217 = sphi 0, %s216
    %s231 = sphi 0, %s217
    %s235 = sphi 0, %s235
    %s237 = sphi 0, %s235
    %s238 = sphi 0, %s237
    %s252 = sphi 0, %s238
    %s256 = sphi 0, %s256
    %s258 = sphi 0, %s256
    %s259 = sphi 0, %s258
    %s273 = sphi 0, %s259
    %s277 = sphi 0, %s277
    %s279 = sphi 0, %s277
    %s280 = sphi 0, %s279
    %s294 = sphi 0, %s280
    %s298 = sphi 0, %s298
    %s300 = sphi 0, %s298
    %s301 = sphi 0, %s300
    %s315 = sphi 0, %s301
    %s323 = sphi 0, %s325
    %s326 = sphi 0, %s323
    %s327 = sphi 0, %s326
    %s343 = sphi 0, %s327
  $region4: #{upsampling_bottleneck.1} parent=0 // loop_header_branch
    %21 = sbr.rel (%p19) target = $region8
  $region5: #{upsampling_bottleneck.1} parent=0 // loop_body
    %s23 = ssub.s32 %s18, 1
    %s24 = ssub.s32 %s18, 2
    %s31 = sadd.s32 1, %s26
    %p32 = scmp.ge.s32.totalorder %s31, 1
    %s33 = scalar_select %p32, 0, %s31
    %s34 = sadd.s32 1, %s25
    %s35 = scalar_select %p32, %s34, %s25
    %p36 = scmp.ge.s32.totalorder %s35, 2
    %s37 = scalar_select %p36, 0, %s35
    %s38 = ssub.s32 %s25, %s37
    %s39 = ssub.s32 %s26, %s33
    %s40 = sor.u32 %s38, %s39
    %p41 = scmp.eq.s32.totalorder %s40, 0
    %s43 = sadd.s32 %s42, 1
    %s44 = scalar_select %p41, %s42, %s43
    %p47 = pneg %p41
    %p48 = scmp.eq.s32.totalorder %s18, 1
    %p49 = por %p47, %p48
    %p50 = scmp.ne.s32.totalorder %s42, %s45
    %p51 = scmp.eq.s32.totalorder %s18, 0
    %p52 = por %p50, %p51
    %p53 = scmp.ne.s32.totalorder %s42, %s45
    %p54 = scmp.eq.s32.totalorder %s23, 1
    %p55 = por %p53, %p54
    %p56 = scmp.ne.s32.totalorder %s45, %s46
    %p57 = scmp.eq.s32.totalorder %s23, 0
    %p58 = por %p56, %p57
    %p59 = scmp.ne.s32.totalorder %s45, %s46
    %p60 = scmp.eq.s32.totalorder %s24, 1
    %p61 = por %p59, %p60
    %p63 = scmp.ne.s32.totalorder %s46, %s62
    %p64 = scmp.eq.s32.totalorder %s24, 0
    %p65 = por %p63, %p64
    %s66 = sadd.s32 %s26, 1
    %s67 = smul.u32 %s66, 16
    %p68 = scmp.lt.s32.totalorder %s67, 15
    %s69 = scalar_select %p68, %s67, 15
    %s70 = sadd.s32 %s33, 1
    %s71 = smul.u32 %s70, 16
    %p72 = scmp.lt.s32.totalorder %s71, 15
    %s73 = scalar_select %p72, %s71, 15
    %s74 = ssub.s32 %s25, %s37
    %s75 = ssub.s32 %s69, %s73
    %s76 = sor.u32 %s74, %s75
    %p77 = scmp.eq.s32.totalorder %s76, 0
    %s79 = sadd.s32 %s78, 1
    %s80 = scalar_select %p77, %s78, %s79
    %p83 = pneg %p77
    %p84 = scmp.eq.s32.totalorder %s18, 1
    %p85 = por %p83, %p84
    %p86 = scmp.ne.s32.totalorder %s78, %s81
    %p87 = scmp.eq.s32.totalorder %s18, 0
    %p88 = por %p86, %p87
    %p89 = scmp.ne.s32.totalorder %s78, %s81
    %p90 = scmp.eq.s32.totalorder %s23, 1
    %p91 = por %p89, %p90
    %p92 = scmp.ne.s32.totalorder %s81, %s82
    %p93 = scmp.eq.s32.totalorder %s23, 0
    %p94 = por %p92, %p93
    %p95 = scmp.ne.s32.totalorder %s81, %s82
    %p96 = scmp.eq.s32.totalorder %s24, 1
    %p97 = por %p95, %p96
    %p99 = scmp.ne.s32.totalorder %s82, %s98
    %p100 = scmp.eq.s32.totalorder %s24, 0
    %p101 = por %p99, %p100
    %s102 = ssub.s32 %s25, %s37
    %s103 = ssub.s32 %s26, %s33
    %s104 = sor.u32 %s102, %s103
    %p105 = scmp.eq.s32.totalorder %s104, 0
    %s107 = sadd.s32 %s106, 1
    %s108 = scalar_select %p105, %s106, %s107
    %p111 = pneg %p105
    %p112 = scmp.eq.s32.totalorder %s18, 1
    %p113 = por %p111, %p112
    %p114 = scmp.ne.s32.totalorder %s106, %s109
    %p115 = scmp.eq.s32.totalorder %s18, 0
    %p116 = por %p114, %p115
    %p117 = scmp.ne.s32.totalorder %s106, %s109
    %p118 = scmp.eq.s32.totalorder %s23, 1
    %p119 = por %p117, %p118
    %p120 = scmp.ne.s32.totalorder %s109, %s110
    %p121 = scmp.eq.s32.totalorder %s23, 0
    %p122 = por %p120, %p121
    %p123 = scmp.ne.s32.totalorder %s109, %s110
    %p124 = scmp.eq.s32.totalorder %s24, 1
    %p125 = por %p123, %p124
    %p127 = scmp.ne.s32.totalorder %s110, %s126
    %p128 = scmp.eq.s32.totalorder %s24, 0
    %p129 = por %p127, %p128
    %s131 = sadd.s32 %s130, 1
    %p134 = scmp.eq.s32.totalorder %s18, 1
    %p135 = scmp.ne.s32.totalorder %s130, %s132
    %p136 = scmp.eq.s32.totalorder %s18, 0
    %p137 = por %p135, %p136
    %p138 = scmp.ne.s32.totalorder %s130, %s132
    %p139 = scmp.eq.s32.totalorder %s23, 1
    %p140 = por %p138, %p139
    %p141 = scmp.ne.s32.totalorder %s132, %s133
    %p142 = scmp.eq.s32.totalorder %s23, 0
    %p143 = por %p141, %p142
    %p144 = scmp.ne.s32.totalorder %s132, %s133
    %p145 = scmp.eq.s32.totalorder %s24, 1
    %p146 = por %p144, %p145
    %p148 = scmp.ne.s32.totalorder %s133, %s147
    %p149 = scmp.eq.s32.totalorder %s24, 0
    %p150 = por %p148, %p149
    %s152 = sadd.s32 %s151, 1
    %p155 = scmp.eq.s32.totalorder %s18, 1
    %p156 = scmp.ne.s32.totalorder %s151, %s153
    %p157 = scmp.eq.s32.totalorder %s18, 0
    %p158 = por %p156, %p157
    %p159 = scmp.ne.s32.totalorder %s151, %s153
    %p160 = scmp.eq.s32.totalorder %s23, 1
    %p161 = por %p159, %p160
    %p162 = scmp.ne.s32.totalorder %s153, %s154
    %p163 = scmp.eq.s32.totalorder %s23, 0
    %p164 = por %p162, %p163
    %p165 = scmp.ne.s32.totalorder %s153, %s154
    %p166 = scmp.eq.s32.totalorder %s24, 1
    %p167 = por %p165, %p166
    %p169 = scmp.ne.s32.totalorder %s154, %s168
    %p170 = scmp.eq.s32.totalorder %s24, 0
    %p171 = por %p169, %p170
    %s173 = sadd.s32 %s172, 1
    %p176 = scmp.eq.s32.totalorder %s18, 1
    %p177 = scmp.ne.s32.totalorder %s172, %s174
    %p178 = scmp.eq.s32.totalorder %s18, 0
    %p179 = por %p177, %p178
    %p180 = scmp.ne.s32.totalorder %s172, %s174
    %p181 = scmp.eq.s32.totalorder %s23, 1
    %p182 = por %p180, %p181
    %p183 = scmp.ne.s32.totalorder %s174, %s175
    %p184 = scmp.eq.s32.totalorder %s23, 0
    %p185 = por %p183, %p184
    %p186 = scmp.ne.s32.totalorder %s174, %s175
    %p187 = scmp.eq.s32.totalorder %s24, 1
    %p188 = por %p186, %p187
    %p190 = scmp.ne.s32.totalorder %s175, %s189
    %p191 = scmp.eq.s32.totalorder %s24, 0
    %p192 = por %p190, %p191
    %s194 = sadd.s32 %s193, 1
    %p197 = scmp.eq.s32.totalorder %s18, 1
    %p198 = scmp.ne.s32.totalorder %s193, %s195
    %p199 = scmp.eq.s32.totalorder %s18, 0
    %p200 = por %p198, %p199
    %p201 = scmp.ne.s32.totalorder %s193, %s195
    %p202 = scmp.eq.s32.totalorder %s23, 1
    %p203 = por %p201, %p202
    %p204 = scmp.ne.s32.totalorder %s195, %s196
    %p205 = scmp.eq.s32.totalorder %s23, 0
    %p206 = por %p204, %p205
    %p207 = scmp.ne.s32.totalorder %s195, %s196
    %p208 = scmp.eq.s32.totalorder %s24, 1
    %p209 = por %p207, %p208
    %p211 = scmp.ne.s32.totalorder %s196, %s210
    %p212 = scmp.eq.s32.totalorder %s24, 0
    %p213 = por %p211, %p212
    %s215 = sadd.s32 %s214, 1
    %p218 = scmp.eq.s32.totalorder %s18, 1
    %p219 = scmp.ne.s32.totalorder %s214, %s216
    %p220 = scmp.eq.s32.totalorder %s18, 0
    %p221 = por %p219, %p220
    %p222 = scmp.ne.s32.totalorder %s214, %s216
    %p223 = scmp.eq.s32.totalorder %s23, 1
    %p224 = por %p222, %p223
    %p225 = scmp.ne.s32.totalorder %s216, %s217
    %p226 = scmp.eq.s32.totalorder %s23, 0
    %p227 = por %p225, %p226
    %p228 = scmp.ne.s32.totalorder %s216, %s217
    %p229 = scmp.eq.s32.totalorder %s24, 1
    %p230 = por %p228, %p229
    %p232 = scmp.ne.s32.totalorder %s217, %s231
    %p233 = scmp.eq.s32.totalorder %s24, 0
    %p234 = por %p232, %p233
    %s236 = sadd.s32 %s235, 1
    %p239 = scmp.eq.s32.totalorder %s18, 1
    %p240 = scmp.ne.s32.totalorder %s235, %s237
    %p241 = scmp.eq.s32.totalorder %s18, 0
    %p242 = por %p240, %p241
    %p243 = scmp.ne.s32.totalorder %s235, %s237
    %p244 = scmp.eq.s32.totalorder %s23, 1
    %p245 = por %p243, %p244
    %p246 = scmp.ne.s32.totalorder %s237, %s238
    %p247 = scmp.eq.s32.totalorder %s23, 0
    %p248 = por %p246, %p247
    %p249 = scmp.ne.s32.totalorder %s237, %s238
    %p250 = scmp.eq.s32.totalorder %s24, 1
    %p251 = por %p249, %p250
    %p253 = scmp.ne.s32.totalorder %s238, %s252
    %p254 = scmp.eq.s32.totalorder %s24, 0
    %p255 = por %p253, %p254
    %s257 = sadd.s32 %s256, 1
    %p260 = scmp.eq.s32.totalorder %s18, 1
    %p261 = scmp.ne.s32.totalorder %s256, %s258
    %p262 = scmp.eq.s32.totalorder %s18, 0
    %p263 = por %p261, %p262
    %p264 = scmp.ne.s32.totalorder %s256, %s258
    %p265 = scmp.eq.s32.totalorder %s23, 1
    %p266 = por %p264, %p265
    %p267 = scmp.ne.s32.totalorder %s258, %s259
    %p268 = scmp.eq.s32.totalorder %s23, 0
    %p269 = por %p267, %p268
    %p270 = scmp.ne.s32.totalorder %s258, %s259
    %p271 = scmp.eq.s32.totalorder %s24, 1
    %p272 = por %p270, %p271
    %p274 = scmp.ne.s32.totalorder %s259, %s273
    %p275 = scmp.eq.s32.totalorder %s24, 0
    %p276 = por %p274, %p275
    %s278 = sadd.s32 %s277, 1
    %p281 = scmp.eq.s32.totalorder %s18, 1
    %p282 = scmp.ne.s32.totalorder %s277, %s279
    %p283 = scmp.eq.s32.totalorder %s18, 0
    %p284 = por %p282, %p283
    %p285 = scmp.ne.s32.totalorder %s277, %s279
    %p286 = scmp.eq.s32.totalorder %s23, 1
    %p287 = por %p285, %p286
    %p288 = scmp.ne.s32.totalorder %s279, %s280
    %p289 = scmp.eq.s32.totalorder %s23, 0
    %p290 = por %p288, %p289
    %p291 = scmp.ne.s32.totalorder %s279, %s280
    %p292 = scmp.eq.s32.totalorder %s24, 1
    %p293 = por %p291, %p292
    %p295 = scmp.ne.s32.totalorder %s280, %s294
    %p296 = scmp.eq.s32.totalorder %s24, 0
    %p297 = por %p295, %p296
    %s299 = sadd.s32 %s298, 1
    %p302 = scmp.eq.s32.totalorder %s18, 1
    %p303 = scmp.ne.s32.totalorder %s298, %s300
    %p304 = scmp.eq.s32.totalorder %s18, 0
    %p305 = por %p303, %p304
    %p306 = scmp.ne.s32.totalorder %s298, %s300
    %p307 = scmp.eq.s32.totalorder %s23, 1
    %p308 = por %p306, %p307
    %p309 = scmp.ne.s32.totalorder %s300, %s301
    %p310 = scmp.eq.s32.totalorder %s23, 0
    %p311 = por %p309, %p310
    %p312 = scmp.ne.s32.totalorder %s300, %s301
    %p313 = scmp.eq.s32.totalorder %s24, 1
    %p314 = por %p312, %p313
    %p316 = scmp.ne.s32.totalorder %s301, %s315
    %p317 = scmp.eq.s32.totalorder %s24, 0
    %p318 = por %p316, %p317
    %s319 = ssub.s32 %s25, %s37
    %s320 = ssub.s32 %s26, %s33
    %s321 = sor.u32 %s319, %s320
    %p322 = scmp.eq.s32.totalorder %s321, 0
    %s324 = sadd.s32 %s323, 1
    %s325 = scalar_select %p322, %s323, %s324
    %p328 = pneg %p322
    %p329 = scmp.eq.s32.totalorder %s18, 1
    %p330 = por %p328, %p329
    %p331 = scmp.ne.s32.totalorder %s323, %s326
    %p332 = scmp.eq.s32.totalorder %s18, 0
    %p333 = por %p331, %p332
    %p334 = scmp.ne.s32.totalorder %s323, %s326
    %p335 = scmp.eq.s32.totalorder %s23, 1
    %p336 = por %p334, %p335
    %p337 = scmp.ne.s32.totalorder %s326, %s327
    %p338 = scmp.eq.s32.totalorder %s23, 0
    %p339 = por %p337, %p338
    %p340 = scmp.ne.s32.totalorder %s326, %s327
    %p341 = scmp.eq.s32.totalorder %s24, 1
    %p342 = por %p340, %p341
    %p344 = scmp.ne.s32.totalorder %s327, %s343
    %p345 = scmp.eq.s32.totalorder %s24, 0
    %p346 = por %p344, %p345
    %p347 = scmp.le.s32.totalorder 1, %s18
    %p348 = scmp.lt.s32.totalorder %s18, 3
    %p349 = pnand %p347, %p348
    %p350 = pneg %p349
    // Predicated region
    $region9: #{upsampling_bottleneck.1} parent=5 // pred_check
      _
    $region10: #{upsampling_bottleneck.1} parent=5 // pred_check_branch
      %352 = sbr.rel (%p349) target = $region12
    $region11: #{upsampling_bottleneck.1} parent=5 // pred_region
      %s353 = ssub.s32 %s18, 1
      // Predicated region
      $region13: #{upsampling_bottleneck.1} parent=11 // pred_check
        %p354 = pneg %p143
      $region14: #{upsampling_bottleneck.1} parent=11 // pred_check_branch
        %356 = sbr.rel (%p354) target = $region16
      $region15: #{upsampling_bottleneck.1} parent=11 // pred_region
        _
      $region16: #{upsampling_bottleneck.1} parent=11 // pred_fallthru
        _
      // Predicated region
      $region17: #{upsampling_bottleneck.1} parent=11 // pred_check
        %p357 = pneg %p164
      $region18: #{upsampling_bottleneck.1} parent=11 // pred_check_branch
        %359 = sbr.rel (%p357) target = $region20
      $region19: #{upsampling_bottleneck.1} parent=11 // pred_region
        _
      $region20: #{upsampling_bottleneck.1} parent=11 // pred_fallthru
        _
      // Predicated region
      $region21: #{upsampling_bottleneck.1} parent=11 // pred_check
        %p360 = pneg %p185
      $region22: #{upsampling_bottleneck.1} parent=11 // pred_check_branch
        %362 = sbr.rel (%p360) target = $region24
      $region23: #{upsampling_bottleneck.1} parent=11 // pred_region
        _
      $region24: #{upsampling_bottleneck.1} parent=11 // pred_fallthru
        _
      // Predicated region
      $region25: #{upsampling_bottleneck.1} parent=11 // pred_check
        %p363 = pneg %p206
      $region26: #{upsampling_bottleneck.1} parent=11 // pred_check_branch
        %365 = sbr.rel (%p363) target = $region28
      $region27: #{upsampling_bottleneck.1} parent=11 // pred_region
        _
      $region28: #{upsampling_bottleneck.1} parent=11 // pred_fallthru
        _
      // Predicated region
      $region29: #{upsampling_bottleneck.1} parent=11 // pred_check
        %p366 = pneg %p227
      $region30: #{upsampling_bottleneck.1} parent=11 // pred_check_branch
        %368 = sbr.rel (%p366) target = $region32
      $region31: #{upsampling_bottleneck.1} parent=11 // pred_region
        _
      $region32: #{upsampling_bottleneck.1} parent=11 // pred_fallthru
        _
      // Predicated region
      $region33: #{upsampling_bottleneck.1} parent=11 // pred_check
        %p369 = pneg %p248
      $region34: #{upsampling_bottleneck.1} parent=11 // pred_check_branch
        %371 = sbr.rel (%p369) target = $region36
      $region35: #{upsampling_bottleneck.1} parent=11 // pred_region
        _
      $region36: #{upsampling_bottleneck.1} parent=11 // pred_fallthru
        _
      // Predicated region
      $region37: #{upsampling_bottleneck.1} parent=11 // pred_check
        %p372 = pneg %p269
      $region38: #{upsampling_bottleneck.1} parent=11 // pred_check_branch
        %374 = sbr.rel (%p372) target = $region40
      $region39: #{upsampling_bottleneck.1} parent=11 // pred_region
        _
      $region40: #{upsampling_bottleneck.1} parent=11 // pred_fallthru
        _
      // Predicated region
      $region41: #{upsampling_bottleneck.1} parent=11 // pred_check
        %p375 = pneg %p290
      $region42: #{upsampling_bottleneck.1} parent=11 // pred_check_branch
        %377 = sbr.rel (%p375) target = $region44
      $region43: #{upsampling_bottleneck.1} parent=11 // pred_region
        _
      $region44: #{upsampling_bottleneck.1} parent=11 // pred_fallthru
        _
      // Predicated region
      $region45: #{upsampling_bottleneck.1} parent=11 // pred_check
        %p378 = pneg %p311
      $region46: #{upsampling_bottleneck.1} parent=11 // pred_check_branch
        %380 = sbr.rel (%p378) target = $region48
      $region47: #{upsampling_bottleneck.1} parent=11 // pred_region
        _
      $region48: #{upsampling_bottleneck.1} parent=11 // pred_fallthru
        _
    $region12: #{upsampling_bottleneck.1} parent=5 // pred_fallthru
      _
    %p381 = scmp.lt.s32.totalorder %s18, 2
    // Predicated region
    $region49: #{upsampling_bottleneck.1} parent=5 // pred_check
      %p382 = pneg %p381
    $region50: #{upsampling_bottleneck.1} parent=5 // pred_check_branch
      %384 = sbr.rel (%p382) target = $region52
    $region51: #{upsampling_bottleneck.1} parent=5 // pred_region
      // Predicated region
      $region53: #{upsampling_bottleneck.1} parent=51 // pred_check
        %p385 = pneg %p52
      $region54: #{upsampling_bottleneck.1} parent=51 // pred_check_branch
        %387 = sbr.rel (%p385) target = $region56
      $region55: #{upsampling_bottleneck.1} parent=51 // pred_region
        %s388 = smul.u32 16, %s26
        %p389 = scmp.lt.s32.totalorder %s25, 1
        %s390 = scalar_select %p389, %s25, 1
        %p391 = scmp.lt.s32.totalorder %s388, 15
        %s392 = scalar_select %p391, %s388, 15
        %s393 = smul.addr %s392, 2
        %s394 = smul.addr %s390, 32
        %s395 = sadd.s32 %s393, %s394
        %s396 = smul.addr %s395, 8
        %s397 = scalar_lea.vmem %s0, %s396
        %s398 = smul.u32 16, %s26
      $region56: #{upsampling_bottleneck.1} parent=51 // pred_fallthru
        _
      // Predicated region
      $region57: #{upsampling_bottleneck.1} parent=51 // pred_check
        %p399 = pneg %p88
      $region58: #{upsampling_bottleneck.1} parent=51 // pred_check_branch
        %401 = sbr.rel (%p399) target = $region60
      $region59: #{upsampling_bottleneck.1} parent=51 // pred_region
        %s402 = sadd.s32 %s26, 1
        %s403 = smul.u32 %s402, 16
        %p404 = scmp.lt.s32.totalorder %s403, 15
        %s405 = scalar_select %p404, %s403, 15
        %p406 = scmp.lt.s32.totalorder %s25, 1
        %s407 = scalar_select %p406, %s25, 1
        %p408 = scmp.lt.s32.totalorder %s405, 15
        %s409 = scalar_select %p408, %s405, 15
        %s410 = smul.addr %s409, 2
        %s411 = smul.addr %s407, 32
        %s412 = sadd.s32 %s410, %s411
        %s413 = smul.addr %s412, 8
        %s414 = scalar_lea.vmem %s1, %s413
        %s415 = sadd.s32 %s26, 1
        %s416 = smul.u32 %s415, 16
        %p417 = scmp.lt.s32.totalorder %s416, 15
        %s418 = scalar_select %p417, %s416, 15
      $region60: #{upsampling_bottleneck.1} parent=51 // pred_fallthru
        _
      // Predicated region
      $region61: #{upsampling_bottleneck.1} parent=51 // pred_check
        %p419 = pneg %p116
      $region62: #{upsampling_bottleneck.1} parent=51 // pred_check_branch
        %421 = sbr.rel (%p419) target = $region64
      $region63: #{upsampling_bottleneck.1} parent=51 // pred_region
        %s422 = smul.u32 16, %s26
        %p423 = scmp.lt.s32.totalorder %s25, 1
        %s424 = scalar_select %p423, %s25, 1
        %p425 = scmp.lt.s32.totalorder %s422, 15
        %s426 = scalar_select %p425, %s422, 15
        %s427 = smul.addr %s426, 2
        %s428 = smul.addr %s424, 32
        %s429 = sadd.s32 %s427, %s428
        %s430 = smul.addr %s429, 8
        %s431 = scalar_lea.vmem %s2, %s430
        %s432 = smul.u32 16, %s26
      $region64: #{upsampling_bottleneck.1} parent=51 // pred_fallthru
        _
    $region52: #{upsampling_bottleneck.1} parent=5 // pred_fallthru
      _
    %p433 = scmp.le.s32.totalorder 1, %s18
    %p434 = scmp.lt.s32.totalorder %s18, 3
    %p435 = pnand %p433, %p434
    %p436 = pneg %p435
    // Predicated region
    $region65: #{upsampling_bottleneck.1} parent=5 // pred_check
      _
    $region66: #{upsampling_bottleneck.1} parent=5 // pred_check_branch
      %438 = sbr.rel (%p435) target = $region68
    $region67: #{upsampling_bottleneck.1} parent=5 // pred_region
      %s439 = ssub.s32 %s18, 1
      %s440 = smul.u32 16, %s28
      %p441 = scmp.lt.s32.totalorder %s27, 1
      %s442 = scalar_select %p441, %s27, 1
      %p443 = scmp.lt.s32.totalorder %s440, 15
      %s444 = scalar_select %p443, %s440, 15
      %s445 = smul.addr %s444, 2
      %s446 = smul.addr %s442, 32
      %s447 = sadd.s32 %s445, %s446
      %s448 = smul.addr %s447, 8
      %s449 = scalar_lea.vmem %s0, %s448
      %p450 = pneg %p58
      %p451 = pneg %p55
      %s452 = sadd.s32 %s28, 1
      %s453 = smul.u32 %s452, 16
      %p454 = scmp.lt.s32.totalorder %s453, 15
      %s455 = scalar_select %p454, %s453, 15
      %p456 = scmp.lt.s32.totalorder %s27, 1
      %s457 = scalar_select %p456, %s27, 1
      %p458 = scmp.lt.s32.totalorder %s455, 15
      %s459 = scalar_select %p458, %s455, 15
      %s460 = smul.addr %s459, 2
      %s461 = smul.addr %s457, 32
      %s462 = sadd.s32 %s460, %s461
      %s463 = smul.addr %s462, 8
      %s464 = scalar_lea.vmem %s1, %s463
      %p465 = pneg %p94
      %p466 = pneg %p91
      %s467 = smul.u32 16, %s28
      %p468 = scmp.lt.s32.totalorder %s27, 1
      %s469 = scalar_select %p468, %s27, 1
      %p470 = scmp.lt.s32.totalorder %s467, 15
      %s471 = scalar_select %p470, %s467, 15
      %s472 = smul.addr %s471, 2
      %s473 = smul.addr %s469, 32
      %s474 = sadd.s32 %s472, %s473
      %s475 = smul.addr %s474, 8
      %s476 = scalar_lea.vmem %s2, %s475
      %p477 = pneg %p122
      %p478 = pneg %p119
      %p479 = pneg %p143
      %p480 = pneg %p140
      %p481 = pneg %p164
      %p482 = pneg %p161
      %p483 = pneg %p185
      %p484 = pneg %p182
      %p485 = pneg %p206
      %p486 = pneg %p203
      %p487 = pneg %p227
      %p488 = pneg %p224
      %p489 = pneg %p248
      %p490 = pneg %p245
      %p491 = pneg %p269
      %p492 = pneg %p266
      %p493 = pneg %p290
      %p494 = pneg %p287
      %p495 = pneg %p311
      %p496 = pneg %p308
      %p497 = pneg %p339
      %p498 = pneg %p336
      %s499 = smul.u32 16, %s28
      %p500 = scmp.lt.s32.totalorder %s27, 1
      %s501 = scalar_select %p500, %s27, 1
      %p502 = scmp.lt.s32.totalorder %s499, 15
      %s503 = scalar_select %p502, %s499, 15
      %s504 = smul.addr %s503, 2
      %s505 = smul.addr %s501, 32
      %s506 = sadd.s32 %s504, %s505
      %s507 = smul.addr %s506, 8
      %s508 = scalar_lea.vmem %s12, %s507
      %s509 = smul.u32 16, %s28
      %p510 = scmp.lt.s32.totalorder %s27, 1
      %s511 = scalar_select %p510, %s27, 1
      %p512 = scmp.lt.s32.totalorder %s509, 15
      %s513 = scalar_select %p512, %s509, 15
      %s514 = smul.addr %s513, 2
      %s515 = smul.addr %s511, 32
      %s516 = sadd.s32 %s514, %s515
      %s517 = smul.addr %s516, 8
      %s518 = scalar_lea.vmem %s0, %s517
      %s519 = smul.u32 16, %s28
      %s520 = sadd.s32 %s28, 1
      %s521 = smul.u32 %s520, 16
      %p522 = scmp.lt.s32.totalorder %s521, 15
      %s523 = scalar_select %p522, %s521, 15
      %p524 = scmp.lt.s32.totalorder %s27, 1
      %s525 = scalar_select %p524, %s27, 1
      %p526 = scmp.lt.s32.totalorder %s523, 15
      %s527 = scalar_select %p526, %s523, 15
      %s528 = smul.addr %s527, 2
      %s529 = smul.addr %s525, 32
      %s530 = sadd.s32 %s528, %s529
      %s531 = smul.addr %s530, 8
      %s532 = scalar_lea.vmem %s1, %s531
      %s533 = sadd.s32 %s28, 1
      %s534 = smul.u32 %s533, 16
      %p535 = scmp.lt.s32.totalorder %s534, 15
      %s536 = scalar_select %p535, %s534, 15
      %s537 = smul.u32 16, %s28
      %p538 = scmp.lt.s32.totalorder %s27, 1
      %s539 = scalar_select %p538, %s27, 1
      %p540 = scmp.lt.s32.totalorder %s537, 15
      %s541 = scalar_select %p540, %s537, 15
      %s542 = smul.addr %s541, 2
      %s543 = smul.addr %s539, 32
      %s544 = sadd.s32 %s542, %s543
      %s545 = smul.addr %s544, 8
      %s546 = scalar_lea.vmem %s2, %s545
      %s547 = smul.u32 16, %s28
      %s548 = smul.u32 16, %s28
      %p549 = scmp.lt.s32.totalorder %s27, 1
      %s550 = scalar_select %p549, %s27, 1
      %p551 = scmp.lt.s32.totalorder %s548, 15
      %s552 = scalar_select %p551, %s548, 15
      %s553 = smul.addr %s552, 2
      %s554 = smul.addr %s550, 32
      %s555 = sadd.s32 %s553, %s554
      %s556 = smul.addr %s555, 8
      %s557 = scalar_lea.vmem %s12, %s556
      %s558 = smul.u32 16, %s28
      %v560 = vld [vmem:[%s518] sm:$0xff]
      %v561 = vld [vmem:[%s518 + $0x8] sm:$0xff]
      %v562 = vld [vmem:[%s518 + $0x10] sm:$0xff]
      %v563 = vld [vmem:[%s518 + $0x18] sm:$0xff]
      %v564 = vld [vmem:[%s518 + $0x20] sm:$0xff]
      %v565 = vld [vmem:[%s518 + $0x28] sm:$0xff]
      %v566 = vld [vmem:[%s518 + $0x30] sm:$0xff]
      %v567 = vld [vmem:[%s518 + $0x38] sm:$0xff]
      %v568 = vld [vmem:[%s518 + $0x40] sm:$0xff]
      %v569 = vld [vmem:[%s518 + $0x48] sm:$0xff]
      %v570 = vld [vmem:[%s518 + $0x50] sm:$0xff]
      %v571 = vld [vmem:[%s518 + $0x58] sm:$0xff]
      %v572 = vld [vmem:[%s518 + $0x60] sm:$0xff]
      %v573 = vld [vmem:[%s518 + $0x68] sm:$0xff]
      %v574 = vld [vmem:[%s518 + $0x70] sm:$0xff]
      %v575 = vld [vmem:[%s518 + $0x78] sm:$0xff]
      %v576 = vld [vmem:[%s518 + $0x80] sm:$0xff]
      %v577 = vld [vmem:[%s518 + $0x88] sm:$0xff]
      %v578 = vld [vmem:[%s518 + $0x90] sm:$0xff]
      %v579 = vld [vmem:[%s518 + $0x98] sm:$0xff]
      %v580 = vld [vmem:[%s518 + $0xa0] sm:$0xff]
      %v581 = vld [vmem:[%s518 + $0xa8] sm:$0xff]
      %v582 = vld [vmem:[%s518 + $0xb0] sm:$0xff]
      %v583 = vld [vmem:[%s518 + $0xb8] sm:$0xff]
      %v584 = vld [vmem:[%s518 + $0xc0] sm:$0xff]
      %v585 = vld [vmem:[%s518 + $0xc8] sm:$0xff]
      %v586 = vld [vmem:[%s518 + $0xd0] sm:$0xff]
      %v587 = vld [vmem:[%s518 + $0xd8] sm:$0xff]
      %v588 = vld [vmem:[%s518 + $0xe0] sm:$0xff]
      %v589 = vld [vmem:[%s518 + $0xe8] sm:$0xff]
      %v590 = vld [vmem:[%s518 + $0xf0] sm:$0xff]
      %v591 = vld [vmem:[%s518 + $0xf8] sm:$0xff]
      %v592 = vpack.c.bf16 %v561, %v560
      %v593 = vpack.c.bf16 %v563, %v562
      %v594 = vpack.c.bf16 %v565, %v564
      %v595 = vpack.c.bf16 %v567, %v566
      %v596 = vpack.c.bf16 %v569, %v568
      %v597 = vpack.c.bf16 %v571, %v570
      %v598 = vpack.c.bf16 %v573, %v572
      %v599 = vpack.c.bf16 %v575, %v574
      %v600 = vpack.c.bf16 %v577, %v576
      %v601 = vpack.c.bf16 %v579, %v578
      %v602 = vpack.c.bf16 %v581, %v580
      %v603 = vpack.c.bf16 %v583, %v582
      %v604 = vpack.c.bf16 %v585, %v584
      %v605 = vpack.c.bf16 %v587, %v586
      %v606 = vpack.c.bf16 %v589, %v588
      %v607 = vpack.c.bf16 %v591, %v590
      %v608 = vld [vmem:[%s4] sm:$0xf]
      %v609 = vld [vmem:[%s4 + $0x4] sm:$0xf]
      %v610 = vld [vmem:[%s5] sm:$0x1]
      %v612 = vlaneseq
      %v613 = vshrl.u32 %v612, 7
      %v614 = vsub.s32 0, %v613
      %v615 = vrot.slane %v610, %v614
      %v619 = vunpack.c.l.b16 %v608
      %v620 = vunpack.c.l.b16 %v609
      %v621 = vpack.c.b16 %v620, %v619
      %vm623 = vcmask 130048
      %v625 = vsel %vm623, %v592, 0
      %v628 = vsel %vm623, %v593, 0
      %v631 = vsel %vm623, %v594, 0
      %v634 = vsel %vm623, %v595, 0
      %v637 = vsel %vm623, %v596, 0
      %v640 = vsel %vm623, %v597, 0
      %v643 = vsel %vm623, %v598, 0
      %v646 = vsel %vm623, %v599, 0
      %v649 = vsel %vm623, %v600, 0
      %v652 = vsel %vm623, %v601, 0
      %v655 = vsel %vm623, %v602, 0
      %v658 = vsel %vm623, %v603, 0
      %v661 = vsel %vm623, %v604, 0
      %v664 = vsel %vm623, %v605, 0
      %v667 = vsel %vm623, %v606, 0
      %v670 = vsel %vm623, %v607, 0
      %672 = vmatprep.subr.bf16.mxu0 0
      %673 = vmatpush1.bf16.msra.mxu0 %v621
      %674 = vmatprep.subr.bf16.mxu0 0
      %675 = vmatpush1.bf16.msra.mxu0 0
      %676 = vmatprep.subr.bf16.mxu0 0
      %677 = vmatpush1.bf16.msra.mxu0 0
      %678 = vmatprep.subr.bf16.mxu0 0
      %679 = vmatpush1.bf16.msra.mxu0 0
      %680 = vmatprep.subr.bf16.mxu0 0
      %681 = vmatpush1.bf16.msra.mxu0 0
      %682 = vmatprep.subr.bf16.mxu0 0
      %683 = vmatpush1.bf16.msra.mxu0 0
      %684 = vmatprep.subr.bf16.mxu0 0
      %685 = vmatpush1.bf16.msra.mxu0 0
      %686 = vmatprep.subr.bf16.mxu0 0
      %687 = vmatpush1.bf16.msra.mxu0 0
      %688 = vmatprep.subr.bf16.mxu0 0
      %689 = vmatpush1.bf16.msra.mxu0 0
      %690 = vmatprep.subr.bf16.mxu0 0
      %691 = vmatpush1.bf16.msra.mxu0 0
      %692 = vmatprep.subr.bf16.mxu0 0
      %693 = vmatpush1.bf16.msra.mxu0 0
      %694 = vmatprep.subr.bf16.mxu0 0
      %695 = vmatpush1.bf16.msra.mxu0 0
      %696 = vmatprep.subr.bf16.mxu0 0
      %697 = vmatpush1.bf16.msra.mxu0 0
      %698 = vmatprep.subr.bf16.mxu0 0
      %699 = vmatpush1.bf16.msra.mxu0 0
      %700 = vmatprep.subr.bf16.mxu0 0
      %701 = vmatpush1.bf16.msra.mxu0 0
      %702 = vmatprep.subr.bf16.mxu0 0
      %703 = vmatpush1.bf16.msra.mxu0 0
      %704 = vmatprep.mubr.bf16.mxu0 0
      %705 = vmatmul.mubr.bf16.gmra.mrb[0].mxu0 %v625
      %v706 = vpop.f32.mrb[0].mxu0
      %v707 = vadd.f32 %v615, %v706
      %v708 = vpop.f32.mrb[0].mxu0
      %v709 = vpop.f32.mrb[0].mxu0
      %v710 = vadd.f32 %v615, %v709
      %v711 = vpop.f32.mrb[0].mxu0
      %712 = vmatprep.mubr.bf16.mxu0 0
      %713 = vmatmul.mubr.bf16.gmra.mrb[0].mxu0 %v628
      %v714 = vpop.f32.mrb[0].mxu0
      %v715 = vadd.f32 %v615, %v714
      %v716 = vpop.f32.mrb[0].mxu0
      %v717 = vpop.f32.mrb[0].mxu0
      %v718 = vadd.f32 %v615, %v717
      %v719 = vpop.f32.mrb[0].mxu0
      %720 = vmatprep.mubr.bf16.mxu0 0
      %721 = vmatmul.mubr.bf16.gmra.mrb[0].mxu0 %v631
      %v722 = vpop.f32.mrb[0].mxu0
      %v723 = vadd.f32 %v615, %v722
      %v724 = vpop.f32.mrb[0].mxu0
      %v725 = vpop.f32.mrb[0].mxu0
      %v726 = vadd.f32 %v615, %v725
      %v727 = vpop.f32.mrb[0].mxu0
      %728 = vmatprep.mubr.bf16.mxu0 0
      %729 = vmatmul.mubr.bf16.gmra.mrb[0].mxu0 %v634
      %v730 = vpop.f32.mrb[0].mxu0
      %v731 = vadd.f32 %v615, %v730
      %v732 = vpop.f32.mrb[0].mxu0
      %v733 = vpop.f32.mrb[0].mxu0
      %v734 = vadd.f32 %v615, %v733
      %v735 = vpop.f32.mrb[0].mxu0
      %736 = vmatprep.mubr.bf16.mxu0 0
      %737 = vmatmul.mubr.bf16.gmra.mrb[0].mxu0 %v637
      %v738 = vpop.f32.mrb[0].mxu0
      %v739 = vadd.f32 %v615, %v738
      %v740 = vpop.f32.mrb[0].mxu0
      %v741 = vpop.f32.mrb[0].mxu0
      %v742 = vadd.f32 %v615, %v741
      %v743 = vpop.f32.mrb[0].mxu0
      %744 = vmatprep.mubr.bf16.mxu0 0
      %745 = vmatmul.mubr.bf16.gmra.mrb[0].mxu0 %v640
      %v746 = vpop.f32.mrb[0].mxu0
      %v747 = vadd.f32 %v615, %v746
      %v748 = vpop.f32.mrb[0].mxu0
      %v749 = vpop.f32.mrb[0].mxu0
      %v750 = vadd.f32 %v615, %v749
      %v751 = vpop.f32.mrb[0].mxu0
      %752 = vmatprep.mubr.bf16.mxu0 0
      %753 = vmatmul.mubr.bf16.gmra.mrb[0].mxu0 %v643
      %v754 = vpop.f32.mrb[0].mxu0
      %v755 = vadd.f32 %v615, %v754
      %v756 = vpop.f32.mrb[0].mxu0
      %v757 = vpop.f32.mrb[0].mxu0
      %v758 = vadd.f32 %v615, %v757
      %v759 = vpop.f32.mrb[0].mxu0
      %760 = vmatprep.mubr.bf16.mxu0 0
      %761 = vmatmul.mubr.bf16.gmra.mrb[0].mxu0 %v646
      %v762 = vpop.f32.mrb[0].mxu0
      %v763 = vadd.f32 %v615, %v762
      %v764 = vpop.f32.mrb[0].mxu0
      %v765 = vpop.f32.mrb[0].mxu0
      %v766 = vadd.f32 %v615, %v765
      %v767 = vpop.f32.mrb[0].mxu0
      %768 = vmatprep.mubr.bf16.mxu0 0
      %769 = vmatmul.mubr.bf16.gmra.mrb[0].mxu0 %v649
      %v770 = vpop.f32.mrb[0].mxu0
      %v771 = vadd.f32 %v615, %v770
      %v772 = vpop.f32.mrb[0].mxu0
      %v773 = vpop.f32.mrb[0].mxu0
      %v774 = vadd.f32 %v615, %v773
      %v775 = vpop.f32.mrb[0].mxu0
      %776 = vmatprep.mubr.bf16.mxu0 0
      %777 = vmatmul.mubr.bf16.gmra.mrb[0].mxu0 %v652
      %v778 = vpop.f32.mrb[0].mxu0
      %v779 = vadd.f32 %v615, %v778
      %v780 = vpop.f32.mrb[0].mxu0
      %v781 = vpop.f32.mrb[0].mxu0
      %v782 = vadd.f32 %v615, %v781
      %v783 = vpop.f32.mrb[0].mxu0
      %784 = vmatprep.mubr.bf16.mxu0 0
      %785 = vmatmul.mubr.bf16.gmra.mrb[0].mxu0 %v655
      %v786 = vpop.f32.mrb[0].mxu0
      %v787 = vadd.f32 %v615, %v786
      %v788 = vpop.f32.mrb[0].mxu0
      %v789 = vpop.f32.mrb[0].mxu0
      %v790 = vadd.f32 %v615, %v789
      %v791 = vpop.f32.mrb[0].mxu0
      %792 = vmatprep.mubr.bf16.mxu0 0
      %793 = vmatmul.mubr.bf16.gmra.mrb[0].mxu0 %v658
      %v794 = vpop.f32.mrb[0].mxu0
      %v795 = vadd.f32 %v615, %v794
      %v796 = vpop.f32.mrb[0].mxu0
      %v797 = vpop.f32.mrb[0].mxu0
      %v798 = vadd.f32 %v615, %v797
      %v799 = vpop.f32.mrb[0].mxu0
      %800 = vmatprep.mubr.bf16.mxu0 0
      %801 = vmatmul.mubr.bf16.gmra.mrb[0].mxu0 %v661
      %v802 = vpop.f32.mrb[0].mxu0
      %v803 = vadd.f32 %v615, %v802
      %v804 = vpop.f32.mrb[0].mxu0
      %v805 = vpop.f32.mrb[0].mxu0
      %v806 = vadd.f32 %v615, %v805
      %v807 = vpop.f32.mrb[0].mxu0
      %808 = vmatprep.mubr.bf16.mxu0 0
      %809 = vmatmul.mubr.bf16.gmra.mrb[0].mxu0 %v664
      %v810 = vpop.f32.mrb[0].mxu0
      %v811 = vadd.f32 %v615, %v810
      %v812 = vpop.f32.mrb[0].mxu0
      %v813 = vpop.f32.mrb[0].mxu0
      %v814 = vadd.f32 %v615, %v813
      %v815 = vpop.f32.mrb[0].mxu0
      %816 = vmatprep.mubr.bf16.mxu0 0
      %817 = vmatmul.mubr.bf16.gmra.mrb[0].mxu0 %v667
      %v818 = vpop.f32.mrb[0].mxu0
      %v819 = vadd.f32 %v615, %v818
      %v820 = vpop.f32.mrb[0].mxu0
      %v821 = vpop.f32.mrb[0].mxu0
      %v822 = vadd.f32 %v615, %v821
      %v823 = vpop.f32.mrb[0].mxu0
      %824 = vmatprep.mubr.bf16.mxu0 0
      %825 = vmatmul.mubr.bf16.gmra.mrb[0].mxu0 %v670
      %v826 = vpop.f32.mrb[0].mxu0
      %v827 = vadd.f32 %v615, %v826
      %v828 = vpop.f32.mrb[0].mxu0
      %v829 = vpop.f32.mrb[0].mxu0
      %v830 = vadd.f32 %v615, %v829
      %v831 = vpop.f32.mrb[0].mxu0
      %832 = vdwg.mxu0
      %v833 = vld [vmem:[%s6] sm:$0xf]
      %v834 = vld [vmem:[%s6 + $0x4] sm:$0xf]
      %v835 = vld [vmem:[%s7] sm:$0x1]
      %v837 = vlaneseq
      %v838 = vshrl.u32 %v837, 7
      %v839 = vsub.s32 0, %v838
      %v840 = vrot.slane %v835, %v839
      %v844 = vunpack.c.l.b16 %v833
      %v845 = vunpack.c.l.b16 %v834
      %v846 = vpack.c.b16 %v845, %v844
      %848 = vmatprep.subr.bf16.mxu0 0
      %849 = vmatpush1.bf16.msra.mxu0 %v846
      %850 = vmatprep.subr.bf16.mxu0 0
      %851 = vmatpush1.bf16.msra.mxu0 0
      %852 = vmatprep.subr.bf16.mxu0 0
      %853 = vmatpush1.bf16.msra.mxu0 0
      %854 = vmatprep.subr.bf16.mxu0 0
      %855 = vmatpush1.bf16.msra.mxu0 0
      %856 = vmatprep.subr.bf16.mxu0 0
      %857 = vmatpush1.bf16.msra.mxu0 0
      %858 = vmatprep.subr.bf16.mxu0 0
      %859 = vmatpush1.bf16.msra.mxu0 0
      %860 = vmatprep.subr.bf16.mxu0 0
      %861 = vmatpush1.bf16.msra.mxu0 0
      %862 = vmatprep.subr.bf16.mxu0 0
      %863 = vmatpush1.bf16.msra.mxu0 0
      %864 = vmatprep.subr.bf16.mxu0 0
      %865 = vmatpush1.bf16.msra.mxu0 0
      %866 = vmatprep.subr.bf16.mxu0 0
      %867 = vmatpush1.bf16.msra.mxu0 0
      %868 = vmatprep.subr.bf16.mxu0 0
      %869 = vmatpush1.bf16.msra.mxu0 0
      %870 = vmatprep.subr.bf16.mxu0 0
      %871 = vmatpush1.bf16.msra.mxu0 0
      %872 = vmatprep.subr.bf16.mxu0 0
      %873 = vmatpush1.bf16.msra.mxu0 0
      %874 = vmatprep.subr.bf16.mxu0 0
      %875 = vmatpush1.bf16.msra.mxu0 0
      %876 = vmatprep.subr.bf16.mxu0 0
      %877 = vmatpush1.bf16.msra.mxu0 0
      %878 = vmatprep.subr.bf16.mxu0 0
      %879 = vmatpush1.bf16.msra.mxu0 0
      %880 = vmatprep.mubr.bf16.mxu0 0
      %881 = vmatmul.mubr.bf16.gmra.mrb[0].mxu0 %v625
      %v882 = vpop.f32.mrb[0].mxu0
      %v883 = vadd.f32 %v840, %v882
      %v884 = vpop.f32.mrb[0].mxu0
      %v885 = vpop.f32.mrb[0].mxu0
      %v886 = vadd.f32 %v840, %v885
      %v887 = vpop.f32.mrb[0].mxu0
      %888 = vmatprep.mubr.bf16.mxu0 0
      %889 = vmatmul.mubr.bf16.gmra.mrb[0].mxu0 %v628
      %v890 = vpop.f32.mrb[0].mxu0
      %v891 = vadd.f32 %v840, %v890
      %v892 = vpop.f32.mrb[0].mxu0
      %v893 = vpop.f32.mrb[0].mxu0
      %v894 = vadd.f32 %v840, %v893
      %v895 = vpop.f32.mrb[0].mxu0
      %896 = vmatprep.mubr.bf16.mxu0 0
      %897 = vmatmul.mubr.bf16.gmra.mrb[0].mxu0 %v631
      %v898 = vpop.f32.mrb[0].mxu0
      %v899 = vadd.f32 %v840, %v898
      %v900 = vpop.f32.mrb[0].mxu0
      %v901 = vpop.f32.mrb[0].mxu0
      %v902 = vadd.f32 %v840, %v901
      %v903 = vpop.f32.mrb[0].mxu0
      %904 = vmatprep.mubr.bf16.mxu0 0
      %905 = vmatmul.mubr.bf16.gmra.mrb[0].mxu0 %v634
      %v906 = vpop.f32.mrb[0].mxu0
      %v907 = vadd.f32 %v840, %v906
      %v908 = vpop.f32.mrb[0].mxu0
      %v909 = vpop.f32.mrb[0].mxu0
      %v910 = vadd.f32 %v840, %v909
      %v911 = vpop.f32.mrb[0].mxu0
      %912 = vmatprep.mubr.bf16.mxu0 0
      %913 = vmatmul.mubr.bf16.gmra.mrb[0].mxu0 %v637
      %v914 = vpop.f32.mrb[0].mxu0
      %v915 = vadd.f32 %v840, %v914
      %v916 = vpop.f32.mrb[0].mxu0
      %v917 = vpop.f32.mrb[0].mxu0
      %v918 = vadd.f32 %v840, %v917
      %v919 = vpop.f32.mrb[0].mxu0
      %920 = vmatprep.mubr.bf16.mxu0 0
      %921 = vmatmul.mubr.bf16.gmra.mrb[0].mxu0 %v640
      %v922 = vpop.f32.mrb[0].mxu0
      %v923 = vadd.f32 %v840, %v922
      %v924 = vpop.f32.mrb[0].mxu0
      %v925 = vpop.f32.mrb[0].mxu0
      %v926 = vadd.f32 %v840, %v925
      %v927 = vpop.f32.mrb[0].mxu0
      %928 = vmatprep.mubr.bf16.mxu0 0
      %929 = vmatmul.mubr.bf16.gmra.mrb[0].mxu0 %v643
      %v930 = vpop.f32.mrb[0].mxu0
      %v931 = vadd.f32 %v840, %v930
      %v932 = vpop.f32.mrb[0].mxu0
      %v933 = vpop.f32.mrb[0].mxu0
      %v934 = vadd.f32 %v840, %v933
      %v935 = vpop.f32.mrb[0].mxu0
      %936 = vmatprep.mubr.bf16.mxu0 0
      %937 = vmatmul.mubr.bf16.gmra.mrb[0].mxu0 %v646
      %v938 = vpop.f32.mrb[0].mxu0
      %v939 = vadd.f32 %v840, %v938
      %v940 = vpop.f32.mrb[0].mxu0
      %v941 = vpop.f32.mrb[0].mxu0
      %v942 = vadd.f32 %v840, %v941
      %v943 = vpop.f32.mrb[0].mxu0
      %944 = vmatprep.mubr.bf16.mxu0 0
      %945 = vmatmul.mubr.bf16.gmra.mrb[0].mxu0 %v649
      %v946 = vpop.f32.mrb[0].mxu0
      %v947 = vadd.f32 %v840, %v946
      %v948 = vpop.f32.mrb[0].mxu0
      %v949 = vpop.f32.mrb[0].mxu0
      %v950 = vadd.f32 %v840, %v949
      %v951 = vpop.f32.mrb[0].mxu0
      %952 = vmatprep.mubr.bf16.mxu0 0
      %953 = vmatmul.mubr.bf16.gmra.mrb[0].mxu0 %v652
      %v954 = vpop.f32.mrb[0].mxu0
      %v955 = vadd.f32 %v840, %v954
      %v956 = vpop.f32.mrb[0].mxu0
      %v957 = vpop.f32.mrb[0].mxu0
      %v958 = vadd.f32 %v840, %v957
      %v959 = vpop.f32.mrb[0].mxu0
      %960 = vmatprep.mubr.bf16.mxu0 0
      %961 = vmatmul.mubr.bf16.gmra.mrb[0].mxu0 %v655
      %v962 = vpop.f32.mrb[0].mxu0
      %v963 = vadd.f32 %v840, %v962
      %v964 = vpop.f32.mrb[0].mxu0
      %v965 = vpop.f32.mrb[0].mxu0
      %v966 = vadd.f32 %v840, %v965
      %v967 = vpop.f32.mrb[0].mxu0
      %968 = vmatprep.mubr.bf16.mxu0 0
      %969 = vmatmul.mubr.bf16.gmra.mrb[0].mxu0 %v658
      %v970 = vpop.f32.mrb[0].mxu0
      %v971 = vadd.f32 %v840, %v970
      %v972 = vpop.f32.mrb[0].mxu0
      %v973 = vpop.f32.mrb[0].mxu0
      %v974 = vadd.f32 %v840, %v973
      %v975 = vpop.f32.mrb[0].mxu0
      %976 = vmatprep.mubr.bf16.mxu0 0
      %977 = vmatmul.mubr.bf16.gmra.mrb[0].mxu0 %v661
      %v978 = vpop.f32.mrb[0].mxu0
      %v979 = vadd.f32 %v840, %v978
      %v980 = vpop.f32.mrb[0].mxu0
      %v981 = vpop.f32.mrb[0].mxu0
      %v982 = vadd.f32 %v840, %v981
      %v983 = vpop.f32.mrb[0].mxu0
      %984 = vmatprep.mubr.bf16.mxu0 0
      %985 = vmatmul.mubr.bf16.gmra.mrb[0].mxu0 %v664
      %v986 = vpop.f32.mrb[0].mxu0
      %v987 = vadd.f32 %v840, %v986
      %v988 = vpop.f32.mrb[0].mxu0
      %v989 = vpop.f32.mrb[0].mxu0
      %v990 = vadd.f32 %v840, %v989
      %v991 = vpop.f32.mrb[0].mxu0
      %992 = vmatprep.mubr.bf16.mxu0 0
      %993 = vmatmul.mubr.bf16.gmra.mrb[0].mxu0 %v667
      %v994 = vpop.f32.mrb[0].mxu0
      %v995 = vadd.f32 %v840, %v994
      %v996 = vpop.f32.mrb[0].mxu0
      %v997 = vpop.f32.mrb[0].mxu0
      %v998 = vadd.f32 %v840, %v997
      %v999 = vpop.f32.mrb[0].mxu0
      %1000 = vmatprep.mubr.bf16.mxu0 0
      %1001 = vmatmul.mubr.bf16.gmra.mrb[0].mxu0 %v670
      %v1002 = vpop.f32.mrb[0].mxu0
      %v1003 = vadd.f32 %v840, %v1002
      %v1004 = vpop.f32.mrb[0].mxu0
      %v1005 = vpop.f32.mrb[0].mxu0
      %v1006 = vadd.f32 %v840, %v1005
      %v1007 = vpop.f32.mrb[0].mxu0
      %1008 = vdwg.mxu0
      %v1009 = vmax.f32 %v883, 0.0
      %v1010 = vmax.f32 %v886, 0.0
      %v1011 = vmax.f32 %v891, 0.0
      %v1012 = vmax.f32 %v894, 0.0
      %v1013 = vmax.f32 %v899, 0.0
      %v1014 = vmax.f32 %v902, 0.0
      %v1015 = vmax.f32 %v907, 0.0
      %v1016 = vmax.f32 %v910, 0.0
      %v1017 = vmax.f32 %v915, 0.0
      %v1018 = vmax.f32 %v918, 0.0
      %v1019 = vmax.f32 %v923, 0.0
      %v1020 = vmax.f32 %v926, 0.0
      %v1021 = vmax.f32 %v931, 0.0
      %v1022 = vmax.f32 %v934, 0.0
      %v1023 = vmax.f32 %v939, 0.0
      %v1024 = vmax.f32 %v942, 0.0
      %v1025 = vmax.f32 %v947, 0.0
      %v1026 = vmax.f32 %v950, 0.0
      %v1027 = vmax.f32 %v955, 0.0
      %v1028 = vmax.f32 %v958, 0.0
      %v1029 = vmax.f32 %v963, 0.0
      %v1030 = vmax.f32 %v966, 0.0
      %v1031 = vmax.f32 %v971, 0.0
      %v1032 = vmax.f32 %v974, 0.0
      %v1033 = vmax.f32 %v979, 0.0
      %v1034 = vmax.f32 %v982, 0.0
      %v1035 = vmax.f32 %v987, 0.0
      %v1036 = vmax.f32 %v990, 0.0
      %v1037 = vmax.f32 %v995, 0.0
      %v1038 = vmax.f32 %v998, 0.0
      %v1039 = vmax.f32 %v1003, 0.0
      %v1040 = vmax.f32 %v1006, 0.0
      %v1041 = vld [vmem:[%s532] sm:$0xff]
      %v1042 = vld [vmem:[%s532 + $0x8] sm:$0xff]
      %v1043 = vpack.c.bf16 %v1042, %v1041
      %v1045 = vsel %vm623, %v1043, 0
      %1047 = vmatprep.subr.bf16.mxu0 0
      %1048 = vmatpush1.bf16.msra.mxu0 %v846
      %1049 = vmatprep.subr.bf16.mxu0 0
      %1050 = vmatpush1.bf16.msra.mxu0 0
      %1051 = vmatprep.subr.bf16.mxu0 0
      %1052 = vmatpush1.bf16.msra.mxu0 0
      %1053 = vmatprep.subr.bf16.mxu0 0
      %1054 = vmatpush1.bf16.msra.mxu0 0
      %1055 = vmatprep.subr.bf16.mxu0 0
      %1056 = vmatpush1.bf16.msra.mxu0 0
      %1057 = vmatprep.subr.bf16.mxu0 0
      %1058 = vmatpush1.bf16.msra.mxu0 0
      %1059 = vmatprep.subr.bf16.mxu0 0
      %1060 = vmatpush1.bf16.msra.mxu0 0
      %1061 = vmatprep.subr.bf16.mxu0 0
      %1062 = vmatpush1.bf16.msra.mxu0 0
      %1063 = vmatprep.subr.bf16.mxu0 0
      %1064 = vmatpush1.bf16.msra.mxu0 0
      %1065 = vmatprep.subr.bf16.mxu0 0
      %1066 = vmatpush1.bf16.msra.mxu0 0
      %1067 = vmatprep.subr.bf16.mxu0 0
      %1068 = vmatpush1.bf16.msra.mxu0 0
      %1069 = vmatprep.subr.bf16.mxu0 0
      %1070 = vmatpush1.bf16.msra.mxu0 0
      %1071 = vmatprep.subr.bf16.mxu0 0
      %1072 = vmatpush1.bf16.msra.mxu0 0
      %1073 = vmatprep.subr.bf16.mxu0 0
      %1074 = vmatpush1.bf16.msra.mxu0 0
      %1075 = vmatprep.subr.bf16.mxu0 0
      %1076 = vmatpush1.bf16.msra.mxu0 0
      %1077 = vmatprep.subr.bf16.mxu0 0
      %1078 = vmatpush1.bf16.msra.mxu0 0
      %1079 = vmatprep.mubr.bf16.mxu0 0
      %1080 = vmatmul.mubr.bf16.gmra.mrb[0].mxu0 %v1045
      %v1081 = vpop.f32.mrb[0].mxu0
      %v1082 = vadd.f32 %v840, %v1081
      %v1083 = vpop.f32.mrb[0].mxu0
      %v1084 = vpop.f32.mrb[0].mxu0
      %v1085 = vadd.f32 %v840, %v1084
      %v1086 = vpop.f32.mrb[0].mxu0
      %1087 = vdwg.mxu0
      %v1088 = vmax.f32 %v1082, 0.0
      %v1089 = vmax.f32 %v1085, 0.0
      %p1090 = scmp.eq.s32.totalorder %s28, 0
      %s1091 = scalar_select %p1090, 0.0, 1.0
      %v1092 = vstv %s1091
      %v1093 = vmul.f32 %v1088, %v1092
      %v1094 = vmul.f32 %v1089, %v1092
      %vm1127 = vcmask 1046528
      %v1128 = vrot.slane %v1009, 1
      %v1129 = vrot.slane %v1010, 1
      %v1130 = vsel %vm1127, %v1128, %v1129
      %v1131 = vrot.slane %v1011, 1
      %v1132 = vrot.slane %v1012, 1
      %v1133 = vsel %vm1127, %v1131, %v1132
      %v1134 = vrot.slane %v1013, 1
      %v1135 = vrot.slane %v1014, 1
      %v1136 = vsel %vm1127, %v1134, %v1135
      %v1137 = vrot.slane %v1015, 1
      %v1138 = vrot.slane %v1016, 1
      %v1139 = vsel %vm1127, %v1137, %v1138
      %v1140 = vrot.slane %v1017, 1
      %v1141 = vrot.slane %v1018, 1
      %v1142 = vsel %vm1127, %v1140, %v1141
      %v1143 = vrot.slane %v1019, 1
      %v1144 = vrot.slane %v1020, 1
      %v1145 = vsel %vm1127, %v1143, %v1144
      %v1146 = vrot.slane %v1021, 1
      %v1147 = vrot.slane %v1022, 1
      %v1148 = vsel %vm1127, %v1146, %v1147
      %v1149 = vrot.slane %v1023, 1
      %v1150 = vrot.slane %v1024, 1
      %v1151 = vsel %vm1127, %v1149, %v1150
      %v1152 = vrot.slane %v1025, 1
      %v1153 = vrot.slane %v1026, 1
      %v1154 = vsel %vm1127, %v1152, %v1153
      %v1155 = vrot.slane %v1027, 1
      %v1156 = vrot.slane %v1028, 1
      %v1157 = vsel %vm1127, %v1155, %v1156
      %v1158 = vrot.slane %v1029, 1
      %v1159 = vrot.slane %v1030, 1
      %v1160 = vsel %vm1127, %v1158, %v1159
      %v1161 = vrot.slane %v1031, 1
      %v1162 = vrot.slane %v1032, 1
      %v1163 = vsel %vm1127, %v1161, %v1162
      %v1164 = vrot.slane %v1033, 1
      %v1165 = vrot.slane %v1034, 1
      %v1166 = vsel %vm1127, %v1164, %v1165
      %v1167 = vrot.slane %v1035, 1
      %v1168 = vrot.slane %v1036, 1
      %v1169 = vsel %vm1127, %v1167, %v1168
      %v1170 = vrot.slane %v1037, 1
      %v1171 = vrot.slane %v1038, 1
      %v1172 = vsel %vm1127, %v1170, %v1171
      %v1173 = vrot.slane %v1039, 1
      %v1174 = vrot.slane %v1040, 1
      %v1175 = vsel %vm1127, %v1173, %v1174
      %v1192 = vsel %vm1127, %v1129, 0.0
      %v1193 = vsel %vm1127, %v1132, 0.0
      %v1194 = vsel %vm1127, %v1135, 0.0
      %v1195 = vsel %vm1127, %v1138, 0.0
      %v1196 = vsel %vm1127, %v1141, 0.0
      %v1197 = vsel %vm1127, %v1144, 0.0
      %v1198 = vsel %vm1127, %v1147, 0.0
      %v1199 = vsel %vm1127, %v1150, 0.0
      %v1200 = vsel %vm1127, %v1153, 0.0
      %v1201 = vsel %vm1127, %v1156, 0.0
      %v1202 = vsel %vm1127, %v1159, 0.0
      %v1203 = vsel %vm1127, %v1162, 0.0
      %v1204 = vsel %vm1127, %v1165, 0.0
      %v1205 = vsel %vm1127, %v1168, 0.0
      %v1206 = vsel %vm1127, %v1171, 0.0
      %v1207 = vsel %vm1127, %v1174, 0.0
      %v1210 = vrot.slane %v1093, 1
      %v1211 = vrot.slane %v1094, 1
      %v1212 = vsel %vm1127, %v1210, %v1211
      %v1214 = vsel %vm1127, %v1211, 0.0
      %1231 = vrot.lane.b32.xlu0 %v1130, 4
      %v1232 = vpop.permute.xlu0 %1231
      %1233 = vrot.lane.b32.xlu0 %v1192, 4
      %v1234 = vpop.permute.xlu0 %1233
      %1235 = vrot.lane.b32.xlu0 %v1133, 4
      %v1236 = vpop.permute.xlu0 %1235
      %1237 = vrot.lane.b32.xlu0 %v1193, 4
      %v1238 = vpop.permute.xlu0 %1237
      %1239 = vrot.lane.b32.xlu0 %v1136, 4
      %v1240 = vpop.permute.xlu0 %1239
      %1241 = vrot.lane.b32.xlu0 %v1194, 4
      %v1242 = vpop.permute.xlu0 %1241
      %1243 = vrot.lane.b32.xlu0 %v1139, 4
      %v1244 = vpop.permute.xlu0 %1243
      %1245 = vrot.lane.b32.xlu0 %v1195, 4
      %v1246 = vpop.permute.xlu0 %1245
      %1247 = vrot.lane.b32.xlu0 %v1142, 4
      %v1248 = vpop.permute.xlu0 %1247
      %1249 = vrot.lane.b32.xlu0 %v1196, 4
      %v1250 = vpop.permute.xlu0 %1249
      %1251 = vrot.lane.b32.xlu0 %v1145, 4
      %v1252 = vpop.permute.xlu0 %1251
      %1253 = vrot.lane.b32.xlu0 %v1197, 4
      %v1254 = vpop.permute.xlu0 %1253
      %1255 = vrot.lane.b32.xlu0 %v1148, 4
      %v1256 = vpop.permute.xlu0 %1255
      %1257 = vrot.lane.b32.xlu0 %v1198, 4
      %v1258 = vpop.permute.xlu0 %1257
      %1259 = vrot.lane.b32.xlu0 %v1151, 4
      %v1260 = vpop.permute.xlu0 %1259
      %1261 = vrot.lane.b32.xlu0 %v1199, 4
      %v1262 = vpop.permute.xlu0 %1261
      %1263 = vrot.lane.b32.xlu0 %v1154, 4
      %v1264 = vpop.permute.xlu0 %1263
      %1265 = vrot.lane.b32.xlu0 %v1200, 4
      %v1266 = vpop.permute.xlu0 %1265
      %1267 = vrot.lane.b32.xlu0 %v1157, 4
      %v1268 = vpop.permute.xlu0 %1267
      %1269 = vrot.lane.b32.xlu0 %v1201, 4
      %v1270 = vpop.permute.xlu0 %1269
      %1271 = vrot.lane.b32.xlu0 %v1160, 4
      %v1272 = vpop.permute.xlu0 %1271
      %1273 = vrot.lane.b32.xlu0 %v1202, 4
      %v1274 = vpop.permute.xlu0 %1273
      %1275 = vrot.lane.b32.xlu0 %v1163, 4
      %v1276 = vpop.permute.xlu0 %1275
      %1277 = vrot.lane.b32.xlu0 %v1203, 4
      %v1278 = vpop.permute.xlu0 %1277
      %1279 = vrot.lane.b32.xlu0 %v1166, 4
      %v1280 = vpop.permute.xlu0 %1279
      %1281 = vrot.lane.b32.xlu0 %v1204, 4
      %v1282 = vpop.permute.xlu0 %1281
      %1283 = vrot.lane.b32.xlu0 %v1169, 4
      %v1284 = vpop.permute.xlu0 %1283
      %1285 = vrot.lane.b32.xlu0 %v1205, 4
      %v1286 = vpop.permute.xlu0 %1285
      %1287 = vrot.lane.b32.xlu0 %v1172, 4
      %v1288 = vpop.permute.xlu0 %1287
      %1289 = vrot.lane.b32.xlu0 %v1206, 4
      %v1290 = vpop.permute.xlu0 %1289
      %1291 = vrot.lane.b32.xlu0 %v1175, 4
      %v1292 = vpop.permute.xlu0 %1291
      %1293 = vrot.lane.b32.xlu0 %v1207, 4
      %v1294 = vpop.permute.xlu0 %1293
      %1327 = vrot.lane.b32.xlu0 %v1011, 8
      %v1328 = vpop.permute.xlu0 %1327
      %1329 = vrot.lane.b32.xlu0 %v1012, 8
      %v1330 = vpop.permute.xlu0 %1329
      %1331 = vrot.lane.b32.xlu0 %v1013, 8
      %v1332 = vpop.permute.xlu0 %1331
      %1333 = vrot.lane.b32.xlu0 %v1014, 8
      %v1334 = vpop.permute.xlu0 %1333
      %1335 = vrot.lane.b32.xlu0 %v1015, 8
      %v1336 = vpop.permute.xlu0 %1335
      %1337 = vrot.lane.b32.xlu0 %v1016, 8
      %v1338 = vpop.permute.xlu0 %1337
      %1339 = vrot.lane.b32.xlu0 %v1017, 8
      %v1340 = vpop.permute.xlu0 %1339
      %1341 = vrot.lane.b32.xlu0 %v1018, 8
      %v1342 = vpop.permute.xlu0 %1341
      %1343 = vrot.lane.b32.xlu0 %v1019, 8
      %v1344 = vpop.permute.xlu0 %1343
      %1345 = vrot.lane.b32.xlu0 %v1020, 8
      %v1346 = vpop.permute.xlu0 %1345
      %1347 = vrot.lane.b32.xlu0 %v1021, 8
      %v1348 = vpop.permute.xlu0 %1347
      %1349 = vrot.lane.b32.xlu0 %v1022, 8
      %v1350 = vpop.permute.xlu0 %1349
      %1351 = vrot.lane.b32.xlu0 %v1023, 8
      %v1352 = vpop.permute.xlu0 %1351
      %1353 = vrot.lane.b32.xlu0 %v1024, 8
      %v1354 = vpop.permute.xlu0 %1353
      %1355 = vrot.lane.b32.xlu0 %v1025, 8
      %v1356 = vpop.permute.xlu0 %1355
      %1357 = vrot.lane.b32.xlu0 %v1026, 8
      %v1358 = vpop.permute.xlu0 %1357
      %1359 = vrot.lane.b32.xlu0 %v1027, 8
      %v1360 = vpop.permute.xlu0 %1359
      %1361 = vrot.lane.b32.xlu0 %v1028, 8
      %v1362 = vpop.permute.xlu0 %1361
      %1363 = vrot.lane.b32.xlu0 %v1029, 8
      %v1364 = vpop.permute.xlu0 %1363
      %1365 = vrot.lane.b32.xlu0 %v1030, 8
      %v1366 = vpop.permute.xlu0 %1365
      %1367 = vrot.lane.b32.xlu0 %v1031, 8
      %v1368 = vpop.permute.xlu0 %1367
      %1369 = vrot.lane.b32.xlu0 %v1032, 8
      %v1370 = vpop.permute.xlu0 %1369
      %1371 = vrot.lane.b32.xlu0 %v1033, 8
      %v1372 = vpop.permute.xlu0 %1371
      %1373 = vrot.lane.b32.xlu0 %v1034, 8
      %v1374 = vpop.permute.xlu0 %1373
      %1375 = vrot.lane.b32.xlu0 %v1035, 8
      %v1376 = vpop.permute.xlu0 %1375
      %1377 = vrot.lane.b32.xlu0 %v1036, 8
      %v1378 = vpop.permute.xlu0 %1377
      %1379 = vrot.lane.b32.xlu0 %v1037, 8
      %v1380 = vpop.permute.xlu0 %1379
      %1381 = vrot.lane.b32.xlu0 %v1038, 8
      %v1382 = vpop.permute.xlu0 %1381
      %1383 = vrot.lane.b32.xlu0 %v1039, 8
      %v1384 = vpop.permute.xlu0 %1383
      %1385 = vrot.lane.b32.xlu0 %v1040, 8
      %v1386 = vpop.permute.xlu0 %1385
      %1387 = vrot.lane.b32.xlu0 %v1093, 8
      %v1388 = vpop.permute.xlu0 %1387
      %1389 = vrot.lane.b32.xlu0 %v1094, 8
      %v1390 = vpop.permute.xlu0 %1389
      %1424 = vrot.lane.b32.xlu0 %v1133, 12
      %v1425 = vpop.permute.xlu0 %1424
      %1426 = vrot.lane.b32.xlu0 %v1193, 12
      %v1427 = vpop.permute.xlu0 %1426
      %1428 = vrot.lane.b32.xlu0 %v1136, 12
      %v1429 = vpop.permute.xlu0 %1428
      %1430 = vrot.lane.b32.xlu0 %v1194, 12
      %v1431 = vpop.permute.xlu0 %1430
      %1432 = vrot.lane.b32.xlu0 %v1139, 12
      %v1433 = vpop.permute.xlu0 %1432
      %1434 = vrot.lane.b32.xlu0 %v1195, 12
      %v1435 = vpop.permute.xlu0 %1434
      %1436 = vrot.lane.b32.xlu0 %v1142, 12
      %v1437 = vpop.permute.xlu0 %1436
      %1438 = vrot.lane.b32.xlu0 %v1196, 12
      %v1439 = vpop.permute.xlu0 %1438
      %1440 = vrot.lane.b32.xlu0 %v1145, 12
      %v1441 = vpop.permute.xlu0 %1440
      %1442 = vrot.lane.b32.xlu0 %v1197, 12
      %v1443 = vpop.permute.xlu0 %1442
      %1444 = vrot.lane.b32.xlu0 %v1148, 12
      %v1445 = vpop.permute.xlu0 %1444
      %1446 = vrot.lane.b32.xlu0 %v1198, 12
      %v1447 = vpop.permute.xlu0 %1446
      %1448 = vrot.lane.b32.xlu0 %v1151, 12
      %v1449 = vpop.permute.xlu0 %1448
      %1450 = vrot.lane.b32.xlu0 %v1199, 12
      %v1451 = vpop.permute.xlu0 %1450
      %1452 = vrot.lane.b32.xlu0 %v1154, 12
      %v1453 = vpop.permute.xlu0 %1452
      %1454 = vrot.lane.b32.xlu0 %v1200, 12
      %v1455 = vpop.permute.xlu0 %1454
      %1456 = vrot.lane.b32.xlu0 %v1157, 12
      %v1457 = vpop.permute.xlu0 %1456
      %1458 = vrot.lane.b32.xlu0 %v1201, 12
      %v1459 = vpop.permute.xlu0 %1458
      %1460 = vrot.lane.b32.xlu0 %v1160, 12
      %v1461 = vpop.permute.xlu0 %1460
      %1462 = vrot.lane.b32.xlu0 %v1202, 12
      %v1463 = vpop.permute.xlu0 %1462
      %1464 = vrot.lane.b32.xlu0 %v1163, 12
      %v1465 = vpop.permute.xlu0 %1464
      %1466 = vrot.lane.b32.xlu0 %v1203, 12
      %v1467 = vpop.permute.xlu0 %1466
      %1468 = vrot.lane.b32.xlu0 %v1166, 12
      %v1469 = vpop.permute.xlu0 %1468
      %1470 = vrot.lane.b32.xlu0 %v1204, 12
      %v1471 = vpop.permute.xlu0 %1470
      %1472 = vrot.lane.b32.xlu0 %v1169, 12
      %v1473 = vpop.permute.xlu0 %1472
      %1474 = vrot.lane.b32.xlu0 %v1205, 12
      %v1475 = vpop.permute.xlu0 %1474
      %1476 = vrot.lane.b32.xlu0 %v1172, 12
      %v1477 = vpop.permute.xlu0 %1476
      %1478 = vrot.lane.b32.xlu0 %v1206, 12
      %v1479 = vpop.permute.xlu0 %1478
      %1480 = vrot.lane.b32.xlu0 %v1175, 12
      %v1481 = vpop.permute.xlu0 %1480
      %1482 = vrot.lane.b32.xlu0 %v1207, 12
      %v1483 = vpop.permute.xlu0 %1482
      %1484 = vrot.lane.b32.xlu0 %v1212, 12
      %v1485 = vpop.permute.xlu0 %1484
      %1486 = vrot.lane.b32.xlu0 %v1214, 12
      %v1487 = vpop.permute.xlu0 %1486
      %vm1520 = vcmask 31744
      %v1521 = vsel %vm1520, %v1009, %v1232
      %v1522 = vsel %vm1520, %v1010, %v1234
      %v1523 = vsel %vm1520, %v1011, %v1236
      %v1524 = vsel %vm1520, %v1012, %v1238
      %v1525 = vsel %vm1520, %v1013, %v1240
      %v1526 = vsel %vm1520, %v1014, %v1242
      %v1527 = vsel %vm1520, %v1015, %v1244
      %v1528 = vsel %vm1520, %v1016, %v1246
      %v1529 = vsel %vm1520, %v1017, %v1248
      %v1530 = vsel %vm1520, %v1018, %v1250
      %v1531 = vsel %vm1520, %v1019, %v1252
      %v1532 = vsel %vm1520, %v1020, %v1254
      %v1533 = vsel %vm1520, %v1021, %v1256
      %v1534 = vsel %vm1520, %v1022, %v1258
      %v1535 = vsel %vm1520, %v1023, %v1260
      %v1536 = vsel %vm1520, %v1024, %v1262
      %v1537 = vsel %vm1520, %v1025, %v1264
      %v1538 = vsel %vm1520, %v1026, %v1266
      %v1539 = vsel %vm1520, %v1027, %v1268
      %v1540 = vsel %vm1520, %v1028, %v1270
      %v1541 = vsel %vm1520, %v1029, %v1272
      %v1542 = vsel %vm1520, %v1030, %v1274
      %v1543 = vsel %vm1520, %v1031, %v1276
      %v1544 = vsel %vm1520, %v1032, %v1278
      %v1545 = vsel %vm1520, %v1033, %v1280
      %v1546 = vsel %vm1520, %v1034, %v1282
      %v1547 = vsel %vm1520, %v1035, %v1284
      %v1548 = vsel %vm1520, %v1036, %v1286
      %v1549 = vsel %vm1520, %v1037, %v1288
      %v1550 = vsel %vm1520, %v1038, %v1290
      %v1551 = vsel %vm1520, %v1039, %v1292
      %v1552 = vsel %vm1520, %v1040, %v1294
      %vm1553 = vcmask 64512
      %v1554 = vsel %vm1553, %v1521, %v1328
      %v1555 = vsel %vm1553, %v1522, %v1330
      %v1556 = vsel %vm1553, %v1523, %v1332
      %v1557 = vsel %vm1553, %v1524, %v1334
      %v1558 = vsel %vm1553, %v1525, %v1336
      %v1559 = vsel %vm1553, %v1526, %v1338
      %v1560 = vsel %vm1553, %v1527, %v1340
      %v1561 = vsel %vm1553, %v1528, %v1342
      %v1562 = vsel %vm1553, %v1529, %v1344
      %v1563 = vsel %vm1553, %v1530, %v1346
      %v1564 = vsel %vm1553, %v1531, %v1348
      %v1565 = vsel %vm1553, %v1532, %v1350
      %v1566 = vsel %vm1553, %v1533, %v1352
      %v1567 = vsel %vm1553, %v1534, %v1354
      %v1568 = vsel %vm1553, %v1535, %v1356
      %v1569 = vsel %vm1553, %v1536, %v1358
      %v1570 = vsel %vm1553, %v1537, %v1360
      %v1571 = vsel %vm1553, %v1538, %v1362
      %v1572 = vsel %vm1553, %v1539, %v1364
      %v1573 = vsel %vm1553, %v1540, %v1366
      %v1574 = vsel %vm1553, %v1541, %v1368
      %v1575 = vsel %vm1553, %v1542, %v1370
      %v1576 = vsel %vm1553, %v1543, %v1372
      %v1577 = vsel %vm1553, %v1544, %v1374
      %v1578 = vsel %vm1553, %v1545, %v1376
      %v1579 = vsel %vm1553, %v1546, %v1378
      %v1580 = vsel %vm1553, %v1547, %v1380
      %v1581 = vsel %vm1553, %v1548, %v1382
      %v1582 = vsel %vm1553, %v1549, %v1384
      %v1583 = vsel %vm1553, %v1550, %v1386
      %v1584 = vsel %vm1553, %v1551, %v1388
      %v1585 = vsel %vm1553, %v1552, %v1390
      %vm1586 = vcmask 97280
      %v1587 = vsel %vm1586, %v1554, %v1425
      %v1588 = vsel %vm1586, %v1555, %v1427
      %v1589 = vsel %vm1586, %v1556, %v1429
      %v1590 = vsel %vm1586, %v1557, %v1431
      %v1591 = vsel %vm1586, %v1558, %v1433
      %v1592 = vsel %vm1586, %v1559, %v1435
      %v1593 = vsel %vm1586, %v1560, %v1437
      %v1594 = vsel %vm1586, %v1561, %v1439
      %v1595 = vsel %vm1586, %v1562, %v1441
      %v1596 = vsel %vm1586, %v1563, %v1443
      %v1597 = vsel %vm1586, %v1564, %v1445
      %v1598 = vsel %vm1586, %v1565, %v1447
      %v1599 = vsel %vm1586, %v1566, %v1449
      %v1600 = vsel %vm1586, %v1567, %v1451
      %v1601 = vsel %vm1586, %v1568, %v1453
      %v1602 = vsel %vm1586, %v1569, %v1455
      %v1603 = vsel %vm1586, %v1570, %v1457
      %v1604 = vsel %vm1586, %v1571, %v1459
      %v1605 = vsel %vm1586, %v1572, %v1461
      %v1606 = vsel %vm1586, %v1573, %v1463
      %v1607 = vsel %vm1586, %v1574, %v1465
      %v1608 = vsel %vm1586, %v1575, %v1467
      %v1609 = vsel %vm1586, %v1576, %v1469
      %v1610 = vsel %vm1586, %v1577, %v1471
      %v1611 = vsel %vm1586, %v1578, %v1473
      %v1612 = vsel %vm1586, %v1579, %v1475
      %v1613 = vsel %vm1586, %v1580, %v1477
      %v1614 = vsel %vm1586, %v1581, %v1479
      %v1615 = vsel %vm1586, %v1582, %v1481
      %v1616 = vsel %vm1586, %v1583, %v1483
      %v1617 = vsel %vm1586, %v1584, %v1485
      %v1618 = vsel %vm1586, %v1585, %v1487
      %v1619 = vpack.c.bf16 %v1588, %v1587
      %v1620 = vpack.c.bf16 %v1590, %v1589
      %v1621 = vpack.c.bf16 %v1592, %v1591
      %v1622 = vpack.c.bf16 %v1594, %v1593
      %v1623 = vpack.c.bf16 %v1596, %v1595
      %v1624 = vpack.c.bf16 %v1598, %v1597
      %v1625 = vpack.c.bf16 %v1600, %v1599
      %v1626 = vpack.c.bf16 %v1602, %v1601
      %v1627 = vpack.c.bf16 %v1604, %v1603
      %v1628 = vpack.c.bf16 %v1606, %v1605
      %v1629 = vpack.c.bf16 %v1608, %v1607
      %v1630 = vpack.c.bf16 %v1610, %v1609
      %v1631 = vpack.c.bf16 %v1612, %v1611
      %v1632 = vpack.c.bf16 %v1614, %v1613
      %v1633 = vpack.c.bf16 %v1616, %v1615
      %v1634 = vpack.c.bf16 %v1618, %v1617
      %v1635 = vld [vmem:[%s8] sm:$0xf]
      %v1636 = vld [vmem:[%s8 + $0x4] sm:$0xf]
      %v1637 = vld [vmem:[%s9] sm:$0x1]
      %v1639 = vlaneseq
      %v1640 = vshrl.u32 %v1639, 7
      %v1641 = vsub.s32 0, %v1640
      %v1642 = vrot.slane %v1637, %v1641
      %v1646 = vunpack.c.l.b16 %v1635
      %v1647 = vunpack.c.l.b16 %v1636
      %v1648 = vpack.c.b16 %v1647, %v1646
      %v1651 = vsel %vm623, %v1619, 0
      %v1654 = vsel %vm623, %v1620, 0
      %v1657 = vsel %vm623, %v1621, 0
      %v1660 = vsel %vm623, %v1622, 0
      %v1663 = vsel %vm623, %v1623, 0
      %v1666 = vsel %vm623, %v1624, 0
      %v1669 = vsel %vm623, %v1625, 0
      %v1672 = vsel %vm623, %v1626, 0
      %v1675 = vsel %vm623, %v1627, 0
      %v1678 = vsel %vm623, %v1628, 0
      %v1681 = vsel %vm623, %v1629, 0
      %v1684 = vsel %vm623, %v1630, 0
      %v1687 = vsel %vm623, %v1631, 0
      %v1690 = vsel %vm623, %v1632, 0
      %v1693 = vsel %vm623, %v1633, 0
      %v1696 = vsel %vm623, %v1634, 0
      %1698 = vmatprep.subr.bf16.mxu0 0
      %1699 = vmatpush1.bf16.msra.mxu0 %v1648
      %1700 = vmatprep.subr.bf16.mxu0 0
      %1701 = vmatpush1.bf16.msra.mxu0 0
      %1702 = vmatprep.subr.bf16.mxu0 0
      %1703 = vmatpush1.bf16.msra.mxu0 0
      %1704 = vmatprep.subr.bf16.mxu0 0
      %1705 = vmatpush1.bf16.msra.mxu0 0
      %1706 = vmatprep.subr.bf16.mxu0 0
      %1707 = vmatpush1.bf16.msra.mxu0 0
      %1708 = vmatprep.subr.bf16.mxu0 0
      %1709 = vmatpush1.bf16.msra.mxu0 0
      %1710 = vmatprep.subr.bf16.mxu0 0
      %1711 = vmatpush1.bf16.msra.mxu0 0
      %1712 = vmatprep.subr.bf16.mxu0 0
      %1713 = vmatpush1.bf16.msra.mxu0 0
      %1714 = vmatprep.subr.bf16.mxu0 0
      %1715 = vmatpush1.bf16.msra.mxu0 0
      %1716 = vmatprep.subr.bf16.mxu0 0
      %1717 = vmatpush1.bf16.msra.mxu0 0
      %1718 = vmatprep.subr.bf16.mxu0 0
      %1719 = vmatpush1.bf16.msra.mxu0 0
      %1720 = vmatprep.subr.bf16.mxu0 0
      %1721 = vmatpush1.bf16.msra.mxu0 0
      %1722 = vmatprep.subr.bf16.mxu0 0
      %1723 = vmatpush1.bf16.msra.mxu0 0
      %1724 = vmatprep.subr.bf16.mxu0 0
      %1725 = vmatpush1.bf16.msra.mxu0 0
      %1726 = vmatprep.subr.bf16.mxu0 0
      %1727 = vmatpush1.bf16.msra.mxu0 0
      %1728 = vmatprep.subr.bf16.mxu0 0
      %1729 = vmatpush1.bf16.msra.mxu0 0
      %1730 = vmatprep.mubr.bf16.mxu0 0
      %1731 = vmatmul.mubr.bf16.gmra.mrb[0].mxu0 %v1651
      %v1732 = vpop.f32.mrb[0].mxu0
      %v1733 = vadd.f32 %v1642, %v1732
      %v1734 = vpop.f32.mrb[0].mxu0
      %v1735 = vpop.f32.mrb[0].mxu0
      %v1736 = vadd.f32 %v1642, %v1735
      %v1737 = vpop.f32.mrb[0].mxu0
      %1738 = vmatprep.mubr.bf16.mxu0 0
      %1739 = vmatmul.mubr.bf16.gmra.mrb[0].mxu0 %v1654
      %v1740 = vpop.f32.mrb[0].mxu0
      %v1741 = vadd.f32 %v1642, %v1740
      %v1742 = vpop.f32.mrb[0].mxu0
      %v1743 = vpop.f32.mrb[0].mxu0
      %v1744 = vadd.f32 %v1642, %v1743
      %v1745 = vpop.f32.mrb[0].mxu0
      %1746 = vmatprep.mubr.bf16.mxu0 0
      %1747 = vmatmul.mubr.bf16.gmra.mrb[0].mxu0 %v1657
      %v1748 = vpop.f32.mrb[0].mxu0
      %v1749 = vadd.f32 %v1642, %v1748
      %v1750 = vpop.f32.mrb[0].mxu0
      %v1751 = vpop.f32.mrb[0].mxu0
      %v1752 = vadd.f32 %v1642, %v1751
      %v1753 = vpop.f32.mrb[0].mxu0
      %1754 = vmatprep.mubr.bf16.mxu0 0
      %1755 = vmatmul.mubr.bf16.gmra.mrb[0].mxu0 %v1660
      %v1756 = vpop.f32.mrb[0].mxu0
      %v1757 = vadd.f32 %v1642, %v1756
      %v1758 = vpop.f32.mrb[0].mxu0
      %v1759 = vpop.f32.mrb[0].mxu0
      %v1760 = vadd.f32 %v1642, %v1759
      %v1761 = vpop.f32.mrb[0].mxu0
      %1762 = vmatprep.mubr.bf16.mxu0 0
      %1763 = vmatmul.mubr.bf16.gmra.mrb[0].mxu0 %v1663
      %v1764 = vpop.f32.mrb[0].mxu0
      %v1765 = vadd.f32 %v1642, %v1764
      %v1766 = vpop.f32.mrb[0].mxu0
      %v1767 = vpop.f32.mrb[0].mxu0
      %v1768 = vadd.f32 %v1642, %v1767
      %v1769 = vpop.f32.mrb[0].mxu0
      %1770 = vmatprep.mubr.bf16.mxu0 0
      %1771 = vmatmul.mubr.bf16.gmra.mrb[0].mxu0 %v1666
      %v1772 = vpop.f32.mrb[0].mxu0
      %v1773 = vadd.f32 %v1642, %v1772
      %v1774 = vpop.f32.mrb[0].mxu0
      %v1775 = vpop.f32.mrb[0].mxu0
      %v1776 = vadd.f32 %v1642, %v1775
      %v1777 = vpop.f32.mrb[0].mxu0
      %1778 = vmatprep.mubr.bf16.mxu0 0
      %1779 = vmatmul.mubr.bf16.gmra.mrb[0].mxu0 %v1669
      %v1780 = vpop.f32.mrb[0].mxu0
      %v1781 = vadd.f32 %v1642, %v1780
      %v1782 = vpop.f32.mrb[0].mxu0
      %v1783 = vpop.f32.mrb[0].mxu0
      %v1784 = vadd.f32 %v1642, %v1783
      %v1785 = vpop.f32.mrb[0].mxu0
      %1786 = vmatprep.mubr.bf16.mxu0 0
      %1787 = vmatmul.mubr.bf16.gmra.mrb[0].mxu0 %v1672
      %v1788 = vpop.f32.mrb[0].mxu0
      %v1789 = vadd.f32 %v1642, %v1788
      %v1790 = vpop.f32.mrb[0].mxu0
      %v1791 = vpop.f32.mrb[0].mxu0
      %v1792 = vadd.f32 %v1642, %v1791
      %v1793 = vpop.f32.mrb[0].mxu0
      %1794 = vmatprep.mubr.bf16.mxu0 0
      %1795 = vmatmul.mubr.bf16.gmra.mrb[0].mxu0 %v1675
      %v1796 = vpop.f32.mrb[0].mxu0
      %v1797 = vadd.f32 %v1642, %v1796
      %v1798 = vpop.f32.mrb[0].mxu0
      %v1799 = vpop.f32.mrb[0].mxu0
      %v1800 = vadd.f32 %v1642, %v1799
      %v1801 = vpop.f32.mrb[0].mxu0
      %1802 = vmatprep.mubr.bf16.mxu0 0
      %1803 = vmatmul.mubr.bf16.gmra.mrb[0].mxu0 %v1678
      %v1804 = vpop.f32.mrb[0].mxu0
      %v1805 = vadd.f32 %v1642, %v1804
      %v1806 = vpop.f32.mrb[0].mxu0
      %v1807 = vpop.f32.mrb[0].mxu0
      %v1808 = vadd.f32 %v1642, %v1807
      %v1809 = vpop.f32.mrb[0].mxu0
      %1810 = vmatprep.mubr.bf16.mxu0 0
      %1811 = vmatmul.mubr.bf16.gmra.mrb[0].mxu0 %v1681
      %v1812 = vpop.f32.mrb[0].mxu0
      %v1813 = vadd.f32 %v1642, %v1812
      %v1814 = vpop.f32.mrb[0].mxu0
      %v1815 = vpop.f32.mrb[0].mxu0
      %v1816 = vadd.f32 %v1642, %v1815
      %v1817 = vpop.f32.mrb[0].mxu0
      %1818 = vmatprep.mubr.bf16.mxu0 0
      %1819 = vmatmul.mubr.bf16.gmra.mrb[0].mxu0 %v1684
      %v1820 = vpop.f32.mrb[0].mxu0
      %v1821 = vadd.f32 %v1642, %v1820
      %v1822 = vpop.f32.mrb[0].mxu0
      %v1823 = vpop.f32.mrb[0].mxu0
      %v1824 = vadd.f32 %v1642, %v1823
      %v1825 = vpop.f32.mrb[0].mxu0
      %1826 = vmatprep.mubr.bf16.mxu0 0
      %1827 = vmatmul.mubr.bf16.gmra.mrb[0].mxu0 %v1687
      %v1828 = vpop.f32.mrb[0].mxu0
      %v1829 = vadd.f32 %v1642, %v1828
      %v1830 = vpop.f32.mrb[0].mxu0
      %v1831 = vpop.f32.mrb[0].mxu0
      %v1832 = vadd.f32 %v1642, %v1831
      %v1833 = vpop.f32.mrb[0].mxu0
      %1834 = vmatprep.mubr.bf16.mxu0 0
      %1835 = vmatmul.mubr.bf16.gmra.mrb[0].mxu0 %v1690
      %v1836 = vpop.f32.mrb[0].mxu0
      %v1837 = vadd.f32 %v1642, %v1836
      %v1838 = vpop.f32.mrb[0].mxu0
      %v1839 = vpop.f32.mrb[0].mxu0
      %v1840 = vadd.f32 %v1642, %v1839
      %v1841 = vpop.f32.mrb[0].mxu0
      %1842 = vmatprep.mubr.bf16.mxu0 0
      %1843 = vmatmul.mubr.bf16.gmra.mrb[0].mxu0 %v1693
      %v1844 = vpop.f32.mrb[0].mxu0
      %v1845 = vadd.f32 %v1642, %v1844
      %v1846 = vpop.f32.mrb[0].mxu0
      %v1847 = vpop.f32.mrb[0].mxu0
      %v1848 = vadd.f32 %v1642, %v1847
      %v1849 = vpop.f32.mrb[0].mxu0
      %1850 = vmatprep.mubr.bf16.mxu0 0
      %1851 = vmatmul.mubr.bf16.gmra.mrb[0].mxu0 %v1696
      %v1852 = vpop.f32.mrb[0].mxu0
      %v1853 = vadd.f32 %v1642, %v1852
      %v1854 = vpop.f32.mrb[0].mxu0
      %v1855 = vpop.f32.mrb[0].mxu0
      %v1856 = vadd.f32 %v1642, %v1855
      %v1857 = vpop.f32.mrb[0].mxu0
      %1858 = vdwg.mxu0
      %v1859 = vmax.f32 %v1733, 0.0
      %v1860 = vmax.f32 %v1736, 0.0
      %v1861 = vmax.f32 %v1741, 0.0
      %v1862 = vmax.f32 %v1744, 0.0
      %v1863 = vmax.f32 %v1749, 0.0
      %v1864 = vmax.f32 %v1752, 0.0
      %v1865 = vmax.f32 %v1757, 0.0
      %v1866 = vmax.f32 %v1760, 0.0
      %v1867 = vmax.f32 %v1765, 0.0
      %v1868 = vmax.f32 %v1768, 0.0
      %v1869 = vmax.f32 %v1773, 0.0
      %v1870 = vmax.f32 %v1776, 0.0
      %v1871 = vmax.f32 %v1781, 0.0
      %v1872 = vmax.f32 %v1784, 0.0
      %v1873 = vmax.f32 %v1789, 0.0
      %v1874 = vmax.f32 %v1792, 0.0
      %v1875 = vmax.f32 %v1797, 0.0
      %v1876 = vmax.f32 %v1800, 0.0
      %v1877 = vmax.f32 %v1805, 0.0
      %v1878 = vmax.f32 %v1808, 0.0
      %v1879 = vmax.f32 %v1813, 0.0
      %v1880 = vmax.f32 %v1816, 0.0
      %v1881 = vmax.f32 %v1821, 0.0
      %v1882 = vmax.f32 %v1824, 0.0
      %v1883 = vmax.f32 %v1829, 0.0
      %v1884 = vmax.f32 %v1832, 0.0
      %v1885 = vmax.f32 %v1837, 0.0
      %v1886 = vmax.f32 %v1840, 0.0
      %v1887 = vmax.f32 %v1845, 0.0
      %v1888 = vmax.f32 %v1848, 0.0
      %v1889 = vmax.f32 %v1853, 0.0
      %v1890 = vmax.f32 %v1856, 0.0
      %v1891 = vpack.c.bf16 %v1860, %v1859
      %v1892 = vpack.c.bf16 %v1862, %v1861
      %v1893 = vpack.c.bf16 %v1864, %v1863
      %v1894 = vpack.c.bf16 %v1866, %v1865
      %v1895 = vpack.c.bf16 %v1868, %v1867
      %v1896 = vpack.c.bf16 %v1870, %v1869
      %v1897 = vpack.c.bf16 %v1872, %v1871
      %v1898 = vpack.c.bf16 %v1874, %v1873
      %v1899 = vpack.c.bf16 %v1876, %v1875
      %v1900 = vpack.c.bf16 %v1878, %v1877
      %v1901 = vpack.c.bf16 %v1880, %v1879
      %v1902 = vpack.c.bf16 %v1882, %v1881
      %v1903 = vpack.c.bf16 %v1884, %v1883
      %v1904 = vpack.c.bf16 %v1886, %v1885
      %v1905 = vpack.c.bf16 %v1888, %v1887
      %v1906 = vpack.c.bf16 %v1890, %v1889
      %v1907 = vld [vmem:[%s10] sm:$0xf]
      %v1908 = vld [vmem:[%s10 + $0x4] sm:$0xf]
      %v1909 = vld [vmem:[%s11] sm:$0x1]
      %v1911 = vlaneseq
      %v1912 = vshrl.u32 %v1911, 7
      %v1913 = vsub.s32 0, %v1912
      %v1914 = vrot.slane %v1909, %v1913
      %v1918 = vunpack.c.l.b16 %v1907
      %v1919 = vunpack.c.l.b16 %v1908
      %v1920 = vpack.c.b16 %v1919, %v1918
      %v1923 = vsel %vm623, %v1891, 0
      %v1926 = vsel %vm623, %v1892, 0
      %v1929 = vsel %vm623, %v1893, 0
      %v1932 = vsel %vm623, %v1894, 0
      %v1935 = vsel %vm623, %v1895, 0
      %v1938 = vsel %vm623, %v1896, 0
      %v1941 = vsel %vm623, %v1897, 0
      %v1944 = vsel %vm623, %v1898, 0
      %v1947 = vsel %vm623, %v1899, 0
      %v1950 = vsel %vm623, %v1900, 0
      %v1953 = vsel %vm623, %v1901, 0
      %v1956 = vsel %vm623, %v1902, 0
      %v1959 = vsel %vm623, %v1903, 0
      %v1962 = vsel %vm623, %v1904, 0
      %v1965 = vsel %vm623, %v1905, 0
      %v1968 = vsel %vm623, %v1906, 0
      %1970 = vmatprep.subr.bf16.mxu0 0
      %1971 = vmatpush1.bf16.msra.mxu0 %v1920
      %1972 = vmatprep.subr.bf16.mxu0 0
      %1973 = vmatpush1.bf16.msra.mxu0 0
      %1974 = vmatprep.subr.bf16.mxu0 0
      %1975 = vmatpush1.bf16.msra.mxu0 0
      %1976 = vmatprep.subr.bf16.mxu0 0
      %1977 = vmatpush1.bf16.msra.mxu0 0
      %1978 = vmatprep.subr.bf16.mxu0 0
      %1979 = vmatpush1.bf16.msra.mxu0 0
      %1980 = vmatprep.subr.bf16.mxu0 0
      %1981 = vmatpush1.bf16.msra.mxu0 0
      %1982 = vmatprep.subr.bf16.mxu0 0
      %1983 = vmatpush1.bf16.msra.mxu0 0
      %1984 = vmatprep.subr.bf16.mxu0 0
      %1985 = vmatpush1.bf16.msra.mxu0 0
      %1986 = vmatprep.subr.bf16.mxu0 0
      %1987 = vmatpush1.bf16.msra.mxu0 0
      %1988 = vmatprep.subr.bf16.mxu0 0
      %1989 = vmatpush1.bf16.msra.mxu0 0
      %1990 = vmatprep.subr.bf16.mxu0 0
      %1991 = vmatpush1.bf16.msra.mxu0 0
      %1992 = vmatprep.subr.bf16.mxu0 0
      %1993 = vmatpush1.bf16.msra.mxu0 0
      %1994 = vmatprep.subr.bf16.mxu0 0
      %1995 = vmatpush1.bf16.msra.mxu0 0
      %1996 = vmatprep.subr.bf16.mxu0 0
      %1997 = vmatpush1.bf16.msra.mxu0 0
      %1998 = vmatprep.subr.bf16.mxu0 0
      %1999 = vmatpush1.bf16.msra.mxu0 0
      %2000 = vmatprep.subr.bf16.mxu0 0
      %2001 = vmatpush1.bf16.msra.mxu0 0
      %2002 = vmatprep.mubr.bf16.mxu0 0
      %2003 = vmatmul.mubr.bf16.gmra.mrb[0].mxu0 %v1923
      %v2004 = vpop.f32.mrb[0].mxu0
      %v2005 = vadd.f32 %v1914, %v2004
      %v2006 = vpop.f32.mrb[0].mxu0
      %v2007 = vpop.f32.mrb[0].mxu0
      %v2008 = vadd.f32 %v1914, %v2007
      %v2009 = vpop.f32.mrb[0].mxu0
      %2010 = vmatprep.mubr.bf16.mxu0 0
      %2011 = vmatmul.mubr.bf16.gmra.mrb[0].mxu0 %v1926
      %v2012 = vpop.f32.mrb[0].mxu0
      %v2013 = vadd.f32 %v1914, %v2012
      %v2014 = vpop.f32.mrb[0].mxu0
      %v2015 = vpop.f32.mrb[0].mxu0
      %v2016 = vadd.f32 %v1914, %v2015
      %v2017 = vpop.f32.mrb[0].mxu0
      %2018 = vmatprep.mubr.bf16.mxu0 0
      %2019 = vmatmul.mubr.bf16.gmra.mrb[0].mxu0 %v1929
      %v2020 = vpop.f32.mrb[0].mxu0
      %v2021 = vadd.f32 %v1914, %v2020
      %v2022 = vpop.f32.mrb[0].mxu0
      %v2023 = vpop.f32.mrb[0].mxu0
      %v2024 = vadd.f32 %v1914, %v2023
      %v2025 = vpop.f32.mrb[0].mxu0
      %2026 = vmatprep.mubr.bf16.mxu0 0
      %2027 = vmatmul.mubr.bf16.gmra.mrb[0].mxu0 %v1932
      %v2028 = vpop.f32.mrb[0].mxu0
      %v2029 = vadd.f32 %v1914, %v2028
      %v2030 = vpop.f32.mrb[0].mxu0
      %v2031 = vpop.f32.mrb[0].mxu0
      %v2032 = vadd.f32 %v1914, %v2031
      %v2033 = vpop.f32.mrb[0].mxu0
      %2034 = vmatprep.mubr.bf16.mxu0 0
      %2035 = vmatmul.mubr.bf16.gmra.mrb[0].mxu0 %v1935
      %v2036 = vpop.f32.mrb[0].mxu0
      %v2037 = vadd.f32 %v1914, %v2036
      %v2038 = vpop.f32.mrb[0].mxu0
      %v2039 = vpop.f32.mrb[0].mxu0
      %v2040 = vadd.f32 %v1914, %v2039
      %v2041 = vpop.f32.mrb[0].mxu0
      %2042 = vmatprep.mubr.bf16.mxu0 0
      %2043 = vmatmul.mubr.bf16.gmra.mrb[0].mxu0 %v1938
      %v2044 = vpop.f32.mrb[0].mxu0
      %v2045 = vadd.f32 %v1914, %v2044
      %v2046 = vpop.f32.mrb[0].mxu0
      %v2047 = vpop.f32.mrb[0].mxu0
      %v2048 = vadd.f32 %v1914, %v2047
      %v2049 = vpop.f32.mrb[0].mxu0
      %2050 = vmatprep.mubr.bf16.mxu0 0
      %2051 = vmatmul.mubr.bf16.gmra.mrb[0].mxu0 %v1941
      %v2052 = vpop.f32.mrb[0].mxu0
      %v2053 = vadd.f32 %v1914, %v2052
      %v2054 = vpop.f32.mrb[0].mxu0
      %v2055 = vpop.f32.mrb[0].mxu0
      %v2056 = vadd.f32 %v1914, %v2055
      %v2057 = vpop.f32.mrb[0].mxu0
      %2058 = vmatprep.mubr.bf16.mxu0 0
      %2059 = vmatmul.mubr.bf16.gmra.mrb[0].mxu0 %v1944
      %v2060 = vpop.f32.mrb[0].mxu0
      %v2061 = vadd.f32 %v1914, %v2060
      %v2062 = vpop.f32.mrb[0].mxu0
      %v2063 = vpop.f32.mrb[0].mxu0
      %v2064 = vadd.f32 %v1914, %v2063
      %v2065 = vpop.f32.mrb[0].mxu0
      %2066 = vmatprep.mubr.bf16.mxu0 0
      %2067 = vmatmul.mubr.bf16.gmra.mrb[0].mxu0 %v1947
      %v2068 = vpop.f32.mrb[0].mxu0
      %v2069 = vadd.f32 %v1914, %v2068
      %v2070 = vpop.f32.mrb[0].mxu0
      %v2071 = vpop.f32.mrb[0].mxu0
      %v2072 = vadd.f32 %v1914, %v2071
      %v2073 = vpop.f32.mrb[0].mxu0
      %2074 = vmatprep.mubr.bf16.mxu0 0
      %2075 = vmatmul.mubr.bf16.gmra.mrb[0].mxu0 %v1950
      %v2076 = vpop.f32.mrb[0].mxu0
      %v2077 = vadd.f32 %v1914, %v2076
      %v2078 = vpop.f32.mrb[0].mxu0
      %v2079 = vpop.f32.mrb[0].mxu0
      %v2080 = vadd.f32 %v1914, %v2079
      %v2081 = vpop.f32.mrb[0].mxu0
      %2082 = vmatprep.mubr.bf16.mxu0 0
      %2083 = vmatmul.mubr.bf16.gmra.mrb[0].mxu0 %v1953
      %v2084 = vpop.f32.mrb[0].mxu0
      %v2085 = vadd.f32 %v1914, %v2084
      %v2086 = vpop.f32.mrb[0].mxu0
      %v2087 = vpop.f32.mrb[0].mxu0
      %v2088 = vadd.f32 %v1914, %v2087
      %v2089 = vpop.f32.mrb[0].mxu0
      %2090 = vmatprep.mubr.bf16.mxu0 0
      %2091 = vmatmul.mubr.bf16.gmra.mrb[0].mxu0 %v1956
      %v2092 = vpop.f32.mrb[0].mxu0
      %v2093 = vadd.f32 %v1914, %v2092
      %v2094 = vpop.f32.mrb[0].mxu0
      %v2095 = vpop.f32.mrb[0].mxu0
      %v2096 = vadd.f32 %v1914, %v2095
      %v2097 = vpop.f32.mrb[0].mxu0
      %2098 = vmatprep.mubr.bf16.mxu0 0
      %2099 = vmatmul.mubr.bf16.gmra.mrb[0].mxu0 %v1959
      %v2100 = vpop.f32.mrb[0].mxu0
      %v2101 = vadd.f32 %v1914, %v2100
      %v2102 = vpop.f32.mrb[0].mxu0
      %v2103 = vpop.f32.mrb[0].mxu0
      %v2104 = vadd.f32 %v1914, %v2103
      %v2105 = vpop.f32.mrb[0].mxu0
      %2106 = vmatprep.mubr.bf16.mxu0 0
      %2107 = vmatmul.mubr.bf16.gmra.mrb[0].mxu0 %v1962
      %v2108 = vpop.f32.mrb[0].mxu0
      %v2109 = vadd.f32 %v1914, %v2108
      %v2110 = vpop.f32.mrb[0].mxu0
      %v2111 = vpop.f32.mrb[0].mxu0
      %v2112 = vadd.f32 %v1914, %v2111
      %v2113 = vpop.f32.mrb[0].mxu0
      %2114 = vmatprep.mubr.bf16.mxu0 0
      %2115 = vmatmul.mubr.bf16.gmra.mrb[0].mxu0 %v1965
      %v2116 = vpop.f32.mrb[0].mxu0
      %v2117 = vadd.f32 %v1914, %v2116
      %v2118 = vpop.f32.mrb[0].mxu0
      %v2119 = vpop.f32.mrb[0].mxu0
      %v2120 = vadd.f32 %v1914, %v2119
      %v2121 = vpop.f32.mrb[0].mxu0
      %2122 = vmatprep.mubr.bf16.mxu0 0
      %2123 = vmatmul.mubr.bf16.gmra.mrb[0].mxu0 %v1968
      %v2124 = vpop.f32.mrb[0].mxu0
      %v2125 = vadd.f32 %v1914, %v2124
      %v2126 = vpop.f32.mrb[0].mxu0
      %v2127 = vpop.f32.mrb[0].mxu0
      %v2128 = vadd.f32 %v1914, %v2127
      %v2129 = vpop.f32.mrb[0].mxu0
      %2130 = vdwg.mxu0
      %v2131 = vmax.f32 %v2005, 0.0
      %v2132 = vmax.f32 %v2008, 0.0
      %v2133 = vmax.f32 %v2013, 0.0
      %v2134 = vmax.f32 %v2016, 0.0
      %v2135 = vmax.f32 %v2021, 0.0
      %v2136 = vmax.f32 %v2024, 0.0
      %v2137 = vmax.f32 %v2029, 0.0
      %v2138 = vmax.f32 %v2032, 0.0
      %v2139 = vmax.f32 %v2037, 0.0
      %v2140 = vmax.f32 %v2040, 0.0
      %v2141 = vmax.f32 %v2045, 0.0
      %v2142 = vmax.f32 %v2048, 0.0
      %v2143 = vmax.f32 %v2053, 0.0
      %v2144 = vmax.f32 %v2056, 0.0
      %v2145 = vmax.f32 %v2061, 0.0
      %v2146 = vmax.f32 %v2064, 0.0
      %v2147 = vmax.f32 %v2069, 0.0
      %v2148 = vmax.f32 %v2072, 0.0
      %v2149 = vmax.f32 %v2077, 0.0
      %v2150 = vmax.f32 %v2080, 0.0
      %v2151 = vmax.f32 %v2085, 0.0
      %v2152 = vmax.f32 %v2088, 0.0
      %v2153 = vmax.f32 %v2093, 0.0
      %v2154 = vmax.f32 %v2096, 0.0
      %v2155 = vmax.f32 %v2101, 0.0
      %v2156 = vmax.f32 %v2104, 0.0
      %v2157 = vmax.f32 %v2109, 0.0
      %v2158 = vmax.f32 %v2112, 0.0
      %v2159 = vmax.f32 %v2117, 0.0
      %v2160 = vmax.f32 %v2120, 0.0
      %v2161 = vmax.f32 %v2125, 0.0
      %v2162 = vmax.f32 %v2128, 0.0
      %s2163 = smul.u32 %s28, 16
      %v2164 = vlaneseq
      %v2165 = vshrl.u32 %v2164, 7
      %v2166 = vadd.s32 %v2165, 8
      %v2167 = vstv %s2163
      %v2168 = vadd.s32 %v2167, 1
      %v2169 = vadd.s32 %v2167, 2
      %v2170 = vadd.s32 %v2167, 3
      %v2171 = vadd.s32 %v2167, 4
      %v2172 = vadd.s32 %v2167, 5
      %v2173 = vadd.s32 %v2167, 6
      %v2174 = vadd.s32 %v2167, 7
      %v2175 = vadd.s32 %v2167, 8
      %v2176 = vadd.s32 %v2167, 9
      %v2177 = vadd.s32 %v2167, 10
      %v2178 = vadd.s32 %v2167, 11
      %v2179 = vadd.s32 %v2167, 12
      %v2180 = vadd.s32 %v2167, 13
      %v2181 = vadd.s32 %v2167, 14
      %v2182 = vadd.s32 %v2167, 15
      %v2183 = vmul.u32 %v2167, 64
      %v2184 = vmul.u32 %v2168, 64
      %v2185 = vmul.u32 %v2169, 64
      %v2186 = vmul.u32 %v2170, 64
      %v2187 = vmul.u32 %v2171, 64
      %v2188 = vmul.u32 %v2172, 64
      %v2189 = vmul.u32 %v2173, 64
      %v2190 = vmul.u32 %v2174, 64
      %v2191 = vmul.u32 %v2175, 64
      %v2192 = vmul.u32 %v2176, 64
      %v2193 = vmul.u32 %v2177, 64
      %v2194 = vmul.u32 %v2178, 64
      %v2195 = vmul.u32 %v2179, 64
      %v2196 = vmul.u32 %v2180, 64
      %v2197 = vmul.u32 %v2181, 64
      %v2198 = vmul.u32 %v2182, 64
      %v2199 = vmul.u32 %v2165, 2
      %v2200 = vmul.u32 %v2166, 2
      %v2201 = vadd.s32 %v2183, %v2199
      %v2202 = vadd.s32 %v2183, %v2200
      %v2203 = vadd.s32 %v2184, %v2199
      %v2204 = vadd.s32 %v2184, %v2200
      %v2205 = vadd.s32 %v2185, %v2199
      %v2206 = vadd.s32 %v2185, %v2200
      %v2207 = vadd.s32 %v2186, %v2199
      %v2208 = vadd.s32 %v2186, %v2200
      %v2209 = vadd.s32 %v2187, %v2199
      %v2210 = vadd.s32 %v2187, %v2200
      %v2211 = vadd.s32 %v2188, %v2199
      %v2212 = vadd.s32 %v2188, %v2200
      %v2213 = vadd.s32 %v2189, %v2199
      %v2214 = vadd.s32 %v2189, %v2200
      %v2215 = vadd.s32 %v2190, %v2199
      %v2216 = vadd.s32 %v2190, %v2200
      %v2217 = vadd.s32 %v2191, %v2199
      %v2218 = vadd.s32 %v2191, %v2200
      %v2219 = vadd.s32 %v2192, %v2199
      %v2220 = vadd.s32 %v2192, %v2200
      %v2221 = vadd.s32 %v2193, %v2199
      %v2222 = vadd.s32 %v2193, %v2200
      %v2223 = vadd.s32 %v2194, %v2199
      %v2224 = vadd.s32 %v2194, %v2200
      %v2225 = vadd.s32 %v2195, %v2199
      %v2226 = vadd.s32 %v2195, %v2200
      %v2227 = vadd.s32 %v2196, %v2199
      %v2228 = vadd.s32 %v2196, %v2200
      %v2229 = vadd.s32 %v2197, %v2199
      %v2230 = vadd.s32 %v2197, %v2200
      %v2231 = vadd.s32 %v2198, %v2199
      %v2232 = vadd.s32 %v2198, %v2200
      %v2233 = vld [vmem:[%s3] sm:$0x1]
      %v2234 = vlaneseq
      %v2235 = vshrl.u32 %v2234, 7
      %v2236 = vsub.s32 0, %v2235
      %v2237 = vrot.slane %v2233, %v2236
      %v2238 = vadd.s32 %v2201, %v2237
      %v2239 = vadd.s32 %v2202, %v2237
      %v2240 = vadd.s32 %v2203, %v2237
      %v2241 = vadd.s32 %v2204, %v2237
      %v2242 = vadd.s32 %v2205, %v2237
      %v2243 = vadd.s32 %v2206, %v2237
      %v2244 = vadd.s32 %v2207, %v2237
      %v2245 = vadd.s32 %v2208, %v2237
      %v2246 = vadd.s32 %v2209, %v2237
      %v2247 = vadd.s32 %v2210, %v2237
      %v2248 = vadd.s32 %v2211, %v2237
      %v2249 = vadd.s32 %v2212, %v2237
      %v2250 = vadd.s32 %v2213, %v2237
      %v2251 = vadd.s32 %v2214, %v2237
      %v2252 = vadd.s32 %v2215, %v2237
      %v2253 = vadd.s32 %v2216, %v2237
      %v2254 = vadd.s32 %v2217, %v2237
      %v2255 = vadd.s32 %v2218, %v2237
      %v2256 = vadd.s32 %v2219, %v2237
      %v2257 = vadd.s32 %v2220, %v2237
      %v2258 = vadd.s32 %v2221, %v2237
      %v2259 = vadd.s32 %v2222, %v2237
      %v2260 = vadd.s32 %v2223, %v2237
      %v2261 = vadd.s32 %v2224, %v2237
      %v2262 = vadd.s32 %v2225, %v2237
      %v2263 = vadd.s32 %v2226, %v2237
      %v2264 = vadd.s32 %v2227, %v2237
      %v2265 = vadd.s32 %v2228, %v2237
      %v2266 = vadd.s32 %v2229, %v2237
      %v2267 = vadd.s32 %v2230, %v2237
      %v2268 = vadd.s32 %v2231, %v2237
      %v2269 = vadd.s32 %v2232, %v2237
      %2302 = vrot.lane.b32.xlu0 %v707, 8
      %v2303 = vpop.permute.xlu0 %2302
      %2304 = vrot.lane.b32.xlu0 %v710, 8
      %v2305 = vpop.permute.xlu0 %2304
      %2306 = vrot.lane.b32.xlu0 %v715, 8
      %v2307 = vpop.permute.xlu0 %2306
      %2308 = vrot.lane.b32.xlu0 %v718, 8
      %v2309 = vpop.permute.xlu0 %2308
      %2310 = vrot.lane.b32.xlu0 %v723, 8
      %v2311 = vpop.permute.xlu0 %2310
      %2312 = vrot.lane.b32.xlu0 %v726, 8
      %v2313 = vpop.permute.xlu0 %2312
      %2314 = vrot.lane.b32.xlu0 %v731, 8
      %v2315 = vpop.permute.xlu0 %2314
      %2316 = vrot.lane.b32.xlu0 %v734, 8
      %v2317 = vpop.permute.xlu0 %2316
      %2318 = vrot.lane.b32.xlu0 %v739, 8
      %v2319 = vpop.permute.xlu0 %2318
      %2320 = vrot.lane.b32.xlu0 %v742, 8
      %v2321 = vpop.permute.xlu0 %2320
      %2322 = vrot.lane.b32.xlu0 %v747, 8
      %v2323 = vpop.permute.xlu0 %2322
      %2324 = vrot.lane.b32.xlu0 %v750, 8
      %v2325 = vpop.permute.xlu0 %2324
      %2326 = vrot.lane.b32.xlu0 %v755, 8
      %v2327 = vpop.permute.xlu0 %2326
      %2328 = vrot.lane.b32.xlu0 %v758, 8
      %v2329 = vpop.permute.xlu0 %2328
      %2330 = vrot.lane.b32.xlu0 %v763, 8
      %v2331 = vpop.permute.xlu0 %2330
      %2332 = vrot.lane.b32.xlu0 %v766, 8
      %v2333 = vpop.permute.xlu0 %2332
      %2334 = vrot.lane.b32.xlu0 %v771, 8
      %v2335 = vpop.permute.xlu0 %2334
      %2336 = vrot.lane.b32.xlu0 %v774, 8
      %v2337 = vpop.permute.xlu0 %2336
      %2338 = vrot.lane.b32.xlu0 %v779, 8
      %v2339 = vpop.permute.xlu0 %2338
      %2340 = vrot.lane.b32.xlu0 %v782, 8
      %v2341 = vpop.permute.xlu0 %2340
      %2342 = vrot.lane.b32.xlu0 %v787, 8
      %v2343 = vpop.permute.xlu0 %2342
      %2344 = vrot.lane.b32.xlu0 %v790, 8
      %v2345 = vpop.permute.xlu0 %2344
      %2346 = vrot.lane.b32.xlu0 %v795, 8
      %v2347 = vpop.permute.xlu0 %2346
      %2348 = vrot.lane.b32.xlu0 %v798, 8
      %v2349 = vpop.permute.xlu0 %2348
      %2350 = vrot.lane.b32.xlu0 %v803, 8
      %v2351 = vpop.permute.xlu0 %2350
      %2352 = vrot.lane.b32.xlu0 %v806, 8
      %v2353 = vpop.permute.xlu0 %2352
      %2354 = vrot.lane.b32.xlu0 %v811, 8
      %v2355 = vpop.permute.xlu0 %2354
      %2356 = vrot.lane.b32.xlu0 %v814, 8
      %v2357 = vpop.permute.xlu0 %2356
      %2358 = vrot.lane.b32.xlu0 %v819, 8
      %v2359 = vpop.permute.xlu0 %2358
      %2360 = vrot.lane.b32.xlu0 %v822, 8
      %v2361 = vpop.permute.xlu0 %2360
      %2362 = vrot.lane.b32.xlu0 %v827, 8
      %v2363 = vpop.permute.xlu0 %2362
      %2364 = vrot.lane.b32.xlu0 %v830, 8
      %v2365 = vpop.permute.xlu0 %2364
      %2398 = vrot.lane.b32.xlu0 %v707, 16
      %v2399 = vpop.permute.xlu0 %2398
      %2400 = vrot.lane.b32.xlu0 %v710, 16
      %v2401 = vpop.permute.xlu0 %2400
      %2402 = vrot.lane.b32.xlu0 %v715, 16
      %v2403 = vpop.permute.xlu0 %2402
      %2404 = vrot.lane.b32.xlu0 %v718, 16
      %v2405 = vpop.permute.xlu0 %2404
      %2406 = vrot.lane.b32.xlu0 %v723, 16
      %v2407 = vpop.permute.xlu0 %2406
      %2408 = vrot.lane.b32.xlu0 %v726, 16
      %v2409 = vpop.permute.xlu0 %2408
      %2410 = vrot.lane.b32.xlu0 %v731, 16
      %v2411 = vpop.permute.xlu0 %2410
      %2412 = vrot.lane.b32.xlu0 %v734, 16
      %v2413 = vpop.permute.xlu0 %2412
      %2414 = vrot.lane.b32.xlu0 %v739, 16
      %v2415 = vpop.permute.xlu0 %2414
      %2416 = vrot.lane.b32.xlu0 %v742, 16
      %v2417 = vpop.permute.xlu0 %2416
      %2418 = vrot.lane.b32.xlu0 %v747, 16
      %v2419 = vpop.permute.xlu0 %2418
      %2420 = vrot.lane.b32.xlu0 %v750, 16
      %v2421 = vpop.permute.xlu0 %2420
      %2422 = vrot.lane.b32.xlu0 %v755, 16
      %v2423 = vpop.permute.xlu0 %2422
      %2424 = vrot.lane.b32.xlu0 %v758, 16
      %v2425 = vpop.permute.xlu0 %2424
      %2426 = vrot.lane.b32.xlu0 %v763, 16
      %v2427 = vpop.permute.xlu0 %2426
      %2428 = vrot.lane.b32.xlu0 %v766, 16
      %v2429 = vpop.permute.xlu0 %2428
      %2430 = vrot.lane.b32.xlu0 %v771, 16
      %v2431 = vpop.permute.xlu0 %2430
      %2432 = vrot.lane.b32.xlu0 %v774, 16
      %v2433 = vpop.permute.xlu0 %2432
      %2434 = vrot.lane.b32.xlu0 %v779, 16
      %v2435 = vpop.permute.xlu0 %2434
      %2436 = vrot.lane.b32.xlu0 %v782, 16
      %v2437 = vpop.permute.xlu0 %2436
      %2438 = vrot.lane.b32.xlu0 %v787, 16
      %v2439 = vpop.permute.xlu0 %2438
      %2440 = vrot.lane.b32.xlu0 %v790, 16
      %v2441 = vpop.permute.xlu0 %2440
      %2442 = vrot.lane.b32.xlu0 %v795, 16
      %v2443 = vpop.permute.xlu0 %2442
      %2444 = vrot.lane.b32.xlu0 %v798, 16
      %v2445 = vpop.permute.xlu0 %2444
      %2446 = vrot.lane.b32.xlu0 %v803, 16
      %v2447 = vpop.permute.xlu0 %2446
      %2448 = vrot.lane.b32.xlu0 %v806, 16
      %v2449 = vpop.permute.xlu0 %2448
      %2450 = vrot.lane.b32.xlu0 %v811, 16
      %v2451 = vpop.permute.xlu0 %2450
      %2452 = vrot.lane.b32.xlu0 %v814, 16
      %v2453 = vpop.permute.xlu0 %2452
      %2454 = vrot.lane.b32.xlu0 %v819, 16
      %v2455 = vpop.permute.xlu0 %2454
      %2456 = vrot.lane.b32.xlu0 %v822, 16
      %v2457 = vpop.permute.xlu0 %2456
      %2458 = vrot.lane.b32.xlu0 %v827, 16
      %v2459 = vpop.permute.xlu0 %2458
      %2460 = vrot.lane.b32.xlu0 %v830, 16
      %v2461 = vpop.permute.xlu0 %2460
      %2494 = vrot.lane.b32.xlu0 %v707, 24
      %v2495 = vpop.permute.xlu0 %2494
      %2496 = vrot.lane.b32.xlu0 %v710, 24
      %v2497 = vpop.permute.xlu0 %2496
      %2498 = vrot.lane.b32.xlu0 %v715, 24
      %v2499 = vpop.permute.xlu0 %2498
      %2500 = vrot.lane.b32.xlu0 %v718, 24
      %v2501 = vpop.permute.xlu0 %2500
      %2502 = vrot.lane.b32.xlu0 %v723, 24
      %v2503 = vpop.permute.xlu0 %2502
      %2504 = vrot.lane.b32.xlu0 %v726, 24
      %v2505 = vpop.permute.xlu0 %2504
      %2506 = vrot.lane.b32.xlu0 %v731, 24
      %v2507 = vpop.permute.xlu0 %2506
      %2508 = vrot.lane.b32.xlu0 %v734, 24
      %v2509 = vpop.permute.xlu0 %2508
      %2510 = vrot.lane.b32.xlu0 %v739, 24
      %v2511 = vpop.permute.xlu0 %2510
      %2512 = vrot.lane.b32.xlu0 %v742, 24
      %v2513 = vpop.permute.xlu0 %2512
      %2514 = vrot.lane.b32.xlu0 %v747, 24
      %v2515 = vpop.permute.xlu0 %2514
      %2516 = vrot.lane.b32.xlu0 %v750, 24
      %v2517 = vpop.permute.xlu0 %2516
      %2518 = vrot.lane.b32.xlu0 %v755, 24
      %v2519 = vpop.permute.xlu0 %2518
      %2520 = vrot.lane.b32.xlu0 %v758, 24
      %v2521 = vpop.permute.xlu0 %2520
      %2522 = vrot.lane.b32.xlu0 %v763, 24
      %v2523 = vpop.permute.xlu0 %2522
      %2524 = vrot.lane.b32.xlu0 %v766, 24
      %v2525 = vpop.permute.xlu0 %2524
      %2526 = vrot.lane.b32.xlu0 %v771, 24
      %v2527 = vpop.permute.xlu0 %2526
      %2528 = vrot.lane.b32.xlu0 %v774, 24
      %v2529 = vpop.permute.xlu0 %2528
      %2530 = vrot.lane.b32.xlu0 %v779, 24
      %v2531 = vpop.permute.xlu0 %2530
      %2532 = vrot.lane.b32.xlu0 %v782, 24
      %v2533 = vpop.permute.xlu0 %2532
      %2534 = vrot.lane.b32.xlu0 %v787, 24
      %v2535 = vpop.permute.xlu0 %2534
      %2536 = vrot.lane.b32.xlu0 %v790, 24
      %v2537 = vpop.permute.xlu0 %2536
      %2538 = vrot.lane.b32.xlu0 %v795, 24
      %v2539 = vpop.permute.xlu0 %2538
      %2540 = vrot.lane.b32.xlu0 %v798, 24
      %v2541 = vpop.permute.xlu0 %2540
      %2542 = vrot.lane.b32.xlu0 %v803, 24
      %v2543 = vpop.permute.xlu0 %2542
      %2544 = vrot.lane.b32.xlu0 %v806, 24
      %v2545 = vpop.permute.xlu0 %2544
      %2546 = vrot.lane.b32.xlu0 %v811, 24
      %v2547 = vpop.permute.xlu0 %2546
      %2548 = vrot.lane.b32.xlu0 %v814, 24
      %v2549 = vpop.permute.xlu0 %2548
      %2550 = vrot.lane.b32.xlu0 %v819, 24
      %v2551 = vpop.permute.xlu0 %2550
      %2552 = vrot.lane.b32.xlu0 %v822, 24
      %v2553 = vpop.permute.xlu0 %2552
      %2554 = vrot.lane.b32.xlu0 %v827, 24
      %v2555 = vpop.permute.xlu0 %2554
      %2556 = vrot.lane.b32.xlu0 %v830, 24
      %v2557 = vpop.permute.xlu0 %2556
      %v2590 = vsel %vm1553, %v707, %v2303
      %v2591 = vsel %vm1553, %v710, %v2305
      %v2592 = vsel %vm1553, %v715, %v2307
      %v2593 = vsel %vm1553, %v718, %v2309
      %v2594 = vsel %vm1553, %v723, %v2311
      %v2595 = vsel %vm1553, %v726, %v2313
      %v2596 = vsel %vm1553, %v731, %v2315
      %v2597 = vsel %vm1553, %v734, %v2317
      %v2598 = vsel %vm1553, %v739, %v2319
      %v2599 = vsel %vm1553, %v742, %v2321
      %v2600 = vsel %vm1553, %v747, %v2323
      %v2601 = vsel %vm1553, %v750, %v2325
      %v2602 = vsel %vm1553, %v755, %v2327
      %v2603 = vsel %vm1553, %v758, %v2329
      %v2604 = vsel %vm1553, %v763, %v2331
      %v2605 = vsel %vm1553, %v766, %v2333
      %v2606 = vsel %vm1553, %v771, %v2335
      %v2607 = vsel %vm1553, %v774, %v2337
      %v2608 = vsel %vm1553, %v779, %v2339
      %v2609 = vsel %vm1553, %v782, %v2341
      %v2610 = vsel %vm1553, %v787, %v2343
      %v2611 = vsel %vm1553, %v790, %v2345
      %v2612 = vsel %vm1553, %v795, %v2347
      %v2613 = vsel %vm1553, %v798, %v2349
      %v2614 = vsel %vm1553, %v803, %v2351
      %v2615 = vsel %vm1553, %v806, %v2353
      %v2616 = vsel %vm1553, %v811, %v2355
      %v2617 = vsel %vm1553, %v814, %v2357
      %v2618 = vsel %vm1553, %v819, %v2359
      %v2619 = vsel %vm1553, %v822, %v2361
      %v2620 = vsel %vm1553, %v827, %v2363
      %v2621 = vsel %vm1553, %v830, %v2365
      %v2622 = vsel %vm623, %v2590, %v2399
      %v2623 = vsel %vm623, %v2591, %v2401
      %v2624 = vsel %vm623, %v2592, %v2403
      %v2625 = vsel %vm623, %v2593, %v2405
      %v2626 = vsel %vm623, %v2594, %v2407
      %v2627 = vsel %vm623, %v2595, %v2409
      %v2628 = vsel %vm623, %v2596, %v2411
      %v2629 = vsel %vm623, %v2597, %v2413
      %v2630 = vsel %vm623, %v2598, %v2415
      %v2631 = vsel %vm623, %v2599, %v2417
      %v2632 = vsel %vm623, %v2600, %v2419
      %v2633 = vsel %vm623, %v2601, %v2421
      %v2634 = vsel %vm623, %v2602, %v2423
      %v2635 = vsel %vm623, %v2603, %v2425
      %v2636 = vsel %vm623, %v2604, %v2427
      %v2637 = vsel %vm623, %v2605, %v2429
      %v2638 = vsel %vm623, %v2606, %v2431
      %v2639 = vsel %vm623, %v2607, %v2433
      %v2640 = vsel %vm623, %v2608, %v2435
      %v2641 = vsel %vm623, %v2609, %v2437
      %v2642 = vsel %vm623, %v2610, %v2439
      %v2643 = vsel %vm623, %v2611, %v2441
      %v2644 = vsel %vm623, %v2612, %v2443
      %v2645 = vsel %vm623, %v2613, %v2445
      %v2646 = vsel %vm623, %v2614, %v2447
      %v2647 = vsel %vm623, %v2615, %v2449
      %v2648 = vsel %vm623, %v2616, %v2451
      %v2649 = vsel %vm623, %v2617, %v2453
      %v2650 = vsel %vm623, %v2618, %v2455
      %v2651 = vsel %vm623, %v2619, %v2457
      %v2652 = vsel %vm623, %v2620, %v2459
      %v2653 = vsel %vm623, %v2621, %v2461
      %vm2654 = vcmask 195584
      %v2655 = vsel %vm2654, %v2622, %v2495
      %v2656 = vsel %vm2654, %v2623, %v2497
      %v2657 = vsel %vm2654, %v2624, %v2499
      %v2658 = vsel %vm2654, %v2625, %v2501
      %v2659 = vsel %vm2654, %v2626, %v2503
      %v2660 = vsel %vm2654, %v2627, %v2505
      %v2661 = vsel %vm2654, %v2628, %v2507
      %v2662 = vsel %vm2654, %v2629, %v2509
      %v2663 = vsel %vm2654, %v2630, %v2511
      %v2664 = vsel %vm2654, %v2631, %v2513
      %v2665 = vsel %vm2654, %v2632, %v2515
      %v2666 = vsel %vm2654, %v2633, %v2517
      %v2667 = vsel %vm2654, %v2634, %v2519
      %v2668 = vsel %vm2654, %v2635, %v2521
      %v2669 = vsel %vm2654, %v2636, %v2523
      %v2670 = vsel %vm2654, %v2637, %v2525
      %v2671 = vsel %vm2654, %v2638, %v2527
      %v2672 = vsel %vm2654, %v2639, %v2529
      %v2673 = vsel %vm2654, %v2640, %v2531
      %v2674 = vsel %vm2654, %v2641, %v2533
      %v2675 = vsel %vm2654, %v2642, %v2535
      %v2676 = vsel %vm2654, %v2643, %v2537
      %v2677 = vsel %vm2654, %v2644, %v2539
      %v2678 = vsel %vm2654, %v2645, %v2541
      %v2679 = vsel %vm2654, %v2646, %v2543
      %v2680 = vsel %vm2654, %v2647, %v2545
      %v2681 = vsel %vm2654, %v2648, %v2547
      %v2682 = vsel %vm2654, %v2649, %v2549
      %v2683 = vsel %vm2654, %v2650, %v2551
      %v2684 = vsel %vm2654, %v2651, %v2553
      %v2685 = vsel %vm2654, %v2652, %v2555
      %v2686 = vsel %vm2654, %v2653, %v2557
      %v2687 = vld [vmem:[%s546] sm:$0xff]
      %v2688 = vld [vmem:[%s546 + $0x8] sm:$0xff]
      %v2689 = vld [vmem:[%s546 + $0x10] sm:$0xff]
      %v2690 = vld [vmem:[%s546 + $0x18] sm:$0xff]
      %v2691 = vld [vmem:[%s546 + $0x20] sm:$0xff]
      %v2692 = vld [vmem:[%s546 + $0x28] sm:$0xff]
      %v2693 = vld [vmem:[%s546 + $0x30] sm:$0xff]
      %v2694 = vld [vmem:[%s546 + $0x38] sm:$0xff]
      %v2695 = vld [vmem:[%s546 + $0x40] sm:$0xff]
      %v2696 = vld [vmem:[%s546 + $0x48] sm:$0xff]
      %v2697 = vld [vmem:[%s546 + $0x50] sm:$0xff]
      %v2698 = vld [vmem:[%s546 + $0x58] sm:$0xff]
      %v2699 = vld [vmem:[%s546 + $0x60] sm:$0xff]
      %v2700 = vld [vmem:[%s546 + $0x68] sm:$0xff]
      %v2701 = vld [vmem:[%s546 + $0x70] sm:$0xff]
      %v2702 = vld [vmem:[%s546 + $0x78] sm:$0xff]
      %v2703 = vld [vmem:[%s546 + $0x80] sm:$0xff]
      %v2704 = vld [vmem:[%s546 + $0x88] sm:$0xff]
      %v2705 = vld [vmem:[%s546 + $0x90] sm:$0xff]
      %v2706 = vld [vmem:[%s546 + $0x98] sm:$0xff]
      %v2707 = vld [vmem:[%s546 + $0xa0] sm:$0xff]
      %v2708 = vld [vmem:[%s546 + $0xa8] sm:$0xff]
      %v2709 = vld [vmem:[%s546 + $0xb0] sm:$0xff]
      %v2710 = vld [vmem:[%s546 + $0xb8] sm:$0xff]
      %v2711 = vld [vmem:[%s546 + $0xc0] sm:$0xff]
      %v2712 = vld [vmem:[%s546 + $0xc8] sm:$0xff]
      %v2713 = vld [vmem:[%s546 + $0xd0] sm:$0xff]
      %v2714 = vld [vmem:[%s546 + $0xd8] sm:$0xff]
      %v2715 = vld [vmem:[%s546 + $0xe0] sm:$0xff]
      %v2716 = vld [vmem:[%s546 + $0xe8] sm:$0xff]
      %v2717 = vld [vmem:[%s546 + $0xf0] sm:$0xff]
      %v2718 = vld [vmem:[%s546 + $0xf8] sm:$0xff]
      %2719 = vrot.lane.b32.xlu0 %v2687, 8
      %v2720 = vpop.permute.xlu0 %2719
      %2721 = vrot.lane.b32.xlu0 %v2688, 8
      %v2722 = vpop.permute.xlu0 %2721
      %2723 = vrot.lane.b32.xlu0 %v2689, 8
      %v2724 = vpop.permute.xlu0 %2723
      %2725 = vrot.lane.b32.xlu0 %v2690, 8
      %v2726 = vpop.permute.xlu0 %2725
      %2727 = vrot.lane.b32.xlu0 %v2691, 8
      %v2728 = vpop.permute.xlu0 %2727
      %2729 = vrot.lane.b32.xlu0 %v2692, 8
      %v2730 = vpop.permute.xlu0 %2729
      %2731 = vrot.lane.b32.xlu0 %v2693, 8
      %v2732 = vpop.permute.xlu0 %2731
      %2733 = vrot.lane.b32.xlu0 %v2694, 8
      %v2734 = vpop.permute.xlu0 %2733
      %2735 = vrot.lane.b32.xlu0 %v2695, 8
      %v2736 = vpop.permute.xlu0 %2735
      %2737 = vrot.lane.b32.xlu0 %v2696, 8
      %v2738 = vpop.permute.xlu0 %2737
      %2739 = vrot.lane.b32.xlu0 %v2697, 8
      %v2740 = vpop.permute.xlu0 %2739
      %2741 = vrot.lane.b32.xlu0 %v2698, 8
      %v2742 = vpop.permute.xlu0 %2741
      %2743 = vrot.lane.b32.xlu0 %v2699, 8
      %v2744 = vpop.permute.xlu0 %2743
      %2745 = vrot.lane.b32.xlu0 %v2700, 8
      %v2746 = vpop.permute.xlu0 %2745
      %2747 = vrot.lane.b32.xlu0 %v2701, 8
      %v2748 = vpop.permute.xlu0 %2747
      %2749 = vrot.lane.b32.xlu0 %v2702, 8
      %v2750 = vpop.permute.xlu0 %2749
      %2751 = vrot.lane.b32.xlu0 %v2703, 8
      %v2752 = vpop.permute.xlu0 %2751
      %2753 = vrot.lane.b32.xlu0 %v2704, 8
      %v2754 = vpop.permute.xlu0 %2753
      %2755 = vrot.lane.b32.xlu0 %v2705, 8
      %v2756 = vpop.permute.xlu0 %2755
      %2757 = vrot.lane.b32.xlu0 %v2706, 8
      %v2758 = vpop.permute.xlu0 %2757
      %2759 = vrot.lane.b32.xlu0 %v2707, 8
      %v2760 = vpop.permute.xlu0 %2759
      %2761 = vrot.lane.b32.xlu0 %v2708, 8
      %v2762 = vpop.permute.xlu0 %2761
      %2763 = vrot.lane.b32.xlu0 %v2709, 8
      %v2764 = vpop.permute.xlu0 %2763
      %2765 = vrot.lane.b32.xlu0 %v2710, 8
      %v2766 = vpop.permute.xlu0 %2765
      %2767 = vrot.lane.b32.xlu0 %v2711, 8
      %v2768 = vpop.permute.xlu0 %2767
      %2769 = vrot.lane.b32.xlu0 %v2712, 8
      %v2770 = vpop.permute.xlu0 %2769
      %2771 = vrot.lane.b32.xlu0 %v2713, 8
      %v2772 = vpop.permute.xlu0 %2771
      %2773 = vrot.lane.b32.xlu0 %v2714, 8
      %v2774 = vpop.permute.xlu0 %2773
      %2775 = vrot.lane.b32.xlu0 %v2715, 8
      %v2776 = vpop.permute.xlu0 %2775
      %2777 = vrot.lane.b32.xlu0 %v2716, 8
      %v2778 = vpop.permute.xlu0 %2777
      %2779 = vrot.lane.b32.xlu0 %v2717, 8
      %v2780 = vpop.permute.xlu0 %2779
      %2781 = vrot.lane.b32.xlu0 %v2718, 8
      %v2782 = vpop.permute.xlu0 %2781
      %2783 = vrot.lane.b32.xlu0 %v2687, 16
      %v2784 = vpop.permute.xlu0 %2783
      %2785 = vrot.lane.b32.xlu0 %v2688, 16
      %v2786 = vpop.permute.xlu0 %2785
      %2787 = vrot.lane.b32.xlu0 %v2689, 16
      %v2788 = vpop.permute.xlu0 %2787
      %2789 = vrot.lane.b32.xlu0 %v2690, 16
      %v2790 = vpop.permute.xlu0 %2789
      %2791 = vrot.lane.b32.xlu0 %v2691, 16
      %v2792 = vpop.permute.xlu0 %2791
      %2793 = vrot.lane.b32.xlu0 %v2692, 16
      %v2794 = vpop.permute.xlu0 %2793
      %2795 = vrot.lane.b32.xlu0 %v2693, 16
      %v2796 = vpop.permute.xlu0 %2795
      %2797 = vrot.lane.b32.xlu0 %v2694, 16
      %v2798 = vpop.permute.xlu0 %2797
      %2799 = vrot.lane.b32.xlu0 %v2695, 16
      %v2800 = vpop.permute.xlu0 %2799
      %2801 = vrot.lane.b32.xlu0 %v2696, 16
      %v2802 = vpop.permute.xlu0 %2801
      %2803 = vrot.lane.b32.xlu0 %v2697, 16
      %v2804 = vpop.permute.xlu0 %2803
      %2805 = vrot.lane.b32.xlu0 %v2698, 16
      %v2806 = vpop.permute.xlu0 %2805
      %2807 = vrot.lane.b32.xlu0 %v2699, 16
      %v2808 = vpop.permute.xlu0 %2807
      %2809 = vrot.lane.b32.xlu0 %v2700, 16
      %v2810 = vpop.permute.xlu0 %2809
      %2811 = vrot.lane.b32.xlu0 %v2701, 16
      %v2812 = vpop.permute.xlu0 %2811
      %2813 = vrot.lane.b32.xlu0 %v2702, 16
      %v2814 = vpop.permute.xlu0 %2813
      %2815 = vrot.lane.b32.xlu0 %v2703, 16
      %v2816 = vpop.permute.xlu0 %2815
      %2817 = vrot.lane.b32.xlu0 %v2704, 16
      %v2818 = vpop.permute.xlu0 %2817
      %2819 = vrot.lane.b32.xlu0 %v2705, 16
      %v2820 = vpop.permute.xlu0 %2819
      %2821 = vrot.lane.b32.xlu0 %v2706, 16
      %v2822 = vpop.permute.xlu0 %2821
      %2823 = vrot.lane.b32.xlu0 %v2707, 16
      %v2824 = vpop.permute.xlu0 %2823
      %2825 = vrot.lane.b32.xlu0 %v2708, 16
      %v2826 = vpop.permute.xlu0 %2825
      %2827 = vrot.lane.b32.xlu0 %v2709, 16
      %v2828 = vpop.permute.xlu0 %2827
      %2829 = vrot.lane.b32.xlu0 %v2710, 16
      %v2830 = vpop.permute.xlu0 %2829
      %2831 = vrot.lane.b32.xlu0 %v2711, 16
      %v2832 = vpop.permute.xlu0 %2831
      %2833 = vrot.lane.b32.xlu0 %v2712, 16
      %v2834 = vpop.permute.xlu0 %2833
      %2835 = vrot.lane.b32.xlu0 %v2713, 16
      %v2836 = vpop.permute.xlu0 %2835
      %2837 = vrot.lane.b32.xlu0 %v2714, 16
      %v2838 = vpop.permute.xlu0 %2837
      %2839 = vrot.lane.b32.xlu0 %v2715, 16
      %v2840 = vpop.permute.xlu0 %2839
      %2841 = vrot.lane.b32.xlu0 %v2716, 16
      %v2842 = vpop.permute.xlu0 %2841
      %2843 = vrot.lane.b32.xlu0 %v2717, 16
      %v2844 = vpop.permute.xlu0 %2843
      %2845 = vrot.lane.b32.xlu0 %v2718, 16
      %v2846 = vpop.permute.xlu0 %2845
      %2847 = vrot.lane.b32.xlu0 %v2687, 24
      %v2848 = vpop.permute.xlu0 %2847
      %2849 = vrot.lane.b32.xlu0 %v2688, 24
      %v2850 = vpop.permute.xlu0 %2849
      %2851 = vrot.lane.b32.xlu0 %v2689, 24
      %v2852 = vpop.permute.xlu0 %2851
      %2853 = vrot.lane.b32.xlu0 %v2690, 24
      %v2854 = vpop.permute.xlu0 %2853
      %2855 = vrot.lane.b32.xlu0 %v2691, 24
      %v2856 = vpop.permute.xlu0 %2855
      %2857 = vrot.lane.b32.xlu0 %v2692, 24
      %v2858 = vpop.permute.xlu0 %2857
      %2859 = vrot.lane.b32.xlu0 %v2693, 24
      %v2860 = vpop.permute.xlu0 %2859
      %2861 = vrot.lane.b32.xlu0 %v2694, 24
      %v2862 = vpop.permute.xlu0 %2861
      %2863 = vrot.lane.b32.xlu0 %v2695, 24
      %v2864 = vpop.permute.xlu0 %2863
      %2865 = vrot.lane.b32.xlu0 %v2696, 24
      %v2866 = vpop.permute.xlu0 %2865
      %2867 = vrot.lane.b32.xlu0 %v2697, 24
      %v2868 = vpop.permute.xlu0 %2867
      %2869 = vrot.lane.b32.xlu0 %v2698, 24
      %v2870 = vpop.permute.xlu0 %2869
      %2871 = vrot.lane.b32.xlu0 %v2699, 24
      %v2872 = vpop.permute.xlu0 %2871
      %2873 = vrot.lane.b32.xlu0 %v2700, 24
      %v2874 = vpop.permute.xlu0 %2873
      %2875 = vrot.lane.b32.xlu0 %v2701, 24
      %v2876 = vpop.permute.xlu0 %2875
      %2877 = vrot.lane.b32.xlu0 %v2702, 24
      %v2878 = vpop.permute.xlu0 %2877
      %2879 = vrot.lane.b32.xlu0 %v2703, 24
      %v2880 = vpop.permute.xlu0 %2879
      %2881 = vrot.lane.b32.xlu0 %v2704, 24
      %v2882 = vpop.permute.xlu0 %2881
      %2883 = vrot.lane.b32.xlu0 %v2705, 24
      %v2884 = vpop.permute.xlu0 %2883
      %2885 = vrot.lane.b32.xlu0 %v2706, 24
      %v2886 = vpop.permute.xlu0 %2885
      %2887 = vrot.lane.b32.xlu0 %v2707, 24
      %v2888 = vpop.permute.xlu0 %2887
      %2889 = vrot.lane.b32.xlu0 %v2708, 24
      %v2890 = vpop.permute.xlu0 %2889
      %2891 = vrot.lane.b32.xlu0 %v2709, 24
      %v2892 = vpop.permute.xlu0 %2891
      %2893 = vrot.lane.b32.xlu0 %v2710, 24
      %v2894 = vpop.permute.xlu0 %2893
      %2895 = vrot.lane.b32.xlu0 %v2711, 24
      %v2896 = vpop.permute.xlu0 %2895
      %2897 = vrot.lane.b32.xlu0 %v2712, 24
      %v2898 = vpop.permute.xlu0 %2897
      %2899 = vrot.lane.b32.xlu0 %v2713, 24
      %v2900 = vpop.permute.xlu0 %2899
      %2901 = vrot.lane.b32.xlu0 %v2714, 24
      %v2902 = vpop.permute.xlu0 %2901
      %2903 = vrot.lane.b32.xlu0 %v2715, 24
      %v2904 = vpop.permute.xlu0 %2903
      %2905 = vrot.lane.b32.xlu0 %v2716, 24
      %v2906 = vpop.permute.xlu0 %2905
      %2907 = vrot.lane.b32.xlu0 %v2717, 24
      %v2908 = vpop.permute.xlu0 %2907
      %2909 = vrot.lane.b32.xlu0 %v2718, 24
      %v2910 = vpop.permute.xlu0 %2909
      %v2911 = vsel %vm1553, %v2687, %v2720
      %v2912 = vsel %vm1553, %v2688, %v2722
      %v2913 = vsel %vm1553, %v2689, %v2724
      %v2914 = vsel %vm1553, %v2690, %v2726
      %v2915 = vsel %vm1553, %v2691, %v2728
      %v2916 = vsel %vm1553, %v2692, %v2730
      %v2917 = vsel %vm1553, %v2693, %v2732
      %v2918 = vsel %vm1553, %v2694, %v2734
      %v2919 = vsel %vm1553, %v2695, %v2736
      %v2920 = vsel %vm1553, %v2696, %v2738
      %v2921 = vsel %vm1553, %v2697, %v2740
      %v2922 = vsel %vm1553, %v2698, %v2742
      %v2923 = vsel %vm1553, %v2699, %v2744
      %v2924 = vsel %vm1553, %v2700, %v2746
      %v2925 = vsel %vm1553, %v2701, %v2748
      %v2926 = vsel %vm1553, %v2702, %v2750
      %v2927 = vsel %vm1553, %v2703, %v2752
      %v2928 = vsel %vm1553, %v2704, %v2754
      %v2929 = vsel %vm1553, %v2705, %v2756
      %v2930 = vsel %vm1553, %v2706, %v2758
      %v2931 = vsel %vm1553, %v2707, %v2760
      %v2932 = vsel %vm1553, %v2708, %v2762
      %v2933 = vsel %vm1553, %v2709, %v2764
      %v2934 = vsel %vm1553, %v2710, %v2766
      %v2935 = vsel %vm1553, %v2711, %v2768
      %v2936 = vsel %vm1553, %v2712, %v2770
      %v2937 = vsel %vm1553, %v2713, %v2772
      %v2938 = vsel %vm1553, %v2714, %v2774
      %v2939 = vsel %vm1553, %v2715, %v2776
      %v2940 = vsel %vm1553, %v2716, %v2778
      %v2941 = vsel %vm1553, %v2717, %v2780
      %v2942 = vsel %vm1553, %v2718, %v2782
      %v2943 = vsel %vm623, %v2911, %v2784
      %v2944 = vsel %vm623, %v2912, %v2786
      %v2945 = vsel %vm623, %v2913, %v2788
      %v2946 = vsel %vm623, %v2914, %v2790
      %v2947 = vsel %vm623, %v2915, %v2792
      %v2948 = vsel %vm623, %v2916, %v2794
      %v2949 = vsel %vm623, %v2917, %v2796
      %v2950 = vsel %vm623, %v2918, %v2798
      %v2951 = vsel %vm623, %v2919, %v2800
      %v2952 = vsel %vm623, %v2920, %v2802
      %v2953 = vsel %vm623, %v2921, %v2804
      %v2954 = vsel %vm623, %v2922, %v2806
      %v2955 = vsel %vm623, %v2923, %v2808
      %v2956 = vsel %vm623, %v2924, %v2810
      %v2957 = vsel %vm623, %v2925, %v2812
      %v2958 = vsel %vm623, %v2926, %v2814
      %v2959 = vsel %vm623, %v2927, %v2816
      %v2960 = vsel %vm623, %v2928, %v2818
      %v2961 = vsel %vm623, %v2929, %v2820
      %v2962 = vsel %vm623, %v2930, %v2822
      %v2963 = vsel %vm623, %v2931, %v2824
      %v2964 = vsel %vm623, %v2932, %v2826
      %v2965 = vsel %vm623, %v2933, %v2828
      %v2966 = vsel %vm623, %v2934, %v2830
      %v2967 = vsel %vm623, %v2935, %v2832
      %v2968 = vsel %vm623, %v2936, %v2834
      %v2969 = vsel %vm623, %v2937, %v2836
      %v2970 = vsel %vm623, %v2938, %v2838
      %v2971 = vsel %vm623, %v2939, %v2840
      %v2972 = vsel %vm623, %v2940, %v2842
      %v2973 = vsel %vm623, %v2941, %v2844
      %v2974 = vsel %vm623, %v2942, %v2846
      %v2975 = vsel %vm2654, %v2943, %v2848
      %v2976 = vsel %vm2654, %v2944, %v2850
      %v2977 = vsel %vm2654, %v2945, %v2852
      %v2978 = vsel %vm2654, %v2946, %v2854
      %v2979 = vsel %vm2654, %v2947, %v2856
      %v2980 = vsel %vm2654, %v2948, %v2858
      %v2981 = vsel %vm2654, %v2949, %v2860
      %v2982 = vsel %vm2654, %v2950, %v2862
      %v2983 = vsel %vm2654, %v2951, %v2864
      %v2984 = vsel %vm2654, %v2952, %v2866
      %v2985 = vsel %vm2654, %v2953, %v2868
      %v2986 = vsel %vm2654, %v2954, %v2870
      %v2987 = vsel %vm2654, %v2955, %v2872
      %v2988 = vsel %vm2654, %v2956, %v2874
      %v2989 = vsel %vm2654, %v2957, %v2876
      %v2990 = vsel %vm2654, %v2958, %v2878
      %v2991 = vsel %vm2654, %v2959, %v2880
      %v2992 = vsel %vm2654, %v2960, %v2882
      %v2993 = vsel %vm2654, %v2961, %v2884
      %v2994 = vsel %vm2654, %v2962, %v2886
      %v2995 = vsel %vm2654, %v2963, %v2888
      %v2996 = vsel %vm2654, %v2964, %v2890
      %v2997 = vsel %vm2654, %v2965, %v2892
      %v2998 = vsel %vm2654, %v2966, %v2894
      %v2999 = vsel %vm2654, %v2967, %v2896
      %v3000 = vsel %vm2654, %v2968, %v2898
      %v3001 = vsel %vm2654, %v2969, %v2900
      %v3002 = vsel %vm2654, %v2970, %v2902
      %v3003 = vsel %vm2654, %v2971, %v2904
      %v3004 = vsel %vm2654, %v2972, %v2906
      %v3005 = vsel %vm2654, %v2973, %v2908
      %v3006 = vsel %vm2654, %v2974, %v2910
      %vm3007 = vcmp.eq.s32.totalorder %v2975, %v2238
      %vm3008 = vcmp.eq.s32.totalorder %v2976, %v2239
      %vm3009 = vcmp.eq.s32.totalorder %v2977, %v2240
      %vm3010 = vcmp.eq.s32.totalorder %v2978, %v2241
      %vm3011 = vcmp.eq.s32.totalorder %v2979, %v2242
      %vm3012 = vcmp.eq.s32.totalorder %v2980, %v2243
      %vm3013 = vcmp.eq.s32.totalorder %v2981, %v2244
      %vm3014 = vcmp.eq.s32.totalorder %v2982, %v2245
      %vm3015 = vcmp.eq.s32.totalorder %v2983, %v2246
      %vm3016 = vcmp.eq.s32.totalorder %v2984, %v2247
      %vm3017 = vcmp.eq.s32.totalorder %v2985, %v2248
      %vm3018 = vcmp.eq.s32.totalorder %v2986, %v2249
      %vm3019 = vcmp.eq.s32.totalorder %v2987, %v2250
      %vm3020 = vcmp.eq.s32.totalorder %v2988, %v2251
      %vm3021 = vcmp.eq.s32.totalorder %v2989, %v2252
      %vm3022 = vcmp.eq.s32.totalorder %v2990, %v2253
      %vm3023 = vcmp.eq.s32.totalorder %v2991, %v2254
      %vm3024 = vcmp.eq.s32.totalorder %v2992, %v2255
      %vm3025 = vcmp.eq.s32.totalorder %v2993, %v2256
      %vm3026 = vcmp.eq.s32.totalorder %v2994, %v2257
      %vm3027 = vcmp.eq.s32.totalorder %v2995, %v2258
      %vm3028 = vcmp.eq.s32.totalorder %v2996, %v2259
      %vm3029 = vcmp.eq.s32.totalorder %v2997, %v2260
      %vm3030 = vcmp.eq.s32.totalorder %v2998, %v2261
      %vm3031 = vcmp.eq.s32.totalorder %v2999, %v2262
      %vm3032 = vcmp.eq.s32.totalorder %v3000, %v2263
      %vm3033 = vcmp.eq.s32.totalorder %v3001, %v2264
      %vm3034 = vcmp.eq.s32.totalorder %v3002, %v2265
      %vm3035 = vcmp.eq.s32.totalorder %v3003, %v2266
      %vm3036 = vcmp.eq.s32.totalorder %v3004, %v2267
      %vm3037 = vcmp.eq.s32.totalorder %v3005, %v2268
      %vm3038 = vcmp.eq.s32.totalorder %v3006, %v2269
      %v3039 = vsel %vm3007, %v2655, 0.0
      %v3040 = vsel %vm3008, %v2656, 0.0
      %v3041 = vsel %vm3009, %v2657, 0.0
      %v3042 = vsel %vm3010, %v2658, 0.0
      %v3043 = vsel %vm3011, %v2659, 0.0
      %v3044 = vsel %vm3012, %v2660, 0.0
      %v3045 = vsel %vm3013, %v2661, 0.0
      %v3046 = vsel %vm3014, %v2662, 0.0
      %v3047 = vsel %vm3015, %v2663, 0.0
      %v3048 = vsel %vm3016, %v2664, 0.0
      %v3049 = vsel %vm3017, %v2665, 0.0
      %v3050 = vsel %vm3018, %v2666, 0.0
      %v3051 = vsel %vm3019, %v2667, 0.0
      %v3052 = vsel %vm3020, %v2668, 0.0
      %v3053 = vsel %vm3021, %v2669, 0.0
      %v3054 = vsel %vm3022, %v2670, 0.0
      %v3055 = vsel %vm3023, %v2671, 0.0
      %v3056 = vsel %vm3024, %v2672, 0.0
      %v3057 = vsel %vm3025, %v2673, 0.0
      %v3058 = vsel %vm3026, %v2674, 0.0
      %v3059 = vsel %vm3027, %v2675, 0.0
      %v3060 = vsel %vm3028, %v2676, 0.0
      %v3061 = vsel %vm3029, %v2677, 0.0
      %v3062 = vsel %vm3030, %v2678, 0.0
      %v3063 = vsel %vm3031, %v2679, 0.0
      %v3064 = vsel %vm3032, %v2680, 0.0
      %v3065 = vsel %vm3033, %v2681, 0.0
      %v3066 = vsel %vm3034, %v2682, 0.0
      %v3067 = vsel %vm3035, %v2683, 0.0
      %v3068 = vsel %vm3036, %v2684, 0.0
      %v3069 = vsel %vm3037, %v2685, 0.0
      %v3070 = vsel %vm3038, %v2686, 0.0
      %v3071 = vadd.f32 %v2131, %v3039
      %v3072 = vadd.f32 %v2132, %v3040
      %v3073 = vadd.f32 %v2133, %v3041
      %v3074 = vadd.f32 %v2134, %v3042
      %v3075 = vadd.f32 %v2135, %v3043
      %v3076 = vadd.f32 %v2136, %v3044
      %v3077 = vadd.f32 %v2137, %v3045
      %v3078 = vadd.f32 %v2138, %v3046
      %v3079 = vadd.f32 %v2139, %v3047
      %v3080 = vadd.f32 %v2140, %v3048
      %v3081 = vadd.f32 %v2141, %v3049
      %v3082 = vadd.f32 %v2142, %v3050
      %v3083 = vadd.f32 %v2143, %v3051
      %v3084 = vadd.f32 %v2144, %v3052
      %v3085 = vadd.f32 %v2145, %v3053
      %v3086 = vadd.f32 %v2146, %v3054
      %v3087 = vadd.f32 %v2147, %v3055
      %v3088 = vadd.f32 %v2148, %v3056
      %v3089 = vadd.f32 %v2149, %v3057
      %v3090 = vadd.f32 %v2150, %v3058
      %v3091 = vadd.f32 %v2151, %v3059
      %v3092 = vadd.f32 %v2152, %v3060
      %v3093 = vadd.f32 %v2153, %v3061
      %v3094 = vadd.f32 %v2154, %v3062
      %v3095 = vadd.f32 %v2155, %v3063
      %v3096 = vadd.f32 %v2156, %v3064
      %v3097 = vadd.f32 %v2157, %v3065
      %v3098 = vadd.f32 %v2158, %v3066
      %v3099 = vadd.f32 %v2159, %v3067
      %v3100 = vadd.f32 %v2160, %v3068
      %v3101 = vadd.f32 %v2161, %v3069
      %v3102 = vadd.f32 %v2162, %v3070
      %v3103 = vmax.f32 %v3071, 0.0
      %v3104 = vmax.f32 %v3072, 0.0
      %v3105 = vmax.f32 %v3073, 0.0
      %v3106 = vmax.f32 %v3074, 0.0
      %v3107 = vmax.f32 %v3075, 0.0
      %v3108 = vmax.f32 %v3076, 0.0
      %v3109 = vmax.f32 %v3077, 0.0
      %v3110 = vmax.f32 %v3078, 0.0
      %v3111 = vmax.f32 %v3079, 0.0
      %v3112 = vmax.f32 %v3080, 0.0
      %v3113 = vmax.f32 %v3081, 0.0
      %v3114 = vmax.f32 %v3082, 0.0
      %v3115 = vmax.f32 %v3083, 0.0
      %v3116 = vmax.f32 %v3084, 0.0
      %v3117 = vmax.f32 %v3085, 0.0
      %v3118 = vmax.f32 %v3086, 0.0
      %v3119 = vmax.f32 %v3087, 0.0
      %v3120 = vmax.f32 %v3088, 0.0
      %v3121 = vmax.f32 %v3089, 0.0
      %v3122 = vmax.f32 %v3090, 0.0
      %v3123 = vmax.f32 %v3091, 0.0
      %v3124 = vmax.f32 %v3092, 0.0
      %v3125 = vmax.f32 %v3093, 0.0
      %v3126 = vmax.f32 %v3094, 0.0
      %v3127 = vmax.f32 %v3095, 0.0
      %v3128 = vmax.f32 %v3096, 0.0
      %v3129 = vmax.f32 %v3097, 0.0
      %v3130 = vmax.f32 %v3098, 0.0
      %v3131 = vmax.f32 %v3099, 0.0
      %v3132 = vmax.f32 %v3100, 0.0
      %v3133 = vmax.f32 %v3101, 0.0
      %v3134 = vmax.f32 %v3102, 0.0
      %vm3135 = vcmask 261120
      %3136 = vst.msk [vmem:[%s557] sm:$0xff] %vm3135, %v3103
      %3137 = vst.msk [vmem:[%s557 + $0x8] sm:$0xff] %vm3135, %v3104
      %3138 = vst.msk [vmem:[%s557 + $0x10] sm:$0xff] %vm3135, %v3105
      %3139 = vst.msk [vmem:[%s557 + $0x18] sm:$0xff] %vm3135, %v3106
      %3140 = vst.msk [vmem:[%s557 + $0x20] sm:$0xff] %vm3135, %v3107
      %3141 = vst.msk [vmem:[%s557 + $0x28] sm:$0xff] %vm3135, %v3108
      %3142 = vst.msk [vmem:[%s557 + $0x30] sm:$0xff] %vm3135, %v3109
      %3143 = vst.msk [vmem:[%s557 + $0x38] sm:$0xff] %vm3135, %v3110
      %3144 = vst.msk [vmem:[%s557 + $0x40] sm:$0xff] %vm3135, %v3111
      %3145 = vst.msk [vmem:[%s557 + $0x48] sm:$0xff] %vm3135, %v3112
      %3146 = vst.msk [vmem:[%s557 + $0x50] sm:$0xff] %vm3135, %v3113
      %3147 = vst.msk [vmem:[%s557 + $0x58] sm:$0xff] %vm3135, %v3114
      %3148 = vst.msk [vmem:[%s557 + $0x60] sm:$0xff] %vm3135, %v3115
      %3149 = vst.msk [vmem:[%s557 + $0x68] sm:$0xff] %vm3135, %v3116
      %3150 = vst.msk [vmem:[%s557 + $0x70] sm:$0xff] %vm3135, %v3117
      %3151 = vst.msk [vmem:[%s557 + $0x78] sm:$0xff] %vm3135, %v3118
      %3152 = vst.msk [vmem:[%s557 + $0x80] sm:$0xff] %vm3135, %v3119
      %3153 = vst.msk [vmem:[%s557 + $0x88] sm:$0xff] %vm3135, %v3120
      %3154 = vst.msk [vmem:[%s557 + $0x90] sm:$0xff] %vm3135, %v3121
      %3155 = vst.msk [vmem:[%s557 + $0x98] sm:$0xff] %vm3135, %v3122
      %3156 = vst.msk [vmem:[%s557 + $0xa0] sm:$0xff] %vm3135, %v3123
      %3157 = vst.msk [vmem:[%s557 + $0xa8] sm:$0xff] %vm3135, %v3124
      %3158 = vst.msk [vmem:[%s557 + $0xb0] sm:$0xff] %vm3135, %v3125
      %3159 = vst.msk [vmem:[%s557 + $0xb8] sm:$0xff] %vm3135, %v3126
      %3160 = vst.msk [vmem:[%s557 + $0xc0] sm:$0xff] %vm3135, %v3127
      %3161 = vst.msk [vmem:[%s557 + $0xc8] sm:$0xff] %vm3135, %v3128
      %3162 = vst.msk [vmem:[%s557 + $0xd0] sm:$0xff] %vm3135, %v3129
      %3163 = vst.msk [vmem:[%s557 + $0xd8] sm:$0xff] %vm3135, %v3130
      %3164 = vst.msk [vmem:[%s557 + $0xe0] sm:$0xff] %vm3135, %v3131
      %3165 = vst.msk [vmem:[%s557 + $0xe8] sm:$0xff] %vm3135, %v3132
      %3166 = vst.msk [vmem:[%s557 + $0xf0] sm:$0xff] %vm3135, %v3133
      %3167 = vst.msk [vmem:[%s557 + $0xf8] sm:$0xff] %vm3135, %v3134
      %s3168 = smul.u32 16, %s28
      %p3169 = scmp.lt.s32.totalorder %s27, 1
      %s3170 = scalar_select %p3169, %s27, 1
      %p3171 = scmp.lt.s32.totalorder %s3168, 15
      %s3172 = scalar_select %p3171, %s3168, 15
      %s3173 = smul.addr %s3172, 2
      %s3174 = smul.addr %s3170, 32
      %s3175 = sadd.s32 %s3173, %s3174
      %s3176 = smul.addr %s3175, 8
      %s3177 = scalar_lea.vmem %s12, %s3176
      // Predicated region
      $region69: #{upsampling_bottleneck.1} parent=67 // pred_check
        %p3178 = pneg %p336
      $region70: #{upsampling_bottleneck.1} parent=67 // pred_check_branch
        %3180 = sbr.rel (%p3178) target = $region72
      $region71: #{upsampling_bottleneck.1} parent=67 // pred_region
        %s3181 = smul.u32 16, %s28
      $region72: #{upsampling_bottleneck.1} parent=67 // pred_fallthru
        _
    $region68: #{upsampling_bottleneck.1} parent=5 // pred_fallthru
      _
    %p3182 = scmp.le.s32.totalorder 2, %s18
    // Predicated region
    $region73: #{upsampling_bottleneck.1} parent=5 // pred_check
      %p3183 = pneg %p3182
    $region74: #{upsampling_bottleneck.1} parent=5 // pred_check_branch
      %3185 = sbr.rel (%p3183) target = $region76
    $region75: #{upsampling_bottleneck.1} parent=5 // pred_region
      %s3186 = ssub.s32 %s18, 2
      // Predicated region
      $region77: #{upsampling_bottleneck.1} parent=75 // pred_check
        %p3187 = pneg %p342
      $region78: #{upsampling_bottleneck.1} parent=75 // pred_check_branch
        %3189 = sbr.rel (%p3187) target = $region80
      $region79: #{upsampling_bottleneck.1} parent=75 // pred_region
        %s3190 = smul.u32 16, %s30
        %p3191 = scmp.lt.s32.totalorder %s29, 1
        %s3192 = scalar_select %p3191, %s29, 1
        %p3193 = scmp.lt.s32.totalorder %s3190, 15
        %s3194 = scalar_select %p3193, %s3190, 15
        %s3195 = smul.addr %s3194, 2
        %s3196 = smul.addr %s3192, 32
        %s3197 = sadd.s32 %s3195, %s3196
        %s3198 = smul.addr %s3197, 8
        %s3199 = scalar_lea.vmem %s12, %s3198
      $region80: #{upsampling_bottleneck.1} parent=75 // pred_fallthru
        _
    $region76: #{upsampling_bottleneck.1} parent=5 // pred_fallthru
      _
  $region6: #{upsampling_bottleneck.1} parent=0 // loop_footer
    %s22 = sadd.s32 1, %s18
  $region7: #{upsampling_bottleneck.1} parent=0 // loop_footer_branch
    %17 = sbr.rel target = $region3
  $region8: #{upsampling_bottleneck.1} parent=0 // loop_exit
    _

</llo_original>
